<compile_context>
chip_gen: v7x
topology: tpu7x:2x2x1
jax: 0.10.0
libtpu: 0.0.40
codegen_flags: <defaults>
</compile_context>

<pallas_src>
import math

import jax
import jax.numpy as jnp
from jax import lax
from jax.experimental import pallas as pl
from jax.experimental.pallas import tpu as pltpu

# ---------------- config (small, consistent with the module) ----------------
BATCH = 2
SEQ = 8
EMSIZE = 32
NHEADS = 4
HEAD_DIM = EMSIZE // NHEADS
NHID = 64
N_EXPERT = 4
EPS = 1e-5


# ---------------------------- fused Pallas kernel ----------------------------
def _layernorm(z, g, b):
    mu = jnp.mean(z, axis=-1, keepdims=True)
    var = jnp.mean((z - mu) * (z - mu), axis=-1, keepdims=True)   # biased var (PyTorch LN)
    return (z - mu) * lax.rsqrt(var + EPS) * g + b


def _fused_layer_kernel(x_ref, mask_ref,
                        wq_ref, wk_ref, wv_ref, bq_ref, bk_ref, bv_ref,
                        woh_ref, bout_ref, ln1g_ref, ln1b_ref,
                        wg_ref, w1p_ref, b1p_ref, w2bd_ref, b2p_ref,
                        ln2g_ref, ln2b_ref, o_ref):
    """One batch element per grid step: MHA + add&LN1 + top-1 MoE + add&LN2, all resident in VMEM.

    x:    (1, S, E)           mask: (S, S) additive attention mask
    wq/wk/wv: (NH, E, HD)     bq/bk/bv: (NH, 1, HD)
    woh:  (NH, HD, E)         bout: (1, E)
    wg:   (E, NE)             w1p: (E, NE*NHID)   b1p: (1, NE*NHID)
    w2bd: (NE*NHID, NE*E) block-diagonal           b2p: (1, NE*E)
    ln*g/ln*b: (1, E)         o: (1, S, E)
    """
    x = x_ref[0]                                   # (S, E)
    mask = mask_ref[...]                           # (S, S)
    scale = 1.0 / math.sqrt(HEAD_DIM)

    # ---- multi-head self-attention (no in-kernel weight transposes, no lane concat) ----
    attn_proj = jnp.zeros((SEQ, EMSIZE), jnp.float32)
    for h in range(NHEADS):                        # static unroll, NHEADS = 4
        qh = jnp.dot(x, wq_ref[h], preferred_element_type=jnp.float32) + bq_ref[h]   # (S, HD)
        kh = jnp.dot(x, wk_ref[h], preferred_element_type=jnp.float32) + bk_ref[h]
        vh = jnp.dot(x, wv_ref[h], preferred_element_type=jnp.float32) + bv_ref[h]
        s = lax.dot_general(qh, kh, (((1,), (1,)), ((), ())),
                            preferred_element_type=jnp.float32) * scale + mask        # (S, S)
        s = s - jnp.max(s, axis=-1, keepdims=True)
        p = jnp.exp(s)
        p = p / jnp.sum(p, axis=-1, keepdims=True)
        hv = jnp.dot(p, vh, preferred_element_type=jnp.float32)                       # (S, HD)
        # project this head straight back to E and accumulate (replaces concat + one big matmul)
        attn_proj = attn_proj + jnp.dot(hv, woh_ref[h],
                                        preferred_element_type=jnp.float32)           # (S, E)
    sa = attn_proj + bout_ref[...]

    # ---- add & LayerNorm 1 (fused epilogue) ----
    x1 = _layernorm(x + sa, ln1g_ref[...], ln1b_ref[...])                              # (S, E)

    # ---- MoE: noiseless top-1 gate + packed experts ----
    logits = jnp.dot(x1, wg_ref[...], preferred_element_type=jnp.float32)              # (S, NE)
    m = jnp.max(logits, axis=-1, keepdims=True)
    el = jnp.exp(logits - m)
    probs = el / jnp.sum(el, axis=-1, keepdims=True)
    eidx = lax.broadcasted_iota(jnp.int32, logits.shape, 1)
    # first-index argmax (torch.argmax tie-break); `== m` is exact since m is copied from logits
    top_idx = jnp.min(jnp.where(logits == m, eidx, N_EXPERT), axis=-1, keepdims=True)  # (S, 1)
    onehot = (eidx == top_idx).astype(jnp.float32)                                     # (S, NE)
    # gate prob of the *selected* expert (derived from the same index -> consistent on ties)
    top_p = jnp.sum(onehot * probs, axis=-1, keepdims=True)                            # (S, 1)
    scales = onehot * top_p                                                            # (S, NE)

    # all experts' first layer: one lane-dense matmul (S,E)@(E, NE*NHID)
    h_all = jnp.maximum(
        jnp.dot(x1, w1p_ref[...], preferred_element_type=jnp.float32) + b1p_ref[...],
        0.0)                                                                           # (S, 256)
    # all experts' second layer via block-diagonal weight: one lane-dense (S,256)@(256,128) matmul
    y_all = jnp.dot(h_all, w2bd_ref[...], preferred_element_type=jnp.float32) + b2p_ref[...]  # (S, 128)

    moe_out = jnp.zeros((SEQ, EMSIZE), jnp.float32)
    for e in range(N_EXPERT):                      # static unroll, N_EXPERT = 4
        moe_out = moe_out + scales[:, e:e + 1] * y_all[:, e * EMSIZE:(e + 1) * EMSIZE]

    # ---- add & LayerNorm 2 (fused epilogue) ----
    o_ref[0] = _layernorm(x1 + moe_out, ln2g_ref[...], ln2b_ref[...])


# ----------------------------- host-side packing ------------------------------
def prepare_params(p):
    """Pre-transpose / split per head and pack experts lane-dense (done once, outside the kernel)."""
    E, NH, HD, NE, H = EMSIZE, NHEADS, HEAD_DIM, N_EXPERT, NHID
    wqkv, bqkv = p["wqkv"], p["bqkv"]

    def per_head(w):   # torch Linear weight (E_out, E_in) -> (NH, E_in, HD), head h = out cols of W.T
        return jnp.transpose(w, (1, 0)).reshape(E, NH, HD).transpose(1, 0, 2)

    out = {
        "wq": per_head(wqkv[0 * E:1 * E]),
        "wk": per_head(wqkv[1 * E:2 * E]),
        "wv": per_head(wqkv[2 * E:3 * E]),
        "bq": bqkv[0 * E:1 * E].reshape(NH, 1, HD),
        "bk": bqkv[1 * E:2 * E].reshape(NH, 1, HD),
        "bv": bqkv[2 * E:3 * E].reshape(NH, 1, HD),
        "woh": jnp.transpose(p["wout"], (1, 0)).reshape(NH, HD, E),
        "bout": p["bout"].reshape(1, E),
        "ln1_g": p["ln1_g"].reshape(1, E),
        "ln1_b": p["ln1_b"].reshape(1, E),
        "ln2_g": p["ln2_g"].reshape(1, E),
        "ln2_b": p["ln2_b"].reshape(1, E),
        "wg": p["wg"],                                                    # (E, NE)
        "w1p": jnp.transpose(p["w1"], (2, 0, 1)).reshape(E, NE * H),      # (E, NE*NHID)
        "b1p": p["b1"].reshape(1, NE * H),
        "b2p": p["b2"].reshape(1, NE * E),
    }
    w2bd = jnp.zeros((NE * H, NE * E), jnp.float32)                       # block-diagonal
    for e in range(NE):
        w2bd = w2bd.at[e * H:(e + 1) * H, e * E:(e + 1) * E].set(p["w2"][e].T)
    out["w2bd"] = w2bd
    return out


def switch_encoder_layer(x, params, src_mask):
    """Forward pass of SwitchTransformerEncoderLayer (eval mode) as one fused pallas_call."""
    B, S, E = x.shape
    pp = prepare_params(params)
    kernel_args = (
        x, src_mask,
        pp["wq"], pp["wk"], pp["wv"], pp["bq"], pp["bk"], pp["bv"],
        pp["woh"], pp["bout"], pp["ln1_g"], pp["ln1_b"],
        pp["wg"], pp["w1p"], pp["b1p"], pp["w2bd"], pp["b2p"],
        pp["ln2_g"], pp["ln2_b"],
    )

    def bcast_spec(arr):   # whole array, same block for every grid step (no re-DMA across steps)
        nd = arr.ndim
        return pl.BlockSpec(arr.shape, lambda b, _nd=nd: (0,) * _nd)

    in_specs = [pl.BlockSpec((1, S, E), lambda b: (b, 0, 0))] + [bcast_spec(a) for a in kernel_args[1:]]

    return pl.pallas_call(
        _fused_layer_kernel,
        out_shape=jax.ShapeDtypeStruct((B, S, E), jnp.float32),
        grid=(B,),
        in_specs=in_specs,
        out_specs=pl.BlockSpec((1, S, E), lambda b: (b, 0, 0)),
        compiler_params=pltpu.CompilerParams(dimension_semantics=("parallel",)),
    )(*kernel_args)


# ------------------------- pure-JAX reference ---------------------------------
def _reference(x, p, mask):
    B, S, E = x.shape
    qkv = jnp.einsum("bse,fe->bsf", x, p["wqkv"]) + p["bqkv"]
    q, k, v = jnp.split(qkv, 3, axis=-1)

    def heads(t):
        return t.reshape(B, S, NHEADS, HEAD_DIM).transpose(0, 2, 1, 3)

    qh, kh, vh = heads(q), heads(k), heads(v)
    s = jnp.einsum("bhqd,bhkd->bhqk", qh, kh) / math.sqrt(HEAD_DIM) + mask
    a = jax.nn.softmax(s, axis=-1)
    o = jnp.einsum("bhqk,bhkd->bhqd", a, vh).transpose(0, 2, 1, 3).reshape(B, S, E)
    sa = jnp.einsum("bse,fe->bsf", o, p["wout"]) + p["bout"]

    def ln(z, g, b):
        mu = z.mean(-1, keepdims=True)
        var = ((z - mu) ** 2).mean(-1, keepdims=True)
        return (z - mu) / jnp.sqrt(var + EPS) * g + b

    x1 = ln(x + sa, p["ln1_g"], p["ln1_b"])

    tok = x1.reshape(B * S, E)
    probs = jax.nn.softmax(tok @ p["wg"], axis=-1)
    top = jnp.argmax(probs, axis=-1)
    tp = jnp.max(probs, axis=-1, keepdims=True)
    out = jnp.zeros_like(tok)
    for e in range(N_EXPERT):
        h = jax.nn.relu(tok @ p["w1"][e].T + p["b1"][e])
        ye = h @ p["w2"][e].T + p["b2"][e]
        out = out + jnp.where((top == e)[:, None], tp * ye, 0.0)
    return ln(x1 + out.reshape(B, S, E), p["ln2_g"], p["ln2_b"])


# ---------------------------------- main --------------------------------------
if __name__ == "__main__":
    key = jax.random.PRNGKey(0)
    ks = jax.random.split(key, 12)

    params = {
        # MultiheadAttention: in_proj (3E, E) + bias, out_proj (E, E) + bias
        "wqkv": 0.05 * jax.random.normal(ks[0], (3 * EMSIZE, EMSIZE), jnp.float32),
        "bqkv": 0.01 * jax.random.normal(ks[1], (3 * EMSIZE,), jnp.float32),
        "wout": 0.05 * jax.random.normal(ks[2], (EMSIZE, EMSIZE), jnp.float32),
        "bout": 0.01 * jax.random.normal(ks[3], (EMSIZE,), jnp.float32),
        # LayerNorms
        "ln1_g": jnp.ones((EMSIZE,), jnp.float32),
        "ln1_b": jnp.zeros((EMSIZE,), jnp.float32),
        "ln2_g": jnp.ones((EMSIZE,), jnp.float32),
        "ln2_b": jnp.zeros((EMSIZE,), jnp.float32),
        # MoE: gate Linear(E, n_expert, bias=False); experts Linear(E,NHID)+ReLU+Linear(NHID,E)
        "wg": 0.05 * jax.random.normal(ks[4], (EMSIZE, N_EXPERT), jnp.float32),
        "w1": 0.05 * jax.random.normal(ks[5], (N_EXPERT, NHID, EMSIZE), jnp.float32),
        "b1": 0.01 * jax.random.normal(ks[6], (N_EXPERT, 1, NHID), jnp.float32),
        "w2": 0.05 * jax.random.normal(ks[7], (N_EXPERT, EMSIZE, NHID), jnp.float32),
        "b2": 0.01 * jax.random.normal(ks[8], (N_EXPERT, 1, EMSIZE), jnp.float32),
    }

    x = jax.random.normal(ks[9], (BATCH, SEQ, EMSIZE), jnp.float32)

    # Causal src_mask like RSwitch (additive; -1e9 instead of -inf to avoid inf-inf edge cases).
    src_mask = jnp.where(jnp.triu(jnp.ones((SEQ, SEQ), dtype=bool), k=1),
                         -1e9, 0.0).astype(jnp.float32)

    out = switch_encoder_layer(x, params, src_mask)
    out = jax.block_until_ready(out)

    ref = _reference(x, params, src_mask)
    assert out.shape == (BATCH, SEQ, EMSIZE)
    assert jnp.max(jnp.abs(out - ref)) < 2e-3, "mismatch vs pure-JAX reference"

    print("KERNEL_OK")
</pallas_src>

<mosaic_0001>
module attributes {stable_mosaic.version = 11 : i64} {
  func.func @_fused_layer_kernel(%arg0: i32, %arg1: memref<1x8x32xf32, #tpu.memory_space<vmem>>, %arg2: memref<8x8xf32, #tpu.memory_space<vmem>>, %arg3: memref<4x32x8xf32, #tpu.memory_space<vmem>>, %arg4: memref<4x32x8xf32, #tpu.memory_space<vmem>>, %arg5: memref<4x32x8xf32, #tpu.memory_space<vmem>>, %arg6: memref<4x1x8xf32, #tpu.memory_space<vmem>>, %arg7: memref<4x1x8xf32, #tpu.memory_space<vmem>>, %arg8: memref<4x1x8xf32, #tpu.memory_space<vmem>>, %arg9: memref<4x8x32xf32, #tpu.memory_space<vmem>>, %arg10: memref<1x32xf32, #tpu.memory_space<vmem>>, %arg11: memref<1x32xf32, #tpu.memory_space<vmem>>, %arg12: memref<1x32xf32, #tpu.memory_space<vmem>>, %arg13: memref<32x4xf32, #tpu.memory_space<vmem>>, %arg14: memref<32x256xf32, #tpu.memory_space<vmem>>, %arg15: memref<1x256xf32, #tpu.memory_space<vmem>>, %arg16: memref<256x128xf32, #tpu.memory_space<vmem>>, %arg17: memref<1x128xf32, #tpu.memory_space<vmem>>, %arg18: memref<1x32xf32, #tpu.memory_space<vmem>>, %arg19: memref<1x32xf32, #tpu.memory_space<vmem>>, %arg20: memref<1x8x32xf32, #tpu.memory_space<vmem>>) attributes {dimension_semantics = [#tpu.dimension_semantics<parallel>], iteration_bounds = array<i64: 2>, scalar_prefetch = 0 : i64, scratch_operands = 0 : i64, tpu.core_type = #tpu.core_type<tc>, window_params = [{transform_indices = @transform_0, window_bounds = array<i64: 1, 8, 32>}, {pipeline_mode = #tpu.pipeline_mode<synchronous>, transform_indices = @transform_1, window_bounds = array<i64: 8, 8>}, {pipeline_mode = #tpu.pipeline_mode<synchronous>, transform_indices = @transform_2, window_bounds = array<i64: 4, 32, 8>}, {pipeline_mode = #tpu.pipeline_mode<synchronous>, transform_indices = @transform_3, window_bounds = array<i64: 4, 32, 8>}, {pipeline_mode = #tpu.pipeline_mode<synchronous>, transform_indices = @transform_4, window_bounds = array<i64: 4, 32, 8>}, {pipeline_mode = #tpu.pipeline_mode<synchronous>, transform_indices = @transform_5, window_bounds = array<i64: 4, 1, 8>}, {pipeline_mode = #tpu.pipeline_mode<synchronous>, transform_indices = @transform_6, window_bounds = array<i64: 4, 1, 8>}, {pipeline_mode = #tpu.pipeline_mode<synchronous>, transform_indices = @transform_7, window_bounds = array<i64: 4, 1, 8>}, {pipeline_mode = #tpu.pipeline_mode<synchronous>, transform_indices = @transform_8, window_bounds = array<i64: 4, 8, 32>}, {pipeline_mode = #tpu.pipeline_mode<synchronous>, transform_indices = @transform_9, window_bounds = array<i64: 1, 32>}, {pipeline_mode = #tpu.pipeline_mode<synchronous>, transform_indices = @transform_10, window_bounds = array<i64: 1, 32>}, {pipeline_mode = #tpu.pipeline_mode<synchronous>, transform_indices = @transform_11, window_bounds = array<i64: 1, 32>}, {pipeline_mode = #tpu.pipeline_mode<synchronous>, transform_indices = @transform_12, window_bounds = array<i64: 32, 4>}, {pipeline_mode = #tpu.pipeline_mode<synchronous>, transform_indices = @transform_13, window_bounds = array<i64: 32, 256>}, {pipeline_mode = #tpu.pipeline_mode<synchronous>, transform_indices = @transform_14, window_bounds = array<i64: 1, 256>}, {pipeline_mode = #tpu.pipeline_mode<synchronous>, transform_indices = @transform_15, window_bounds = array<i64: 256, 128>}, {pipeline_mode = #tpu.pipeline_mode<synchronous>, transform_indices = @transform_16, window_bounds = array<i64: 1, 128>}, {pipeline_mode = #tpu.pipeline_mode<synchronous>, transform_indices = @transform_17, window_bounds = array<i64: 1, 32>}, {pipeline_mode = #tpu.pipeline_mode<synchronous>, transform_indices = @transform_18, window_bounds = array<i64: 1, 32>}, {transform_indices = @transform_19, window_bounds = array<i64: 1, 8, 32>}]} {
    %c0 = arith.constant 0 : index
    %c0_0 = arith.constant 0 : index
    %c0_1 = arith.constant 0 : index
    %0 = vector.load %arg1[%c0, %c0_0, %c0_1] : memref<1x8x32xf32, #tpu.memory_space<vmem>>, vector<1x8x32xf32>
    %1 = vector.shape_cast %0 : vector<1x8x32xf32> to vector<8x32xf32>
    %c0_2 = arith.constant 0 : index
    %c0_3 = arith.constant 0 : index
    %2 = vector.load %arg2[%c0_2, %c0_3] : memref<8x8xf32, #tpu.memory_space<vmem>>, vector<8x8xf32>
    %cst = arith.constant 0.000000e+00 : f32
    %3 = vector.broadcast %cst : f32 to vector<8x32xf32>
    %c0_4 = arith.constant 0 : index
    %c0_5 = arith.constant 0 : index
    %c0_6 = arith.constant 0 : index
    %4 = vector.load %arg3[%c0_4, %c0_5, %c0_6] : memref<4x32x8xf32, #tpu.memory_space<vmem>>, vector<1x32x8xf32>
    %5 = vector.shape_cast %4 : vector<1x32x8xf32> to vector<32x8xf32>
    %cst_7 = arith.constant dense<0.000000e+00> : vector<8x8xf32>
    %6 = tpu.matmul %1, %5, %cst_7 {dimension_numbers = #tpu.dot_dimension_numbers<[1], [0], [0], [1], [0, 0, 1, 1], [], []>} : vector<8x32xf32>, vector<32x8xf32>, vector<8x8xf32> -> vector<8x8xf32>
    %c0_8 = arith.constant 0 : index
    %c0_9 = arith.constant 0 : index
    %c0_10 = arith.constant 0 : index
    %7 = vector.load %arg6[%c0_8, %c0_9, %c0_10] : memref<4x1x8xf32, #tpu.memory_space<vmem>>, vector<1x1x8xf32>
    %8 = vector.shape_cast %7 : vector<1x1x8xf32> to vector<1x8xf32>
    %9 = vector.broadcast %8 : vector<1x8xf32> to vector<8x8xf32>
    %10 = arith.addf %6, %9 : vector<8x8xf32>
    %c0_11 = arith.constant 0 : index
    %c0_12 = arith.constant 0 : index
    %c0_13 = arith.constant 0 : index
    %11 = vector.load %arg4[%c0_11, %c0_12, %c0_13] : memref<4x32x8xf32, #tpu.memory_space<vmem>>, vector<1x32x8xf32>
    %12 = vector.shape_cast %11 : vector<1x32x8xf32> to vector<32x8xf32>
    %cst_14 = arith.constant dense<0.000000e+00> : vector<8x8xf32>
    %13 = tpu.matmul %1, %12, %cst_14 {dimension_numbers = #tpu.dot_dimension_numbers<[1], [0], [0], [1], [0, 0, 1, 1], [], []>} : vector<8x32xf32>, vector<32x8xf32>, vector<8x8xf32> -> vector<8x8xf32>
    %c0_15 = arith.constant 0 : index
    %c0_16 = arith.constant 0 : index
    %c0_17 = arith.constant 0 : index
    %14 = vector.load %arg7[%c0_15, %c0_16, %c0_17] : memref<4x1x8xf32, #tpu.memory_space<vmem>>, vector<1x1x8xf32>
    %15 = vector.shape_cast %14 : vector<1x1x8xf32> to vector<1x8xf32>
    %16 = vector.broadcast %15 : vector<1x8xf32> to vector<8x8xf32>
    %17 = arith.addf %13, %16 : vector<8x8xf32>
    %c0_18 = arith.constant 0 : index
    %c0_19 = arith.constant 0 : index
    %c0_20 = arith.constant 0 : index
    %18 = vector.load %arg5[%c0_18, %c0_19, %c0_20] : memref<4x32x8xf32, #tpu.memory_space<vmem>>, vector<1x32x8xf32>
    %19 = vector.shape_cast %18 : vector<1x32x8xf32> to vector<32x8xf32>
    %cst_21 = arith.constant dense<0.000000e+00> : vector<8x8xf32>
    %20 = tpu.matmul %1, %19, %cst_21 {dimension_numbers = #tpu.dot_dimension_numbers<[1], [0], [0], [1], [0, 0, 1, 1], [], []>} : vector<8x32xf32>, vector<32x8xf32>, vector<8x8xf32> -> vector<8x8xf32>
    %c0_22 = arith.constant 0 : index
    %c0_23 = arith.constant 0 : index
    %c0_24 = arith.constant 0 : index
    %21 = vector.load %arg8[%c0_22, %c0_23, %c0_24] : memref<4x1x8xf32, #tpu.memory_space<vmem>>, vector<1x1x8xf32>
    %22 = vector.shape_cast %21 : vector<1x1x8xf32> to vector<1x8xf32>
    %23 = vector.broadcast %22 : vector<1x8xf32> to vector<8x8xf32>
    %24 = arith.addf %20, %23 : vector<8x8xf32>
    %cst_25 = arith.constant dense<0.000000e+00> : vector<8x8xf32>
    %25 = tpu.matmul %10, %17, %cst_25 {dimension_numbers = #tpu.dot_dimension_numbers<[1], [1], [0], [0], [0, 0, 1, 0], [], []>} : vector<8x8xf32>, vector<8x8xf32>, vector<8x8xf32> -> vector<8x8xf32>
    %cst_26 = arith.constant 0.353553385 : f32
    %26 = vector.broadcast %cst_26 : f32 to vector<8x8xf32>
    %27 = arith.mulf %25, %26 : vector<8x8xf32>
    %28 = arith.addf %27, %2 : vector<8x8xf32>
    %cst_27 = arith.constant dense<0xFF800000> : vector<8xf32>
    %29 = vector.multi_reduction <maximumf>, %28, %cst_27 [1] : vector<8x8xf32> to vector<8xf32>
    %30 = vector.shape_cast %29 : vector<8xf32> to vector<8x1xf32>
    %31 = vector.broadcast %30 : vector<8x1xf32> to vector<8x8xf32>
    %32 = arith.subf %28, %31 : vector<8x8xf32>
    %33 = math.exp %32 : vector<8x8xf32>
    %cst_28 = arith.constant dense<0.000000e+00> : vector<8xf32>
    %34 = vector.multi_reduction <add>, %33, %cst_28 [1] : vector<8x8xf32> to vector<8xf32>
    %35 = vector.shape_cast %34 : vector<8xf32> to vector<8x1xf32>
    %36 = vector.broadcast %35 : vector<8x1xf32> to vector<8x8xf32>
    %37 = arith.divf %33, %36 : vector<8x8xf32>
    %cst_29 = arith.constant dense<0.000000e+00> : vector<8x8xf32>
    %38 = tpu.matmul %37, %24, %cst_29 {dimension_numbers = #tpu.dot_dimension_numbers<[1], [0], [0], [1], [0, 0, 1, 1], [], []>} : vector<8x8xf32>, vector<8x8xf32>, vector<8x8xf32> -> vector<8x8xf32>
    %c0_30 = arith.constant 0 : index
    %c0_31 = arith.constant 0 : index
    %c0_32 = arith.constant 0 : index
    %39 = vector.load %arg9[%c0_30, %c0_31, %c0_32] : memref<4x8x32xf32, #tpu.memory_space<vmem>>, vector<1x8x32xf32>
    %40 = vector.shape_cast %39 : vector<1x8x32xf32> to vector<8x32xf32>
    %cst_33 = arith.constant dense<0.000000e+00> : vector<8x32xf32>
    %41 = tpu.matmul %38, %40, %cst_33 {dimension_numbers = #tpu.dot_dimension_numbers<[1], [0], [0], [1], [0, 0, 1, 1], [], []>} : vector<8x8xf32>, vector<8x32xf32>, vector<8x32xf32> -> vector<8x32xf32>
    %42 = arith.addf %3, %41 : vector<8x32xf32>
    %c1 = arith.constant 1 : index
    %c0_34 = arith.constant 0 : index
    %c0_35 = arith.constant 0 : index
    %43 = vector.load %arg3[%c1, %c0_34, %c0_35] : memref<4x32x8xf32, #tpu.memory_space<vmem>>, vector<1x32x8xf32>
    %44 = vector.shape_cast %43 : vector<1x32x8xf32> to vector<32x8xf32>
    %cst_36 = arith.constant dense<0.000000e+00> : vector<8x8xf32>
    %45 = tpu.matmul %1, %44, %cst_36 {dimension_numbers = #tpu.dot_dimension_numbers<[1], [0], [0], [1], [0, 0, 1, 1], [], []>} : vector<8x32xf32>, vector<32x8xf32>, vector<8x8xf32> -> vector<8x8xf32>
    %c1_37 = arith.constant 1 : index
    %c0_38 = arith.constant 0 : index
    %c0_39 = arith.constant 0 : index
    %46 = vector.load %arg6[%c1_37, %c0_38, %c0_39] : memref<4x1x8xf32, #tpu.memory_space<vmem>>, vector<1x1x8xf32>
    %47 = vector.shape_cast %46 : vector<1x1x8xf32> to vector<1x8xf32>
    %48 = vector.broadcast %47 : vector<1x8xf32> to vector<8x8xf32>
    %49 = arith.addf %45, %48 : vector<8x8xf32>
    %c1_40 = arith.constant 1 : index
    %c0_41 = arith.constant 0 : index
    %c0_42 = arith.constant 0 : index
    %50 = vector.load %arg4[%c1_40, %c0_41, %c0_42] : memref<4x32x8xf32, #tpu.memory_space<vmem>>, vector<1x32x8xf32>
    %51 = vector.shape_cast %50 : vector<1x32x8xf32> to vector<32x8xf32>
    %cst_43 = arith.constant dense<0.000000e+00> : vector<8x8xf32>
    %52 = tpu.matmul %1, %51, %cst_43 {dimension_numbers = #tpu.dot_dimension_numbers<[1], [0], [0], [1], [0, 0, 1, 1], [], []>} : vector<8x32xf32>, vector<32x8xf32>, vector<8x8xf32> -> vector<8x8xf32>
    %c1_44 = arith.constant 1 : index
    %c0_45 = arith.constant 0 : index
    %c0_46 = arith.constant 0 : index
    %53 = vector.load %arg7[%c1_44, %c0_45, %c0_46] : memref<4x1x8xf32, #tpu.memory_space<vmem>>, vector<1x1x8xf32>
    %54 = vector.shape_cast %53 : vector<1x1x8xf32> to vector<1x8xf32>
    %55 = vector.broadcast %54 : vector<1x8xf32> to vector<8x8xf32>
    %56 = arith.addf %52, %55 : vector<8x8xf32>
    %c1_47 = arith.constant 1 : index
    %c0_48 = arith.constant 0 : index
    %c0_49 = arith.constant 0 : index
    %57 = vector.load %arg5[%c1_47, %c0_48, %c0_49] : memref<4x32x8xf32, #tpu.memory_space<vmem>>, vector<1x32x8xf32>
    %58 = vector.shape_cast %57 : vector<1x32x8xf32> to vector<32x8xf32>
    %cst_50 = arith.constant dense<0.000000e+00> : vector<8x8xf32>
    %59 = tpu.matmul %1, %58, %cst_50 {dimension_numbers = #tpu.dot_dimension_numbers<[1], [0], [0], [1], [0, 0, 1, 1], [], []>} : vector<8x32xf32>, vector<32x8xf32>, vector<8x8xf32> -> vector<8x8xf32>
    %c1_51 = arith.constant 1 : index
    %c0_52 = arith.constant 0 : index
    %c0_53 = arith.constant 0 : index
    %60 = vector.load %arg8[%c1_51, %c0_52, %c0_53] : memref<4x1x8xf32, #tpu.memory_space<vmem>>, vector<1x1x8xf32>
    %61 = vector.shape_cast %60 : vector<1x1x8xf32> to vector<1x8xf32>
    %62 = vector.broadcast %61 : vector<1x8xf32> to vector<8x8xf32>
    %63 = arith.addf %59, %62 : vector<8x8xf32>
    %cst_54 = arith.constant dense<0.000000e+00> : vector<8x8xf32>
    %64 = tpu.matmul %49, %56, %cst_54 {dimension_numbers = #tpu.dot_dimension_numbers<[1], [1], [0], [0], [0, 0, 1, 0], [], []>} : vector<8x8xf32>, vector<8x8xf32>, vector<8x8xf32> -> vector<8x8xf32>
    %cst_55 = arith.constant 0.353553385 : f32
    %65 = vector.broadcast %cst_55 : f32 to vector<8x8xf32>
    %66 = arith.mulf %64, %65 : vector<8x8xf32>
    %67 = arith.addf %66, %2 : vector<8x8xf32>
    %cst_56 = arith.constant dense<0xFF800000> : vector<8xf32>
    %68 = vector.multi_reduction <maximumf>, %67, %cst_56 [1] : vector<8x8xf32> to vector<8xf32>
    %69 = vector.shape_cast %68 : vector<8xf32> to vector<8x1xf32>
    %70 = vector.broadcast %69 : vector<8x1xf32> to vector<8x8xf32>
    %71 = arith.subf %67, %70 : vector<8x8xf32>
    %72 = math.exp %71 : vector<8x8xf32>
    %cst_57 = arith.constant dense<0.000000e+00> : vector<8xf32>
    %73 = vector.multi_reduction <add>, %72, %cst_57 [1] : vector<8x8xf32> to vector<8xf32>
    %74 = vector.shape_cast %73 : vector<8xf32> to vector<8x1xf32>
    %75 = vector.broadcast %74 : vector<8x1xf32> to vector<8x8xf32>
    %76 = arith.divf %72, %75 : vector<8x8xf32>
    %cst_58 = arith.constant dense<0.000000e+00> : vector<8x8xf32>
    %77 = tpu.matmul %76, %63, %cst_58 {dimension_numbers = #tpu.dot_dimension_numbers<[1], [0], [0], [1], [0, 0, 1, 1], [], []>} : vector<8x8xf32>, vector<8x8xf32>, vector<8x8xf32> -> vector<8x8xf32>
    %c1_59 = arith.constant 1 : index
    %c0_60 = arith.constant 0 : index
    %c0_61 = arith.constant 0 : index
    %78 = vector.load %arg9[%c1_59, %c0_60, %c0_61] : memref<4x8x32xf32, #tpu.memory_space<vmem>>, vector<1x8x32xf32>
    %79 = vector.shape_cast %78 : vector<1x8x32xf32> to vector<8x32xf32>
    %cst_62 = arith.constant dense<0.000000e+00> : vector<8x32xf32>
    %80 = tpu.matmul %77, %79, %cst_62 {dimension_numbers = #tpu.dot_dimension_numbers<[1], [0], [0], [1], [0, 0, 1, 1], [], []>} : vector<8x8xf32>, vector<8x32xf32>, vector<8x32xf32> -> vector<8x32xf32>
    %81 = arith.addf %42, %80 : vector<8x32xf32>
    %c2 = arith.constant 2 : index
    %c0_63 = arith.constant 0 : index
    %c0_64 = arith.constant 0 : index
    %82 = vector.load %arg3[%c2, %c0_63, %c0_64] : memref<4x32x8xf32, #tpu.memory_space<vmem>>, vector<1x32x8xf32>
    %83 = vector.shape_cast %82 : vector<1x32x8xf32> to vector<32x8xf32>
    %cst_65 = arith.constant dense<0.000000e+00> : vector<8x8xf32>
    %84 = tpu.matmul %1, %83, %cst_65 {dimension_numbers = #tpu.dot_dimension_numbers<[1], [0], [0], [1], [0, 0, 1, 1], [], []>} : vector<8x32xf32>, vector<32x8xf32>, vector<8x8xf32> -> vector<8x8xf32>
    %c2_66 = arith.constant 2 : index
    %c0_67 = arith.constant 0 : index
    %c0_68 = arith.constant 0 : index
    %85 = vector.load %arg6[%c2_66, %c0_67, %c0_68] : memref<4x1x8xf32, #tpu.memory_space<vmem>>, vector<1x1x8xf32>
    %86 = vector.shape_cast %85 : vector<1x1x8xf32> to vector<1x8xf32>
    %87 = vector.broadcast %86 : vector<1x8xf32> to vector<8x8xf32>
    %88 = arith.addf %84, %87 : vector<8x8xf32>
    %c2_69 = arith.constant 2 : index
    %c0_70 = arith.constant 0 : index
    %c0_71 = arith.constant 0 : index
    %89 = vector.load %arg4[%c2_69, %c0_70, %c0_71] : memref<4x32x8xf32, #tpu.memory_space<vmem>>, vector<1x32x8xf32>
    %90 = vector.shape_cast %89 : vector<1x32x8xf32> to vector<32x8xf32>
    %cst_72 = arith.constant dense<0.000000e+00> : vector<8x8xf32>
    %91 = tpu.matmul %1, %90, %cst_72 {dimension_numbers = #tpu.dot_dimension_numbers<[1], [0], [0], [1], [0, 0, 1, 1], [], []>} : vector<8x32xf32>, vector<32x8xf32>, vector<8x8xf32> -> vector<8x8xf32>
    %c2_73 = arith.constant 2 : index
    %c0_74 = arith.constant 0 : index
    %c0_75 = arith.constant 0 : index
    %92 = vector.load %arg7[%c2_73, %c0_74, %c0_75] : memref<4x1x8xf32, #tpu.memory_space<vmem>>, vector<1x1x8xf32>
    %93 = vector.shape_cast %92 : vector<1x1x8xf32> to vector<1x8xf32>
    %94 = vector.broadcast %93 : vector<1x8xf32> to vector<8x8xf32>
    %95 = arith.addf %91, %94 : vector<8x8xf32>
    %c2_76 = arith.constant 2 : index
    %c0_77 = arith.constant 0 : index
    %c0_78 = arith.constant 0 : index
    %96 = vector.load %arg5[%c2_76, %c0_77, %c0_78] : memref<4x32x8xf32, #tpu.memory_space<vmem>>, vector<1x32x8xf32>
    %97 = vector.shape_cast %96 : vector<1x32x8xf32> to vector<32x8xf32>
    %cst_79 = arith.constant dense<0.000000e+00> : vector<8x8xf32>
    %98 = tpu.matmul %1, %97, %cst_79 {dimension_numbers = #tpu.dot_dimension_numbers<[1], [0], [0], [1], [0, 0, 1, 1], [], []>} : vector<8x32xf32>, vector<32x8xf32>, vector<8x8xf32> -> vector<8x8xf32>
    %c2_80 = arith.constant 2 : index
    %c0_81 = arith.constant 0 : index
    %c0_82 = arith.constant 0 : index
    %99 = vector.load %arg8[%c2_80, %c0_81, %c0_82] : memref<4x1x8xf32, #tpu.memory_space<vmem>>, vector<1x1x8xf32>
    %100 = vector.shape_cast %99 : vector<1x1x8xf32> to vector<1x8xf32>
    %101 = vector.broadcast %100 : vector<1x8xf32> to vector<8x8xf32>
    %102 = arith.addf %98, %101 : vector<8x8xf32>
    %cst_83 = arith.constant dense<0.000000e+00> : vector<8x8xf32>
    %103 = tpu.matmul %88, %95, %cst_83 {dimension_numbers = #tpu.dot_dimension_numbers<[1], [1], [0], [0], [0, 0, 1, 0], [], []>} : vector<8x8xf32>, vector<8x8xf32>, vector<8x8xf32> -> vector<8x8xf32>
    %cst_84 = arith.constant 0.353553385 : f32
    %104 = vector.broadcast %cst_84 : f32 to vector<8x8xf32>
    %105 = arith.mulf %103, %104 : vector<8x8xf32>
    %106 = arith.addf %105, %2 : vector<8x8xf32>
    %cst_85 = arith.constant dense<0xFF800000> : vector<8xf32>
    %107 = vector.multi_reduction <maximumf>, %106, %cst_85 [1] : vector<8x8xf32> to vector<8xf32>
    %108 = vector.shape_cast %107 : vector<8xf32> to vector<8x1xf32>
    %109 = vector.broadcast %108 : vector<8x1xf32> to vector<8x8xf32>
    %110 = arith.subf %106, %109 : vector<8x8xf32>
    %111 = math.exp %110 : vector<8x8xf32>
    %cst_86 = arith.constant dense<0.000000e+00> : vector<8xf32>
    %112 = vector.multi_reduction <add>, %111, %cst_86 [1] : vector<8x8xf32> to vector<8xf32>
    %113 = vector.shape_cast %112 : vector<8xf32> to vector<8x1xf32>
    %114 = vector.broadcast %113 : vector<8x1xf32> to vector<8x8xf32>
    %115 = arith.divf %111, %114 : vector<8x8xf32>
    %cst_87 = arith.constant dense<0.000000e+00> : vector<8x8xf32>
    %116 = tpu.matmul %115, %102, %cst_87 {dimension_numbers = #tpu.dot_dimension_numbers<[1], [0], [0], [1], [0, 0, 1, 1], [], []>} : vector<8x8xf32>, vector<8x8xf32>, vector<8x8xf32> -> vector<8x8xf32>
    %c2_88 = arith.constant 2 : index
    %c0_89 = arith.constant 0 : index
    %c0_90 = arith.constant 0 : index
    %117 = vector.load %arg9[%c2_88, %c0_89, %c0_90] : memref<4x8x32xf32, #tpu.memory_space<vmem>>, vector<1x8x32xf32>
    %118 = vector.shape_cast %117 : vector<1x8x32xf32> to vector<8x32xf32>
    %cst_91 = arith.constant dense<0.000000e+00> : vector<8x32xf32>
    %119 = tpu.matmul %116, %118, %cst_91 {dimension_numbers = #tpu.dot_dimension_numbers<[1], [0], [0], [1], [0, 0, 1, 1], [], []>} : vector<8x8xf32>, vector<8x32xf32>, vector<8x32xf32> -> vector<8x32xf32>
    %120 = arith.addf %81, %119 : vector<8x32xf32>
    %c3 = arith.constant 3 : index
    %c0_92 = arith.constant 0 : index
    %c0_93 = arith.constant 0 : index
    %121 = vector.load %arg3[%c3, %c0_92, %c0_93] : memref<4x32x8xf32, #tpu.memory_space<vmem>>, vector<1x32x8xf32>
    %122 = vector.shape_cast %121 : vector<1x32x8xf32> to vector<32x8xf32>
    %cst_94 = arith.constant dense<0.000000e+00> : vector<8x8xf32>
    %123 = tpu.matmul %1, %122, %cst_94 {dimension_numbers = #tpu.dot_dimension_numbers<[1], [0], [0], [1], [0, 0, 1, 1], [], []>} : vector<8x32xf32>, vector<32x8xf32>, vector<8x8xf32> -> vector<8x8xf32>
    %c3_95 = arith.constant 3 : index
    %c0_96 = arith.constant 0 : index
    %c0_97 = arith.constant 0 : index
    %124 = vector.load %arg6[%c3_95, %c0_96, %c0_97] : memref<4x1x8xf32, #tpu.memory_space<vmem>>, vector<1x1x8xf32>
    %125 = vector.shape_cast %124 : vector<1x1x8xf32> to vector<1x8xf32>
    %126 = vector.broadcast %125 : vector<1x8xf32> to vector<8x8xf32>
    %127 = arith.addf %123, %126 : vector<8x8xf32>
    %c3_98 = arith.constant 3 : index
    %c0_99 = arith.constant 0 : index
    %c0_100 = arith.constant 0 : index
    %128 = vector.load %arg4[%c3_98, %c0_99, %c0_100] : memref<4x32x8xf32, #tpu.memory_space<vmem>>, vector<1x32x8xf32>
    %129 = vector.shape_cast %128 : vector<1x32x8xf32> to vector<32x8xf32>
    %cst_101 = arith.constant dense<0.000000e+00> : vector<8x8xf32>
    %130 = tpu.matmul %1, %129, %cst_101 {dimension_numbers = #tpu.dot_dimension_numbers<[1], [0], [0], [1], [0, 0, 1, 1], [], []>} : vector<8x32xf32>, vector<32x8xf32>, vector<8x8xf32> -> vector<8x8xf32>
    %c3_102 = arith.constant 3 : index
    %c0_103 = arith.constant 0 : index
    %c0_104 = arith.constant 0 : index
    %131 = vector.load %arg7[%c3_102, %c0_103, %c0_104] : memref<4x1x8xf32, #tpu.memory_space<vmem>>, vector<1x1x8xf32>
    %132 = vector.shape_cast %131 : vector<1x1x8xf32> to vector<1x8xf32>
    %133 = vector.broadcast %132 : vector<1x8xf32> to vector<8x8xf32>
    %134 = arith.addf %130, %133 : vector<8x8xf32>
    %c3_105 = arith.constant 3 : index
    %c0_106 = arith.constant 0 : index
    %c0_107 = arith.constant 0 : index
    %135 = vector.load %arg5[%c3_105, %c0_106, %c0_107] : memref<4x32x8xf32, #tpu.memory_space<vmem>>, vector<1x32x8xf32>
    %136 = vector.shape_cast %135 : vector<1x32x8xf32> to vector<32x8xf32>
    %cst_108 = arith.constant dense<0.000000e+00> : vector<8x8xf32>
    %137 = tpu.matmul %1, %136, %cst_108 {dimension_numbers = #tpu.dot_dimension_numbers<[1], [0], [0], [1], [0, 0, 1, 1], [], []>} : vector<8x32xf32>, vector<32x8xf32>, vector<8x8xf32> -> vector<8x8xf32>
    %c3_109 = arith.constant 3 : index
    %c0_110 = arith.constant 0 : index
    %c0_111 = arith.constant 0 : index
    %138 = vector.load %arg8[%c3_109, %c0_110, %c0_111] : memref<4x1x8xf32, #tpu.memory_space<vmem>>, vector<1x1x8xf32>
    %139 = vector.shape_cast %138 : vector<1x1x8xf32> to vector<1x8xf32>
    %140 = vector.broadcast %139 : vector<1x8xf32> to vector<8x8xf32>
    %141 = arith.addf %137, %140 : vector<8x8xf32>
    %cst_112 = arith.constant dense<0.000000e+00> : vector<8x8xf32>
    %142 = tpu.matmul %127, %134, %cst_112 {dimension_numbers = #tpu.dot_dimension_numbers<[1], [1], [0], [0], [0, 0, 1, 0], [], []>} : vector<8x8xf32>, vector<8x8xf32>, vector<8x8xf32> -> vector<8x8xf32>
    %cst_113 = arith.constant 0.353553385 : f32
    %143 = vector.broadcast %cst_113 : f32 to vector<8x8xf32>
    %144 = arith.mulf %142, %143 : vector<8x8xf32>
    %145 = arith.addf %144, %2 : vector<8x8xf32>
    %cst_114 = arith.constant dense<0xFF800000> : vector<8xf32>
    %146 = vector.multi_reduction <maximumf>, %145, %cst_114 [1] : vector<8x8xf32> to vector<8xf32>
    %147 = vector.shape_cast %146 : vector<8xf32> to vector<8x1xf32>
    %148 = vector.broadcast %147 : vector<8x1xf32> to vector<8x8xf32>
    %149 = arith.subf %145, %148 : vector<8x8xf32>
    %150 = math.exp %149 : vector<8x8xf32>
    %cst_115 = arith.constant dense<0.000000e+00> : vector<8xf32>
    %151 = vector.multi_reduction <add>, %150, %cst_115 [1] : vector<8x8xf32> to vector<8xf32>
    %152 = vector.shape_cast %151 : vector<8xf32> to vector<8x1xf32>
    %153 = vector.broadcast %152 : vector<8x1xf32> to vector<8x8xf32>
    %154 = arith.divf %150, %153 : vector<8x8xf32>
    %cst_116 = arith.constant dense<0.000000e+00> : vector<8x8xf32>
    %155 = tpu.matmul %154, %141, %cst_116 {dimension_numbers = #tpu.dot_dimension_numbers<[1], [0], [0], [1], [0, 0, 1, 1], [], []>} : vector<8x8xf32>, vector<8x8xf32>, vector<8x8xf32> -> vector<8x8xf32>
    %c3_117 = arith.constant 3 : index
    %c0_118 = arith.constant 0 : index
    %c0_119 = arith.constant 0 : index
    %156 = vector.load %arg9[%c3_117, %c0_118, %c0_119] : memref<4x8x32xf32, #tpu.memory_space<vmem>>, vector<1x8x32xf32>
    %157 = vector.shape_cast %156 : vector<1x8x32xf32> to vector<8x32xf32>
    %cst_120 = arith.constant dense<0.000000e+00> : vector<8x32xf32>
    %158 = tpu.matmul %155, %157, %cst_120 {dimension_numbers = #tpu.dot_dimension_numbers<[1], [0], [0], [1], [0, 0, 1, 1], [], []>} : vector<8x8xf32>, vector<8x32xf32>, vector<8x32xf32> -> vector<8x32xf32>
    %159 = arith.addf %120, %158 : vector<8x32xf32>
    %c0_121 = arith.constant 0 : index
    %c0_122 = arith.constant 0 : index
    %160 = vector.load %arg10[%c0_121, %c0_122] : memref<1x32xf32, #tpu.memory_space<vmem>>, vector<1x32xf32>
    %161 = vector.broadcast %160 : vector<1x32xf32> to vector<8x32xf32>
    %162 = arith.addf %159, %161 : vector<8x32xf32>
    %163 = arith.addf %1, %162 : vector<8x32xf32>
    %c0_123 = arith.constant 0 : index
    %c0_124 = arith.constant 0 : index
    %164 = vector.load %arg11[%c0_123, %c0_124] : memref<1x32xf32, #tpu.memory_space<vmem>>, vector<1x32xf32>
    %c0_125 = arith.constant 0 : index
    %c0_126 = arith.constant 0 : index
    %165 = vector.load %arg12[%c0_125, %c0_126] : memref<1x32xf32, #tpu.memory_space<vmem>>, vector<1x32xf32>
    %cst_127 = arith.constant dense<0.000000e+00> : vector<8xf32>
    %166 = vector.multi_reduction <add>, %163, %cst_127 [1] : vector<8x32xf32> to vector<8xf32>
    %167 = vector.shape_cast %166 : vector<8xf32> to vector<8x1xf32>
    %cst_128 = arith.constant 3.200000e+01 : f32
    %168 = vector.broadcast %cst_128 : f32 to vector<8x1xf32>
    %169 = arith.divf %167, %168 : vector<8x1xf32>
    %170 = vector.broadcast %169 : vector<8x1xf32> to vector<8x32xf32>
    %171 = arith.subf %163, %170 : vector<8x32xf32>
    %172 = vector.broadcast %169 : vector<8x1xf32> to vector<8x32xf32>
    %173 = arith.subf %163, %172 : vector<8x32xf32>
    %174 = arith.mulf %171, %173 : vector<8x32xf32>
    %cst_129 = arith.constant dense<0.000000e+00> : vector<8xf32>
    %175 = vector.multi_reduction <add>, %174, %cst_129 [1] : vector<8x32xf32> to vector<8xf32>
    %176 = vector.shape_cast %175 : vector<8xf32> to vector<8x1xf32>
    %cst_130 = arith.constant 3.200000e+01 : f32
    %177 = vector.broadcast %cst_130 : f32 to vector<8x1xf32>
    %178 = arith.divf %176, %177 : vector<8x1xf32>
    %179 = vector.broadcast %169 : vector<8x1xf32> to vector<8x32xf32>
    %180 = arith.subf %163, %179 : vector<8x32xf32>
    %cst_131 = arith.constant 9.99999974E-6 : f32
    %181 = vector.broadcast %cst_131 : f32 to vector<8x1xf32>
    %182 = arith.addf %178, %181 : vector<8x1xf32>
    %183 = math.rsqrt %182 : vector<8x1xf32>
    %184 = vector.broadcast %183 : vector<8x1xf32> to vector<8x32xf32>
    %185 = arith.mulf %180, %184 : vector<8x32xf32>
    %186 = vector.broadcast %164 : vector<1x32xf32> to vector<8x32xf32>
    %187 = arith.mulf %185, %186 : vector<8x32xf32>
    %188 = vector.broadcast %165 : vector<1x32xf32> to vector<8x32xf32>
    %189 = arith.addf %187, %188 : vector<8x32xf32>
    %c0_132 = arith.constant 0 : index
    %c0_133 = arith.constant 0 : index
    %190 = vector.load %arg13[%c0_132, %c0_133] : memref<32x4xf32, #tpu.memory_space<vmem>>, vector<32x4xf32>
    %cst_134 = arith.constant dense<0.000000e+00> : vector<8x4xf32>
    %191 = tpu.matmul %189, %190, %cst_134 {dimension_numbers = #tpu.dot_dimension_numbers<[1], [0], [0], [1], [0, 0, 1, 1], [], []>} : vector<8x32xf32>, vector<32x4xf32>, vector<8x4xf32> -> vector<8x4xf32>
    %cst_135 = arith.constant dense<0xFF800000> : vector<8xf32>
    %192 = vector.multi_reduction <maximumf>, %191, %cst_135 [1] : vector<8x4xf32> to vector<8xf32>
    %193 = vector.shape_cast %192 : vector<8xf32> to vector<8x1xf32>
    %194 = vector.broadcast %193 : vector<8x1xf32> to vector<8x4xf32>
    %195 = arith.subf %191, %194 : vector<8x4xf32>
    %196 = math.exp %195 : vector<8x4xf32>
    %cst_136 = arith.constant dense<0.000000e+00> : vector<8xf32>
    %197 = vector.multi_reduction <add>, %196, %cst_136 [1] : vector<8x4xf32> to vector<8xf32>
    %198 = vector.shape_cast %197 : vector<8xf32> to vector<8x1xf32>
    %199 = vector.broadcast %198 : vector<8x1xf32> to vector<8x4xf32>
    %200 = arith.divf %196, %199 : vector<8x4xf32>
    %201 = tpu.iota {dimensions = array<i32: 1>} : vector<8x4xi32>
    %202 = vector.broadcast %193 : vector<8x1xf32> to vector<8x4xf32>
    %203 = arith.cmpf oeq, %191, %202 : vector<8x4xf32>
    %c4_i32 = arith.constant 4 : i32
    %204 = vector.broadcast %c4_i32 : i32 to vector<8x4xi32>
    %205 = arith.select %203, %201, %204 : vector<8x4xi1>, vector<8x4xi32>
    %cst_137 = arith.constant dense<2147483647> : vector<8xi32>
    %206 = vector.multi_reduction <minsi>, %205, %cst_137 [1] : vector<8x4xi32> to vector<8xi32>
    %207 = vector.shape_cast %206 : vector<8xi32> to vector<8x1xi32>
    %208 = vector.broadcast %207 : vector<8x1xi32> to vector<8x4xi32>
    %209 = arith.cmpi eq, %201, %208 : vector<8x4xi32>
    %210 = arith.extui %209 : vector<8x4xi1> to vector<8x4xi32>
    %211 = arith.sitofp %210 : vector<8x4xi32> to vector<8x4xf32>
    %212 = arith.mulf %211, %200 : vector<8x4xf32>
    %cst_138 = arith.constant dense<0.000000e+00> : vector<8xf32>
    %213 = vector.multi_reduction <add>, %212, %cst_138 [1] : vector<8x4xf32> to vector<8xf32>
    %214 = vector.shape_cast %213 : vector<8xf32> to vector<8x1xf32>
    %215 = vector.broadcast %214 : vector<8x1xf32> to vector<8x4xf32>
    %216 = arith.mulf %211, %215 : vector<8x4xf32>
    %c0_139 = arith.constant 0 : index
    %c0_140 = arith.constant 0 : index
    %217 = vector.load %arg14[%c0_139, %c0_140] : memref<32x256xf32, #tpu.memory_space<vmem>>, vector<32x256xf32>
    %cst_141 = arith.constant dense<0.000000e+00> : vector<8x256xf32>
    %218 = tpu.matmul %189, %217, %cst_141 {dimension_numbers = #tpu.dot_dimension_numbers<[1], [0], [0], [1], [0, 0, 1, 1], [], []>} : vector<8x32xf32>, vector<32x256xf32>, vector<8x256xf32> -> vector<8x256xf32>
    %c0_142 = arith.constant 0 : index
    %c0_143 = arith.constant 0 : index
    %219 = vector.load %arg15[%c0_142, %c0_143] : memref<1x256xf32, #tpu.memory_space<vmem>>, vector<1x256xf32>
    %220 = vector.broadcast %219 : vector<1x256xf32> to vector<8x256xf32>
    %221 = arith.addf %218, %220 : vector<8x256xf32>
    %cst_144 = arith.constant 0.000000e+00 : f32
    %222 = vector.broadcast %cst_144 : f32 to vector<8x256xf32>
    %223 = arith.maximumf %221, %222 : vector<8x256xf32>
    %c0_145 = arith.constant 0 : index
    %c0_146 = arith.constant 0 : index
    %224 = vector.load %arg16[%c0_145, %c0_146] : memref<256x128xf32, #tpu.memory_space<vmem>>, vector<256x128xf32>
    %cst_147 = arith.constant dense<0.000000e+00> : vector<8x128xf32>
    %225 = tpu.matmul %223, %224, %cst_147 {dimension_numbers = #tpu.dot_dimension_numbers<[1], [0], [0], [1], [0, 0, 1, 1], [], []>} : vector<8x256xf32>, vector<256x128xf32>, vector<8x128xf32> -> vector<8x128xf32>
    %c0_148 = arith.constant 0 : index
    %c0_149 = arith.constant 0 : index
    %226 = vector.load %arg17[%c0_148, %c0_149] : memref<1x128xf32, #tpu.memory_space<vmem>>, vector<1x128xf32>
    %227 = vector.broadcast %226 : vector<1x128xf32> to vector<8x128xf32>
    %228 = arith.addf %225, %227 : vector<8x128xf32>
    %cst_150 = arith.constant 0.000000e+00 : f32
    %229 = vector.broadcast %cst_150 : f32 to vector<8x32xf32>
    %230 = vector.extract_strided_slice %216 {offsets = [0, 0], sizes = [8, 1], strides = [1, 1]} : vector<8x4xf32> to vector<8x1xf32>
    %231 = vector.extract_strided_slice %228 {offsets = [0, 0], sizes = [8, 32], strides = [1, 1]} : vector<8x128xf32> to vector<8x32xf32>
    %232 = vector.broadcast %230 : vector<8x1xf32> to vector<8x32xf32>
    %233 = arith.mulf %232, %231 : vector<8x32xf32>
    %234 = arith.addf %229, %233 : vector<8x32xf32>
    %235 = vector.extract_strided_slice %216 {offsets = [0, 1], sizes = [8, 1], strides = [1, 1]} : vector<8x4xf32> to vector<8x1xf32>
    %236 = vector.extract_strided_slice %228 {offsets = [0, 32], sizes = [8, 32], strides = [1, 1]} : vector<8x128xf32> to vector<8x32xf32>
    %237 = vector.broadcast %235 : vector<8x1xf32> to vector<8x32xf32>
    %238 = arith.mulf %237, %236 : vector<8x32xf32>
    %239 = arith.addf %234, %238 : vector<8x32xf32>
    %240 = vector.extract_strided_slice %216 {offsets = [0, 2], sizes = [8, 1], strides = [1, 1]} : vector<8x4xf32> to vector<8x1xf32>
    %241 = vector.extract_strided_slice %228 {offsets = [0, 64], sizes = [8, 32], strides = [1, 1]} : vector<8x128xf32> to vector<8x32xf32>
    %242 = vector.broadcast %240 : vector<8x1xf32> to vector<8x32xf32>
    %243 = arith.mulf %242, %241 : vector<8x32xf32>
    %244 = arith.addf %239, %243 : vector<8x32xf32>
    %245 = vector.extract_strided_slice %216 {offsets = [0, 3], sizes = [8, 1], strides = [1, 1]} : vector<8x4xf32> to vector<8x1xf32>
    %246 = vector.extract_strided_slice %228 {offsets = [0, 96], sizes = [8, 32], strides = [1, 1]} : vector<8x128xf32> to vector<8x32xf32>
    %247 = vector.broadcast %245 : vector<8x1xf32> to vector<8x32xf32>
    %248 = arith.mulf %247, %246 : vector<8x32xf32>
    %249 = arith.addf %244, %248 : vector<8x32xf32>
    %250 = arith.addf %189, %249 : vector<8x32xf32>
    %c0_151 = arith.constant 0 : index
    %c0_152 = arith.constant 0 : index
    %251 = vector.load %arg18[%c0_151, %c0_152] : memref<1x32xf32, #tpu.memory_space<vmem>>, vector<1x32xf32>
    %c0_153 = arith.constant 0 : index
    %c0_154 = arith.constant 0 : index
    %252 = vector.load %arg19[%c0_153, %c0_154] : memref<1x32xf32, #tpu.memory_space<vmem>>, vector<1x32xf32>
    %cst_155 = arith.constant dense<0.000000e+00> : vector<8xf32>
    %253 = vector.multi_reduction <add>, %250, %cst_155 [1] : vector<8x32xf32> to vector<8xf32>
    %254 = vector.shape_cast %253 : vector<8xf32> to vector<8x1xf32>
    %cst_156 = arith.constant 3.200000e+01 : f32
    %255 = vector.broadcast %cst_156 : f32 to vector<8x1xf32>
    %256 = arith.divf %254, %255 : vector<8x1xf32>
    %257 = vector.broadcast %256 : vector<8x1xf32> to vector<8x32xf32>
    %258 = arith.subf %250, %257 : vector<8x32xf32>
    %259 = vector.broadcast %256 : vector<8x1xf32> to vector<8x32xf32>
    %260 = arith.subf %250, %259 : vector<8x32xf32>
    %261 = arith.mulf %258, %260 : vector<8x32xf32>
    %cst_157 = arith.constant dense<0.000000e+00> : vector<8xf32>
    %262 = vector.multi_reduction <add>, %261, %cst_157 [1] : vector<8x32xf32> to vector<8xf32>
    %263 = vector.shape_cast %262 : vector<8xf32> to vector<8x1xf32>
    %cst_158 = arith.constant 3.200000e+01 : f32
    %264 = vector.broadcast %cst_158 : f32 to vector<8x1xf32>
    %265 = arith.divf %263, %264 : vector<8x1xf32>
    %266 = vector.broadcast %256 : vector<8x1xf32> to vector<8x32xf32>
    %267 = arith.subf %250, %266 : vector<8x32xf32>
    %cst_159 = arith.constant 9.99999974E-6 : f32
    %268 = vector.broadcast %cst_159 : f32 to vector<8x1xf32>
    %269 = arith.addf %265, %268 : vector<8x1xf32>
    %270 = math.rsqrt %269 : vector<8x1xf32>
    %271 = vector.broadcast %270 : vector<8x1xf32> to vector<8x32xf32>
    %272 = arith.mulf %267, %271 : vector<8x32xf32>
    %273 = vector.broadcast %251 : vector<1x32xf32> to vector<8x32xf32>
    %274 = arith.mulf %272, %273 : vector<8x32xf32>
    %275 = vector.broadcast %252 : vector<1x32xf32> to vector<8x32xf32>
    %276 = arith.addf %274, %275 : vector<8x32xf32>
    %c0_160 = arith.constant 0 : index
    %c0_161 = arith.constant 0 : index
    %c0_162 = arith.constant 0 : index
    %277 = vector.load %arg20[%c0_160, %c0_161, %c0_162] : memref<1x8x32xf32, #tpu.memory_space<vmem>>, vector<1x8x32xf32>
    %278 = vector.shape_cast %277 : vector<1x8x32xf32> to vector<8x32xf32>
    %279 = vector.shape_cast %276 : vector<8x32xf32> to vector<1x8x32xf32>
    tpu.vector_store %arg20[%c0_160, %c0_161, %c0_162], %279 {strides = array<i32>} : memref<1x8x32xf32, #tpu.memory_space<vmem>>, vector<1x8x32xf32>,
    return
  }
  func.func @transform_0(%arg0: i32) -> (i32, i32, i32) {
    %c0_i32 = arith.constant 0 : i32
    %c0_i32_0 = arith.constant 0 : i32
    %c0_i32_1 = arith.constant 0 : i32
    return %arg0, %c0_i32, %c0_i32_0 : i32, i32, i32
  }
  func.func @transform_1(%arg0: i32) -> (i32, i32) {
    %c0_i32 = arith.constant 0 : i32
    %c0_i32_0 = arith.constant 0 : i32
    %c0_i32_1 = arith.constant 0 : i32
    return %c0_i32, %c0_i32_0 : i32, i32
  }
  func.func @transform_2(%arg0: i32) -> (i32, i32, i32) {
    %c0_i32 = arith.constant 0 : i32
    %c0_i32_0 = arith.constant 0 : i32
    %c0_i32_1 = arith.constant 0 : i32
    %c0_i32_2 = arith.constant 0 : i32
    return %c0_i32, %c0_i32_0, %c0_i32_1 : i32, i32, i32
  }
  func.func @transform_3(%arg0: i32) -> (i32, i32, i32) {
    %c0_i32 = arith.constant 0 : i32
    %c0_i32_0 = arith.constant 0 : i32
    %c0_i32_1 = arith.constant 0 : i32
    %c0_i32_2 = arith.constant 0 : i32
    return %c0_i32, %c0_i32_0, %c0_i32_1 : i32, i32, i32
  }
  func.func @transform_4(%arg0: i32) -> (i32, i32, i32) {
    %c0_i32 = arith.constant 0 : i32
    %c0_i32_0 = arith.constant 0 : i32
    %c0_i32_1 = arith.constant 0 : i32
    %c0_i32_2 = arith.constant 0 : i32
    return %c0_i32, %c0_i32_0, %c0_i32_1 : i32, i32, i32
  }
  func.func @transform_5(%arg0: i32) -> (i32, i32, i32) {
    %c0_i32 = arith.constant 0 : i32
    %c0_i32_0 = arith.constant 0 : i32
    %c0_i32_1 = arith.constant 0 : i32
    %c0_i32_2 = arith.constant 0 : i32
    return %c0_i32, %c0_i32_0, %c0_i32_1 : i32, i32, i32
  }
  func.func @transform_6(%arg0: i32) -> (i32, i32, i32) {
    %c0_i32 = arith.constant 0 : i32
    %c0_i32_0 = arith.constant 0 : i32
    %c0_i32_1 = arith.constant 0 : i32
    %c0_i32_2 = arith.constant 0 : i32
    return %c0_i32, %c0_i32_0, %c0_i32_1 : i32, i32, i32
  }
  func.func @transform_7(%arg0: i32) -> (i32, i32, i32) {
    %c0_i32 = arith.constant 0 : i32
    %c0_i32_0 = arith.constant 0 : i32
    %c0_i32_1 = arith.constant 0 : i32
    %c0_i32_2 = arith.constant 0 : i32
    return %c0_i32, %c0_i32_0, %c0_i32_1 : i32, i32, i32
  }
  func.func @transform_8(%arg0: i32) -> (i32, i32, i32) {
    %c0_i32 = arith.constant 0 : i32
    %c0_i32_0 = arith.constant 0 : i32
    %c0_i32_1 = arith.constant 0 : i32
    %c0_i32_2 = arith.constant 0 : i32
    return %c0_i32, %c0_i32_0, %c0_i32_1 : i32, i32, i32
  }
  func.func @transform_9(%arg0: i32) -> (i32, i32) {
    %c0_i32 = arith.constant 0 : i32
    %c0_i32_0 = arith.constant 0 : i32
    %c0_i32_1 = arith.constant 0 : i32
    return %c0_i32, %c0_i32_0 : i32, i32
  }
  func.func @transform_10(%arg0: i32) -> (i32, i32) {
    %c0_i32 = arith.constant 0 : i32
    %c0_i32_0 = arith.constant 0 : i32
    %c0_i32_1 = arith.constant 0 : i32
    return %c0_i32, %c0_i32_0 : i32, i32
  }
  func.func @transform_11(%arg0: i32) -> (i32, i32) {
    %c0_i32 = arith.constant 0 : i32
    %c0_i32_0 = arith.constant 0 : i32
    %c0_i32_1 = arith.constant 0 : i32
    return %c0_i32, %c0_i32_0 : i32, i32
  }
  func.func @transform_12(%arg0: i32) -> (i32, i32) {
    %c0_i32 = arith.constant 0 : i32
    %c0_i32_0 = arith.constant 0 : i32
    %c0_i32_1 = arith.constant 0 : i32
    return %c0_i32, %c0_i32_0 : i32, i32
  }
  func.func @transform_13(%arg0: i32) -> (i32, i32) {
    %c0_i32 = arith.constant 0 : i32
    %c0_i32_0 = arith.constant 0 : i32
    %c0_i32_1 = arith.constant 0 : i32
    return %c0_i32, %c0_i32_0 : i32, i32
  }
  func.func @transform_14(%arg0: i32) -> (i32, i32) {
    %c0_i32 = arith.constant 0 : i32
    %c0_i32_0 = arith.constant 0 : i32
    %c0_i32_1 = arith.constant 0 : i32
    return %c0_i32, %c0_i32_0 : i32, i32
  }
  func.func @transform_15(%arg0: i32) -> (i32, i32) {
    %c0_i32 = arith.constant 0 : i32
    %c0_i32_0 = arith.constant 0 : i32
    %c0_i32_1 = arith.constant 0 : i32
    return %c0_i32, %c0_i32_0 : i32, i32
  }
  func.func @transform_16(%arg0: i32) -> (i32, i32) {
    %c0_i32 = arith.constant 0 : i32
    %c0_i32_0 = arith.constant 0 : i32
    %c0_i32_1 = arith.constant 0 : i32
    return %c0_i32, %c0_i32_0 : i32, i32
  }
  func.func @transform_17(%arg0: i32) -> (i32, i32) {
    %c0_i32 = arith.constant 0 : i32
    %c0_i32_0 = arith.constant 0 : i32
    %c0_i32_1 = arith.constant 0 : i32
    return %c0_i32, %c0_i32_0 : i32, i32
  }
  func.func @transform_18(%arg0: i32) -> (i32, i32) {
    %c0_i32 = arith.constant 0 : i32
    %c0_i32_0 = arith.constant 0 : i32
    %c0_i32_1 = arith.constant 0 : i32
    return %c0_i32, %c0_i32_0 : i32, i32
  }
  func.func @transform_19(%arg0: i32) -> (i32, i32, i32) {
    %c0_i32 = arith.constant 0 : i32
    %c0_i32_0 = arith.constant 0 : i32
    %c0_i32_1 = arith.constant 0 : i32
    return %arg0, %c0_i32, %c0_i32_0 : i32, i32, i32
  }
}

</mosaic_0001>

<llo_original>
// kernel: tpu_custom_call.1
$region0: #{tpu_custom_call.1}
  #allocation0 [shape = 'u32[]', space=smem, size = 0x4, offset = 0x4, fixed_abs, tag = 'smem constant byte address 0x4 - core index']
  #allocation1 [shape = 'u32[144,128]{1,0:T(1,128)}', space=vmem, size = 0x12000, scoped, tag = 'internal scratch']
  %s0 = inlined_call_operand.vmem [shape: f32[2,8,32], index: 0, kind: input, shape index: {}]
  %s1 = inlined_call_operand.vmem [shape: f32[8,8], index: 1, kind: input, shape index: {}]
  %s2 = inlined_call_operand.vmem [shape: f32[4,32,8], index: 2, kind: input, shape index: {}]
  %s3 = inlined_call_operand.vmem [shape: f32[4,32,8], index: 3, kind: input, shape index: {}]
  %s4 = inlined_call_operand.vmem [shape: f32[4,32,8], index: 4, kind: input, shape index: {}]
  %s5 = inlined_call_operand.vmem [shape: f32[4,1,8], index: 5, kind: input, shape index: {}]
  %s6 = inlined_call_operand.vmem [shape: f32[4,1,8], index: 6, kind: input, shape index: {}]
  %s7 = inlined_call_operand.vmem [shape: f32[4,1,8], index: 7, kind: input, shape index: {}]
  %s8 = inlined_call_operand.vmem [shape: f32[4,8,32], index: 8, kind: input, shape index: {}]
  %s9 = inlined_call_operand.vmem [shape: f32[1,32], index: 9, kind: input, shape index: {}]
  %s10 = inlined_call_operand.vmem [shape: f32[1,32], index: 10, kind: input, shape index: {}]
  %s11 = inlined_call_operand.vmem [shape: f32[1,32], index: 11, kind: input, shape index: {}]
  %s12 = inlined_call_operand.vmem [shape: f32[32,4], index: 12, kind: input, shape index: {}]
  %s13 = inlined_call_operand.vmem [shape: f32[32,256], index: 13, kind: input, shape index: {}]
  %s14 = inlined_call_operand.vmem [shape: f32[1,256], index: 14, kind: input, shape index: {}]
  %s15 = inlined_call_operand.vmem [shape: f32[256,128], index: 15, kind: input, shape index: {}]
  %s16 = inlined_call_operand.vmem [shape: f32[1,128], index: 16, kind: input, shape index: {}]
  %s17 = inlined_call_operand.vmem [shape: f32[1,32], index: 17, kind: input, shape index: {}]
  %s18 = inlined_call_operand.vmem [shape: f32[1,32], index: 18, kind: input, shape index: {}]
  %s19 = inlined_call_operand.hbm [shape: f32[2,8,32], index: 19, kind: output, shape index: {}]
  %s20 = sld [smem:[#allocation0]]
  $region109: #{tpu_custom_call.1} parent=0
    _
  %s22 = ssub.s32 1, %s20
  %s23 = scalar_select 0, %s22, %s20
  $region1: #{tpu_custom_call.1} parent=0
    #allocation2 [shape = 'u8[8192]{0}', space=vmem, size = 0x2000, scoped, tag = 'output window, operand 0']
    #allocation3 [shape = 's32[2]{0}', space=sflag, size = 0x8, scoped, tag = 'scoped memory for tpu_custom_call.1']
    %24 = vsyncpa [#allocation3], 0
    %s25 = scalar_lea.sflag [#allocation3], 1
    %26 = vsyncpa %s25, 0
    loop: start=0, step=1, limit=4
    $region2: #{tpu_custom_call.1} parent=1 // loop_pre_header
      _
    $region3: #{tpu_custom_call.1} parent=1 // loop_header
      %s28 = sphi 0, %s32
      %p29 = scmp.ge.s32.totalorder %s28, 4
      %s38 = sphi 0, %s40
      %s41 = sphi 0, %s38
      %s42 = sphi 0, %s41
      %s58 = sphi 0, %s42
      %s62 = sphi 0, %s62
      %s64 = sphi 0, %s62
      %s65 = sphi 0, %s64
      %s79 = sphi 0, %s65
      %s83 = sphi 0, %s83
      %s85 = sphi 0, %s83
      %s86 = sphi 0, %s85
      %s100 = sphi 0, %s86
      %s104 = sphi 0, %s104
      %s106 = sphi 0, %s104
      %s107 = sphi 0, %s106
      %s121 = sphi 0, %s107
      %s125 = sphi 0, %s125
      %s127 = sphi 0, %s125
      %s128 = sphi 0, %s127
      %s142 = sphi 0, %s128
      %s146 = sphi 0, %s146
      %s148 = sphi 0, %s146
      %s149 = sphi 0, %s148
      %s163 = sphi 0, %s149
      %s167 = sphi 0, %s167
      %s169 = sphi 0, %s167
      %s170 = sphi 0, %s169
      %s184 = sphi 0, %s170
      %s188 = sphi 0, %s188
      %s190 = sphi 0, %s188
      %s191 = sphi 0, %s190
      %s205 = sphi 0, %s191
      %s209 = sphi 0, %s209
      %s211 = sphi 0, %s209
      %s212 = sphi 0, %s211
      %s226 = sphi 0, %s212
      %s230 = sphi 0, %s230
      %s232 = sphi 0, %s230
      %s233 = sphi 0, %s232
      %s247 = sphi 0, %s233
      %s251 = sphi 0, %s251
      %s253 = sphi 0, %s251
      %s254 = sphi 0, %s253
      %s268 = sphi 0, %s254
      %s272 = sphi 0, %s272
      %s274 = sphi 0, %s272
      %s275 = sphi 0, %s274
      %s289 = sphi 0, %s275
      %s293 = sphi 0, %s293
      %s295 = sphi 0, %s293
      %s296 = sphi 0, %s295
      %s310 = sphi 0, %s296
      %s314 = sphi 0, %s314
      %s316 = sphi 0, %s314
      %s317 = sphi 0, %s316
      %s331 = sphi 0, %s317
      %s335 = sphi 0, %s335
      %s337 = sphi 0, %s335
      %s338 = sphi 0, %s337
      %s352 = sphi 0, %s338
      %s356 = sphi 0, %s356
      %s358 = sphi 0, %s356
      %s359 = sphi 0, %s358
      %s373 = sphi 0, %s359
      %s377 = sphi 0, %s377
      %s379 = sphi 0, %s377
      %s380 = sphi 0, %s379
      %s394 = sphi 0, %s380
      %s398 = sphi 0, %s398
      %s400 = sphi 0, %s398
      %s401 = sphi 0, %s400
      %s415 = sphi 0, %s401
      %s419 = sphi 0, %s419
      %s421 = sphi 0, %s419
      %s422 = sphi 0, %s421
      %s436 = sphi 0, %s422
      %s442 = sphi 0, %s444
      %s445 = sphi 0, %s442
      %s446 = sphi 0, %s445
      %s462 = sphi 0, %s446
    $region4: #{tpu_custom_call.1} parent=1 // loop_header_branch
      %31 = sbr.rel (%p29) target = $region8
    $region5: #{tpu_custom_call.1} parent=1 // loop_body
      %s33 = ssub.s32 %s28, 1
      %s34 = ssub.s32 %s28, 2
      %s35 = sadd.s32 %s28, 1
      %s36 = ssub.s32 %s28, %s35
      %p37 = scmp.eq.s32.totalorder %s36, 0
      %s39 = sadd.s32 %s38, 1
      %s40 = scalar_select %p37, %s38, %s39
      %p43 = pneg %p37
      %p44 = scmp.eq.s32.totalorder %s28, 1
      %p45 = por %p43, %p44
      %p46 = scmp.ne.s32.totalorder %s38, %s41
      %p47 = scmp.eq.s32.totalorder %s28, 0
      %p48 = por %p46, %p47
      %p49 = scmp.ne.s32.totalorder %s38, %s41
      %p50 = scmp.eq.s32.totalorder %s33, 1
      %p51 = por %p49, %p50
      %p52 = scmp.ne.s32.totalorder %s41, %s42
      %p53 = scmp.eq.s32.totalorder %s33, 0
      %p54 = por %p52, %p53
      %p55 = scmp.ne.s32.totalorder %s41, %s42
      %p56 = scmp.eq.s32.totalorder %s34, 1
      %p57 = por %p55, %p56
      %p59 = scmp.ne.s32.totalorder %s42, %s58
      %p60 = scmp.eq.s32.totalorder %s34, 0
      %p61 = por %p59, %p60
      %s63 = sadd.s32 %s62, 1
      %p66 = scmp.eq.s32.totalorder %s28, 1
      %p67 = scmp.ne.s32.totalorder %s62, %s64
      %p68 = scmp.eq.s32.totalorder %s28, 0
      %p69 = por %p67, %p68
      %p70 = scmp.ne.s32.totalorder %s62, %s64
      %p71 = scmp.eq.s32.totalorder %s33, 1
      %p72 = por %p70, %p71
      %p73 = scmp.ne.s32.totalorder %s64, %s65
      %p74 = scmp.eq.s32.totalorder %s33, 0
      %p75 = por %p73, %p74
      %p76 = scmp.ne.s32.totalorder %s64, %s65
      %p77 = scmp.eq.s32.totalorder %s34, 1
      %p78 = por %p76, %p77
      %p80 = scmp.ne.s32.totalorder %s65, %s79
      %p81 = scmp.eq.s32.totalorder %s34, 0
      %p82 = por %p80, %p81
      %s84 = sadd.s32 %s83, 1
      %p87 = scmp.eq.s32.totalorder %s28, 1
      %p88 = scmp.ne.s32.totalorder %s83, %s85
      %p89 = scmp.eq.s32.totalorder %s28, 0
      %p90 = por %p88, %p89
      %p91 = scmp.ne.s32.totalorder %s83, %s85
      %p92 = scmp.eq.s32.totalorder %s33, 1
      %p93 = por %p91, %p92
      %p94 = scmp.ne.s32.totalorder %s85, %s86
      %p95 = scmp.eq.s32.totalorder %s33, 0
      %p96 = por %p94, %p95
      %p97 = scmp.ne.s32.totalorder %s85, %s86
      %p98 = scmp.eq.s32.totalorder %s34, 1
      %p99 = por %p97, %p98
      %p101 = scmp.ne.s32.totalorder %s86, %s100
      %p102 = scmp.eq.s32.totalorder %s34, 0
      %p103 = por %p101, %p102
      %s105 = sadd.s32 %s104, 1
      %p108 = scmp.eq.s32.totalorder %s28, 1
      %p109 = scmp.ne.s32.totalorder %s104, %s106
      %p110 = scmp.eq.s32.totalorder %s28, 0
      %p111 = por %p109, %p110
      %p112 = scmp.ne.s32.totalorder %s104, %s106
      %p113 = scmp.eq.s32.totalorder %s33, 1
      %p114 = por %p112, %p113
      %p115 = scmp.ne.s32.totalorder %s106, %s107
      %p116 = scmp.eq.s32.totalorder %s33, 0
      %p117 = por %p115, %p116
      %p118 = scmp.ne.s32.totalorder %s106, %s107
      %p119 = scmp.eq.s32.totalorder %s34, 1
      %p120 = por %p118, %p119
      %p122 = scmp.ne.s32.totalorder %s107, %s121
      %p123 = scmp.eq.s32.totalorder %s34, 0
      %p124 = por %p122, %p123
      %s126 = sadd.s32 %s125, 1
      %p129 = scmp.eq.s32.totalorder %s28, 1
      %p130 = scmp.ne.s32.totalorder %s125, %s127
      %p131 = scmp.eq.s32.totalorder %s28, 0
      %p132 = por %p130, %p131
      %p133 = scmp.ne.s32.totalorder %s125, %s127
      %p134 = scmp.eq.s32.totalorder %s33, 1
      %p135 = por %p133, %p134
      %p136 = scmp.ne.s32.totalorder %s127, %s128
      %p137 = scmp.eq.s32.totalorder %s33, 0
      %p138 = por %p136, %p137
      %p139 = scmp.ne.s32.totalorder %s127, %s128
      %p140 = scmp.eq.s32.totalorder %s34, 1
      %p141 = por %p139, %p140
      %p143 = scmp.ne.s32.totalorder %s128, %s142
      %p144 = scmp.eq.s32.totalorder %s34, 0
      %p145 = por %p143, %p144
      %s147 = sadd.s32 %s146, 1
      %p150 = scmp.eq.s32.totalorder %s28, 1
      %p151 = scmp.ne.s32.totalorder %s146, %s148
      %p152 = scmp.eq.s32.totalorder %s28, 0
      %p153 = por %p151, %p152
      %p154 = scmp.ne.s32.totalorder %s146, %s148
      %p155 = scmp.eq.s32.totalorder %s33, 1
      %p156 = por %p154, %p155
      %p157 = scmp.ne.s32.totalorder %s148, %s149
      %p158 = scmp.eq.s32.totalorder %s33, 0
      %p159 = por %p157, %p158
      %p160 = scmp.ne.s32.totalorder %s148, %s149
      %p161 = scmp.eq.s32.totalorder %s34, 1
      %p162 = por %p160, %p161
      %p164 = scmp.ne.s32.totalorder %s149, %s163
      %p165 = scmp.eq.s32.totalorder %s34, 0
      %p166 = por %p164, %p165
      %s168 = sadd.s32 %s167, 1
      %p171 = scmp.eq.s32.totalorder %s28, 1
      %p172 = scmp.ne.s32.totalorder %s167, %s169
      %p173 = scmp.eq.s32.totalorder %s28, 0
      %p174 = por %p172, %p173
      %p175 = scmp.ne.s32.totalorder %s167, %s169
      %p176 = scmp.eq.s32.totalorder %s33, 1
      %p177 = por %p175, %p176
      %p178 = scmp.ne.s32.totalorder %s169, %s170
      %p179 = scmp.eq.s32.totalorder %s33, 0
      %p180 = por %p178, %p179
      %p181 = scmp.ne.s32.totalorder %s169, %s170
      %p182 = scmp.eq.s32.totalorder %s34, 1
      %p183 = por %p181, %p182
      %p185 = scmp.ne.s32.totalorder %s170, %s184
      %p186 = scmp.eq.s32.totalorder %s34, 0
      %p187 = por %p185, %p186
      %s189 = sadd.s32 %s188, 1
      %p192 = scmp.eq.s32.totalorder %s28, 1
      %p193 = scmp.ne.s32.totalorder %s188, %s190
      %p194 = scmp.eq.s32.totalorder %s28, 0
      %p195 = por %p193, %p194
      %p196 = scmp.ne.s32.totalorder %s188, %s190
      %p197 = scmp.eq.s32.totalorder %s33, 1
      %p198 = por %p196, %p197
      %p199 = scmp.ne.s32.totalorder %s190, %s191
      %p200 = scmp.eq.s32.totalorder %s33, 0
      %p201 = por %p199, %p200
      %p202 = scmp.ne.s32.totalorder %s190, %s191
      %p203 = scmp.eq.s32.totalorder %s34, 1
      %p204 = por %p202, %p203
      %p206 = scmp.ne.s32.totalorder %s191, %s205
      %p207 = scmp.eq.s32.totalorder %s34, 0
      %p208 = por %p206, %p207
      %s210 = sadd.s32 %s209, 1
      %p213 = scmp.eq.s32.totalorder %s28, 1
      %p214 = scmp.ne.s32.totalorder %s209, %s211
      %p215 = scmp.eq.s32.totalorder %s28, 0
      %p216 = por %p214, %p215
      %p217 = scmp.ne.s32.totalorder %s209, %s211
      %p218 = scmp.eq.s32.totalorder %s33, 1
      %p219 = por %p217, %p218
      %p220 = scmp.ne.s32.totalorder %s211, %s212
      %p221 = scmp.eq.s32.totalorder %s33, 0
      %p222 = por %p220, %p221
      %p223 = scmp.ne.s32.totalorder %s211, %s212
      %p224 = scmp.eq.s32.totalorder %s34, 1
      %p225 = por %p223, %p224
      %p227 = scmp.ne.s32.totalorder %s212, %s226
      %p228 = scmp.eq.s32.totalorder %s34, 0
      %p229 = por %p227, %p228
      %s231 = sadd.s32 %s230, 1
      %p234 = scmp.eq.s32.totalorder %s28, 1
      %p235 = scmp.ne.s32.totalorder %s230, %s232
      %p236 = scmp.eq.s32.totalorder %s28, 0
      %p237 = por %p235, %p236
      %p238 = scmp.ne.s32.totalorder %s230, %s232
      %p239 = scmp.eq.s32.totalorder %s33, 1
      %p240 = por %p238, %p239
      %p241 = scmp.ne.s32.totalorder %s232, %s233
      %p242 = scmp.eq.s32.totalorder %s33, 0
      %p243 = por %p241, %p242
      %p244 = scmp.ne.s32.totalorder %s232, %s233
      %p245 = scmp.eq.s32.totalorder %s34, 1
      %p246 = por %p244, %p245
      %p248 = scmp.ne.s32.totalorder %s233, %s247
      %p249 = scmp.eq.s32.totalorder %s34, 0
      %p250 = por %p248, %p249
      %s252 = sadd.s32 %s251, 1
      %p255 = scmp.eq.s32.totalorder %s28, 1
      %p256 = scmp.ne.s32.totalorder %s251, %s253
      %p257 = scmp.eq.s32.totalorder %s28, 0
      %p258 = por %p256, %p257
      %p259 = scmp.ne.s32.totalorder %s251, %s253
      %p260 = scmp.eq.s32.totalorder %s33, 1
      %p261 = por %p259, %p260
      %p262 = scmp.ne.s32.totalorder %s253, %s254
      %p263 = scmp.eq.s32.totalorder %s33, 0
      %p264 = por %p262, %p263
      %p265 = scmp.ne.s32.totalorder %s253, %s254
      %p266 = scmp.eq.s32.totalorder %s34, 1
      %p267 = por %p265, %p266
      %p269 = scmp.ne.s32.totalorder %s254, %s268
      %p270 = scmp.eq.s32.totalorder %s34, 0
      %p271 = por %p269, %p270
      %s273 = sadd.s32 %s272, 1
      %p276 = scmp.eq.s32.totalorder %s28, 1
      %p277 = scmp.ne.s32.totalorder %s272, %s274
      %p278 = scmp.eq.s32.totalorder %s28, 0
      %p279 = por %p277, %p278
      %p280 = scmp.ne.s32.totalorder %s272, %s274
      %p281 = scmp.eq.s32.totalorder %s33, 1
      %p282 = por %p280, %p281
      %p283 = scmp.ne.s32.totalorder %s274, %s275
      %p284 = scmp.eq.s32.totalorder %s33, 0
      %p285 = por %p283, %p284
      %p286 = scmp.ne.s32.totalorder %s274, %s275
      %p287 = scmp.eq.s32.totalorder %s34, 1
      %p288 = por %p286, %p287
      %p290 = scmp.ne.s32.totalorder %s275, %s289
      %p291 = scmp.eq.s32.totalorder %s34, 0
      %p292 = por %p290, %p291
      %s294 = sadd.s32 %s293, 1
      %p297 = scmp.eq.s32.totalorder %s28, 1
      %p298 = scmp.ne.s32.totalorder %s293, %s295
      %p299 = scmp.eq.s32.totalorder %s28, 0
      %p300 = por %p298, %p299
      %p301 = scmp.ne.s32.totalorder %s293, %s295
      %p302 = scmp.eq.s32.totalorder %s33, 1
      %p303 = por %p301, %p302
      %p304 = scmp.ne.s32.totalorder %s295, %s296
      %p305 = scmp.eq.s32.totalorder %s33, 0
      %p306 = por %p304, %p305
      %p307 = scmp.ne.s32.totalorder %s295, %s296
      %p308 = scmp.eq.s32.totalorder %s34, 1
      %p309 = por %p307, %p308
      %p311 = scmp.ne.s32.totalorder %s296, %s310
      %p312 = scmp.eq.s32.totalorder %s34, 0
      %p313 = por %p311, %p312
      %s315 = sadd.s32 %s314, 1
      %p318 = scmp.eq.s32.totalorder %s28, 1
      %p319 = scmp.ne.s32.totalorder %s314, %s316
      %p320 = scmp.eq.s32.totalorder %s28, 0
      %p321 = por %p319, %p320
      %p322 = scmp.ne.s32.totalorder %s314, %s316
      %p323 = scmp.eq.s32.totalorder %s33, 1
      %p324 = por %p322, %p323
      %p325 = scmp.ne.s32.totalorder %s316, %s317
      %p326 = scmp.eq.s32.totalorder %s33, 0
      %p327 = por %p325, %p326
      %p328 = scmp.ne.s32.totalorder %s316, %s317
      %p329 = scmp.eq.s32.totalorder %s34, 1
      %p330 = por %p328, %p329
      %p332 = scmp.ne.s32.totalorder %s317, %s331
      %p333 = scmp.eq.s32.totalorder %s34, 0
      %p334 = por %p332, %p333
      %s336 = sadd.s32 %s335, 1
      %p339 = scmp.eq.s32.totalorder %s28, 1
      %p340 = scmp.ne.s32.totalorder %s335, %s337
      %p341 = scmp.eq.s32.totalorder %s28, 0
      %p342 = por %p340, %p341
      %p343 = scmp.ne.s32.totalorder %s335, %s337
      %p344 = scmp.eq.s32.totalorder %s33, 1
      %p345 = por %p343, %p344
      %p346 = scmp.ne.s32.totalorder %s337, %s338
      %p347 = scmp.eq.s32.totalorder %s33, 0
      %p348 = por %p346, %p347
      %p349 = scmp.ne.s32.totalorder %s337, %s338
      %p350 = scmp.eq.s32.totalorder %s34, 1
      %p351 = por %p349, %p350
      %p353 = scmp.ne.s32.totalorder %s338, %s352
      %p354 = scmp.eq.s32.totalorder %s34, 0
      %p355 = por %p353, %p354
      %s357 = sadd.s32 %s356, 1
      %p360 = scmp.eq.s32.totalorder %s28, 1
      %p361 = scmp.ne.s32.totalorder %s356, %s358
      %p362 = scmp.eq.s32.totalorder %s28, 0
      %p363 = por %p361, %p362
      %p364 = scmp.ne.s32.totalorder %s356, %s358
      %p365 = scmp.eq.s32.totalorder %s33, 1
      %p366 = por %p364, %p365
      %p367 = scmp.ne.s32.totalorder %s358, %s359
      %p368 = scmp.eq.s32.totalorder %s33, 0
      %p369 = por %p367, %p368
      %p370 = scmp.ne.s32.totalorder %s358, %s359
      %p371 = scmp.eq.s32.totalorder %s34, 1
      %p372 = por %p370, %p371
      %p374 = scmp.ne.s32.totalorder %s359, %s373
      %p375 = scmp.eq.s32.totalorder %s34, 0
      %p376 = por %p374, %p375
      %s378 = sadd.s32 %s377, 1
      %p381 = scmp.eq.s32.totalorder %s28, 1
      %p382 = scmp.ne.s32.totalorder %s377, %s379
      %p383 = scmp.eq.s32.totalorder %s28, 0
      %p384 = por %p382, %p383
      %p385 = scmp.ne.s32.totalorder %s377, %s379
      %p386 = scmp.eq.s32.totalorder %s33, 1
      %p387 = por %p385, %p386
      %p388 = scmp.ne.s32.totalorder %s379, %s380
      %p389 = scmp.eq.s32.totalorder %s33, 0
      %p390 = por %p388, %p389
      %p391 = scmp.ne.s32.totalorder %s379, %s380
      %p392 = scmp.eq.s32.totalorder %s34, 1
      %p393 = por %p391, %p392
      %p395 = scmp.ne.s32.totalorder %s380, %s394
      %p396 = scmp.eq.s32.totalorder %s34, 0
      %p397 = por %p395, %p396
      %s399 = sadd.s32 %s398, 1
      %p402 = scmp.eq.s32.totalorder %s28, 1
      %p403 = scmp.ne.s32.totalorder %s398, %s400
      %p404 = scmp.eq.s32.totalorder %s28, 0
      %p405 = por %p403, %p404
      %p406 = scmp.ne.s32.totalorder %s398, %s400
      %p407 = scmp.eq.s32.totalorder %s33, 1
      %p408 = por %p406, %p407
      %p409 = scmp.ne.s32.totalorder %s400, %s401
      %p410 = scmp.eq.s32.totalorder %s33, 0
      %p411 = por %p409, %p410
      %p412 = scmp.ne.s32.totalorder %s400, %s401
      %p413 = scmp.eq.s32.totalorder %s34, 1
      %p414 = por %p412, %p413
      %p416 = scmp.ne.s32.totalorder %s401, %s415
      %p417 = scmp.eq.s32.totalorder %s34, 0
      %p418 = por %p416, %p417
      %s420 = sadd.s32 %s419, 1
      %p423 = scmp.eq.s32.totalorder %s28, 1
      %p424 = scmp.ne.s32.totalorder %s419, %s421
      %p425 = scmp.eq.s32.totalorder %s28, 0
      %p426 = por %p424, %p425
      %p427 = scmp.ne.s32.totalorder %s419, %s421
      %p428 = scmp.eq.s32.totalorder %s33, 1
      %p429 = por %p427, %p428
      %p430 = scmp.ne.s32.totalorder %s421, %s422
      %p431 = scmp.eq.s32.totalorder %s33, 0
      %p432 = por %p430, %p431
      %p433 = scmp.ne.s32.totalorder %s421, %s422
      %p434 = scmp.eq.s32.totalorder %s34, 1
      %p435 = por %p433, %p434
      %p437 = scmp.ne.s32.totalorder %s422, %s436
      %p438 = scmp.eq.s32.totalorder %s34, 0
      %p439 = por %p437, %p438
      %s440 = ssub.s32 %s28, %s35
      %p441 = scmp.eq.s32.totalorder %s440, 0
      %s443 = sadd.s32 %s442, 1
      %s444 = scalar_select %p441, %s442, %s443
      %p447 = pneg %p441
      %p448 = scmp.eq.s32.totalorder %s28, 1
      %p449 = por %p447, %p448
      %p450 = scmp.ne.s32.totalorder %s442, %s445
      %p451 = scmp.eq.s32.totalorder %s28, 0
      %p452 = por %p450, %p451
      %p453 = scmp.ne.s32.totalorder %s442, %s445
      %p454 = scmp.eq.s32.totalorder %s33, 1
      %p455 = por %p453, %p454
      %p456 = scmp.ne.s32.totalorder %s445, %s446
      %p457 = scmp.eq.s32.totalorder %s33, 0
      %p458 = por %p456, %p457
      %p459 = scmp.ne.s32.totalorder %s445, %s446
      %p460 = scmp.eq.s32.totalorder %s34, 1
      %p461 = por %p459, %p460
      %p463 = scmp.ne.s32.totalorder %s446, %s462
      %p464 = scmp.eq.s32.totalorder %s34, 0
      %p465 = por %p463, %p464
      %p466 = scmp.le.s32.totalorder 1, %s28
      %p467 = scmp.lt.s32.totalorder %s28, 3
      %p468 = pnand %p466, %p467
      %p469 = pneg %p468
      // Predicated region
      $region9: #{tpu_custom_call.1} parent=5 // pred_check
        _
      $region10: #{tpu_custom_call.1} parent=5 // pred_check_branch
        %471 = sbr.rel (%p468) target = $region12
      $region11: #{tpu_custom_call.1} parent=5 // pred_region
        %s472 = ssub.s32 %s28, 1
        // Predicated region
        $region13: #{tpu_custom_call.1} parent=11 // pred_check
          %p473 = pneg %p75
        $region14: #{tpu_custom_call.1} parent=11 // pred_check_branch
          %475 = sbr.rel (%p473) target = $region16
        $region15: #{tpu_custom_call.1} parent=11 // pred_region
          _
        $region16: #{tpu_custom_call.1} parent=11 // pred_fallthru
          _
        // Predicated region
        $region17: #{tpu_custom_call.1} parent=11 // pred_check
          %p476 = pneg %p96
        $region18: #{tpu_custom_call.1} parent=11 // pred_check_branch
          %478 = sbr.rel (%p476) target = $region20
        $region19: #{tpu_custom_call.1} parent=11 // pred_region
          _
        $region20: #{tpu_custom_call.1} parent=11 // pred_fallthru
          _
        // Predicated region
        $region21: #{tpu_custom_call.1} parent=11 // pred_check
          %p479 = pneg %p117
        $region22: #{tpu_custom_call.1} parent=11 // pred_check_branch
          %481 = sbr.rel (%p479) target = $region24
        $region23: #{tpu_custom_call.1} parent=11 // pred_region
          _
        $region24: #{tpu_custom_call.1} parent=11 // pred_fallthru
          _
        // Predicated region
        $region25: #{tpu_custom_call.1} parent=11 // pred_check
          %p482 = pneg %p138
        $region26: #{tpu_custom_call.1} parent=11 // pred_check_branch
          %484 = sbr.rel (%p482) target = $region28
        $region27: #{tpu_custom_call.1} parent=11 // pred_region
          _
        $region28: #{tpu_custom_call.1} parent=11 // pred_fallthru
          _
        // Predicated region
        $region29: #{tpu_custom_call.1} parent=11 // pred_check
          %p485 = pneg %p159
        $region30: #{tpu_custom_call.1} parent=11 // pred_check_branch
          %487 = sbr.rel (%p485) target = $region32
        $region31: #{tpu_custom_call.1} parent=11 // pred_region
          _
        $region32: #{tpu_custom_call.1} parent=11 // pred_fallthru
          _
        // Predicated region
        $region33: #{tpu_custom_call.1} parent=11 // pred_check
          %p488 = pneg %p180
        $region34: #{tpu_custom_call.1} parent=11 // pred_check_branch
          %490 = sbr.rel (%p488) target = $region36
        $region35: #{tpu_custom_call.1} parent=11 // pred_region
          _
        $region36: #{tpu_custom_call.1} parent=11 // pred_fallthru
          _
        // Predicated region
        $region37: #{tpu_custom_call.1} parent=11 // pred_check
          %p491 = pneg %p201
        $region38: #{tpu_custom_call.1} parent=11 // pred_check_branch
          %493 = sbr.rel (%p491) target = $region40
        $region39: #{tpu_custom_call.1} parent=11 // pred_region
          _
        $region40: #{tpu_custom_call.1} parent=11 // pred_fallthru
          _
        // Predicated region
        $region41: #{tpu_custom_call.1} parent=11 // pred_check
          %p494 = pneg %p222
        $region42: #{tpu_custom_call.1} parent=11 // pred_check_branch
          %496 = sbr.rel (%p494) target = $region44
        $region43: #{tpu_custom_call.1} parent=11 // pred_region
          _
        $region44: #{tpu_custom_call.1} parent=11 // pred_fallthru
          _
        // Predicated region
        $region45: #{tpu_custom_call.1} parent=11 // pred_check
          %p497 = pneg %p243
        $region46: #{tpu_custom_call.1} parent=11 // pred_check_branch
          %499 = sbr.rel (%p497) target = $region48
        $region47: #{tpu_custom_call.1} parent=11 // pred_region
          _
        $region48: #{tpu_custom_call.1} parent=11 // pred_fallthru
          _
        // Predicated region
        $region49: #{tpu_custom_call.1} parent=11 // pred_check
          %p500 = pneg %p264
        $region50: #{tpu_custom_call.1} parent=11 // pred_check_branch
          %502 = sbr.rel (%p500) target = $region52
        $region51: #{tpu_custom_call.1} parent=11 // pred_region
          _
        $region52: #{tpu_custom_call.1} parent=11 // pred_fallthru
          _
        // Predicated region
        $region53: #{tpu_custom_call.1} parent=11 // pred_check
          %p503 = pneg %p285
        $region54: #{tpu_custom_call.1} parent=11 // pred_check_branch
          %505 = sbr.rel (%p503) target = $region56
        $region55: #{tpu_custom_call.1} parent=11 // pred_region
          _
        $region56: #{tpu_custom_call.1} parent=11 // pred_fallthru
          _
        // Predicated region
        $region57: #{tpu_custom_call.1} parent=11 // pred_check
          %p506 = pneg %p306
        $region58: #{tpu_custom_call.1} parent=11 // pred_check_branch
          %508 = sbr.rel (%p506) target = $region60
        $region59: #{tpu_custom_call.1} parent=11 // pred_region
          _
        $region60: #{tpu_custom_call.1} parent=11 // pred_fallthru
          _
        // Predicated region
        $region61: #{tpu_custom_call.1} parent=11 // pred_check
          %p509 = pneg %p327
        $region62: #{tpu_custom_call.1} parent=11 // pred_check_branch
          %511 = sbr.rel (%p509) target = $region64
        $region63: #{tpu_custom_call.1} parent=11 // pred_region
          _
        $region64: #{tpu_custom_call.1} parent=11 // pred_fallthru
          _
        // Predicated region
        $region65: #{tpu_custom_call.1} parent=11 // pred_check
          %p512 = pneg %p348
        $region66: #{tpu_custom_call.1} parent=11 // pred_check_branch
          %514 = sbr.rel (%p512) target = $region68
        $region67: #{tpu_custom_call.1} parent=11 // pred_region
          _
        $region68: #{tpu_custom_call.1} parent=11 // pred_fallthru
          _
        // Predicated region
        $region69: #{tpu_custom_call.1} parent=11 // pred_check
          %p515 = pneg %p369
        $region70: #{tpu_custom_call.1} parent=11 // pred_check_branch
          %517 = sbr.rel (%p515) target = $region72
        $region71: #{tpu_custom_call.1} parent=11 // pred_region
          _
        $region72: #{tpu_custom_call.1} parent=11 // pred_fallthru
          _
        // Predicated region
        $region73: #{tpu_custom_call.1} parent=11 // pred_check
          %p518 = pneg %p390
        $region74: #{tpu_custom_call.1} parent=11 // pred_check_branch
          %520 = sbr.rel (%p518) target = $region76
        $region75: #{tpu_custom_call.1} parent=11 // pred_region
          _
        $region76: #{tpu_custom_call.1} parent=11 // pred_fallthru
          _
        // Predicated region
        $region77: #{tpu_custom_call.1} parent=11 // pred_check
          %p521 = pneg %p411
        $region78: #{tpu_custom_call.1} parent=11 // pred_check_branch
          %523 = sbr.rel (%p521) target = $region80
        $region79: #{tpu_custom_call.1} parent=11 // pred_region
          _
        $region80: #{tpu_custom_call.1} parent=11 // pred_fallthru
          _
        // Predicated region
        $region81: #{tpu_custom_call.1} parent=11 // pred_check
          %p524 = pneg %p432
        $region82: #{tpu_custom_call.1} parent=11 // pred_check_branch
          %526 = sbr.rel (%p524) target = $region84
        $region83: #{tpu_custom_call.1} parent=11 // pred_region
          _
        $region84: #{tpu_custom_call.1} parent=11 // pred_fallthru
          _
      $region12: #{tpu_custom_call.1} parent=5 // pred_fallthru
        _
      %p527 = scmp.lt.s32.totalorder %s28, 2
      // Predicated region
      $region85: #{tpu_custom_call.1} parent=5 // pred_check
        %p528 = pneg %p527
      $region86: #{tpu_custom_call.1} parent=5 // pred_check_branch
        %530 = sbr.rel (%p528) target = $region88
      $region87: #{tpu_custom_call.1} parent=5 // pred_region
        // Predicated region
        $region89: #{tpu_custom_call.1} parent=87 // pred_check
          %p531 = pneg %p48
        $region90: #{tpu_custom_call.1} parent=87 // pred_check_branch
          %533 = sbr.rel (%p531) target = $region92
        $region91: #{tpu_custom_call.1} parent=87 // pred_region
          %p534 = scmp.lt.s32.totalorder %s28, 1
          %s535 = scalar_select %p534, %s28, 1
          %s536 = smul.addr %s535, 8
          %s537 = scalar_lea.vmem %s0, %s536
        $region92: #{tpu_custom_call.1} parent=87 // pred_fallthru
          _
      $region88: #{tpu_custom_call.1} parent=5 // pred_fallthru
        _
      %p538 = scmp.le.s32.totalorder 1, %s28
      %p539 = scmp.lt.s32.totalorder %s28, 3
      %p540 = pnand %p538, %p539
      %p541 = pneg %p540
      // Predicated region
      $region93: #{tpu_custom_call.1} parent=5 // pred_check
        _
      $region94: #{tpu_custom_call.1} parent=5 // pred_check_branch
        %543 = sbr.rel (%p540) target = $region96
      $region95: #{tpu_custom_call.1} parent=5 // pred_region
        %s544 = ssub.s32 %s28, 1
        %p545 = scmp.lt.s32.totalorder %s33, 1
        %s546 = scalar_select %p545, %s33, 1
        %s547 = smul.addr %s546, 8
        %s548 = scalar_lea.vmem %s0, %s547
        %p549 = pneg %p54
        %p550 = pneg %p51
        %p551 = pneg %p75
        %p552 = pneg %p72
        %p553 = pneg %p96
        %p554 = pneg %p93
        %p555 = pneg %p117
        %p556 = pneg %p114
        %p557 = pneg %p138
        %p558 = pneg %p135
        %p559 = pneg %p159
        %p560 = pneg %p156
        %p561 = pneg %p180
        %p562 = pneg %p177
        %p563 = pneg %p201
        %p564 = pneg %p198
        %p565 = pneg %p222
        %p566 = pneg %p219
        %p567 = pneg %p243
        %p568 = pneg %p240
        %p569 = pneg %p264
        %p570 = pneg %p261
        %p571 = pneg %p285
        %p572 = pneg %p282
        %p573 = pneg %p306
        %p574 = pneg %p303
        %p575 = pneg %p327
        %p576 = pneg %p324
        %p577 = pneg %p348
        %p578 = pneg %p345
        %p579 = pneg %p369
        %p580 = pneg %p366
        %p581 = pneg %p390
        %p582 = pneg %p387
        %p583 = pneg %p411
        %p584 = pneg %p408
        %p585 = pneg %p432
        %p586 = pneg %p429
        %p587 = pneg %p458
        %p588 = pneg %p455
        %s589 = sand.u32 %s445, 1
        %s590 = scalar_lea.sflag [#allocation3], %s589
        %s591 = sand.u32 %s445, 1
        %s592 = smul.addr %s591, 8
        %s593 = scalar_lea.vmem [#allocation2], %s592
        %p594 = scmp.lt.s32.totalorder %s33, 1
        %s595 = scalar_select %p594, %s33, 1
        %s596 = smul.addr %s595, 8
        %s597 = scalar_lea.vmem %s0, %s596
        %v598 = vld [vmem:[%s597] sm:$0xff]
        %v599 = vld [vmem:[%s1] sm:$0xff]
        %v600 = vld [vmem:[%s2] sm:$0xff]
        %v601 = vld [vmem:[%s2 + $0x8] sm:$0xff]
        %v602 = vld [vmem:[%s2 + $0x10] sm:$0xff]
        %v603 = vld [vmem:[%s2 + $0x18] sm:$0xff]
        %v604 = vld [vmem:[%s5] sm:$0x1]
        %v606 = vlaneseq
        %v607 = vshrl.u32 %v606, 7
        %v608 = vsub.s32 0, %v607
        %v609 = vrot.slane %v604, %v608
        %vm611 = vcmask 261120
        %v613 = vsel %vm611, %v598, 0
        %615 = vmatprep.subr.mxu0 0.0
        %616 = vmatpush1.msra.mxu0 %v600
        %617 = vmatprep.subr.mxu0 0.0
        %618 = vmatpush1.msra.mxu0 %v601
        %619 = vmatprep.subr.mxu0 0.0
        %620 = vmatpush1.msra.mxu0 %v602
        %621 = vmatprep.subr.mxu0 0.0
        %622 = vmatpush1.msra.mxu0 %v603
        %623 = vmatprep.subr.mxu0 0.0
        %624 = vmatpush1.msra.mxu0 0.0
        %625 = vmatprep.subr.mxu0 0.0
        %626 = vmatpush1.msra.mxu0 0.0
        %627 = vmatprep.subr.mxu0 0.0
        %628 = vmatpush1.msra.mxu0 0.0
        %629 = vmatprep.subr.mxu0 0.0
        %630 = vmatpush1.msra.mxu0 0.0
        %631 = vmatprep.subr.mxu0 0.0
        %632 = vmatpush1.msra.mxu0 0.0
        %633 = vmatprep.subr.mxu0 0.0
        %634 = vmatpush1.msra.mxu0 0.0
        %635 = vmatprep.subr.mxu0 0.0
        %636 = vmatpush1.msra.mxu0 0.0
        %637 = vmatprep.subr.mxu0 0.0
        %638 = vmatpush1.msra.mxu0 0.0
        %639 = vmatprep.subr.mxu0 0.0
        %640 = vmatpush1.msra.mxu0 0.0
        %641 = vmatprep.subr.mxu0 0.0
        %642 = vmatpush1.msra.mxu0 0.0
        %643 = vmatprep.subr.mxu0 0.0
        %644 = vmatpush1.msra.mxu0 0.0
        %645 = vmatprep.subr.mxu0 0.0
        %646 = vmatpush1.msra.mxu0 0.0
        %647 = vmatprep.subr.mxu0 0.0
        %648 = vmatpush1.msra.mxu0 0.0
        %649 = vmatprep.subr.mxu0 0.0
        %650 = vmatpush1.msra.mxu0 0.0
        %651 = vmatprep.subr.mxu0 0.0
        %652 = vmatpush1.msra.mxu0 0.0
        %653 = vmatprep.subr.mxu0 0.0
        %654 = vmatpush1.msra.mxu0 0.0
        %655 = vmatprep.subr.mxu0 0.0
        %656 = vmatpush1.msra.mxu0 0.0
        %657 = vmatprep.subr.mxu0 0.0
        %658 = vmatpush1.msra.mxu0 0.0
        %659 = vmatprep.subr.mxu0 0.0
        %660 = vmatpush1.msra.mxu0 0.0
        %661 = vmatprep.subr.mxu0 0.0
        %662 = vmatpush1.msra.mxu0 0.0
        %663 = vmatprep.subr.mxu0 0.0
        %664 = vmatpush1.msra.mxu0 0.0
        %665 = vmatprep.subr.mxu0 0.0
        %666 = vmatpush1.msra.mxu0 0.0
        %667 = vmatprep.subr.mxu0 0.0
        %668 = vmatpush1.msra.mxu0 0.0
        %669 = vmatprep.subr.mxu0 0.0
        %670 = vmatpush1.msra.mxu0 0.0
        %671 = vmatprep.subr.mxu0 0.0
        %672 = vmatpush1.msra.mxu0 0.0
        %673 = vmatprep.subr.mxu0 0.0
        %674 = vmatpush1.msra.mxu0 0.0
        %675 = vmatprep.subr.mxu0 0.0
        %676 = vmatpush1.msra.mxu0 0.0
        %677 = vmatprep.subr.mxu0 0.0
        %678 = vmatpush1.msra.mxu0 0.0
        %679 = vmatprep.mubr.f32.mxu0 0.0
        %680 = vmatmul.mubr.f32.gmra.mrb[0].mxu0 %v613
        %v681 = vpop.f32.mrb[0].mxu0
        %v682 = vadd.f32 %v609, %v681
        %v683 = vpop.f32.mrb[0].mxu0
        %684 = vdwg.mxu0
        %v685 = vld [vmem:[%s3] sm:$0xff]
        %v686 = vld [vmem:[%s3 + $0x8] sm:$0xff]
        %v687 = vld [vmem:[%s3 + $0x10] sm:$0xff]
        %v688 = vld [vmem:[%s3 + $0x18] sm:$0xff]
        %v689 = vld [vmem:[%s6] sm:$0x1]
        %v691 = vlaneseq
        %v692 = vshrl.u32 %v691, 7
        %v693 = vsub.s32 0, %v692
        %v694 = vrot.slane %v689, %v693
        %696 = vmatprep.subr.mxu0 0.0
        %697 = vmatpush1.msra.mxu0 %v685
        %698 = vmatprep.subr.mxu0 0.0
        %699 = vmatpush1.msra.mxu0 %v686
        %700 = vmatprep.subr.mxu0 0.0
        %701 = vmatpush1.msra.mxu0 %v687
        %702 = vmatprep.subr.mxu0 0.0
        %703 = vmatpush1.msra.mxu0 %v688
        %704 = vmatprep.subr.mxu0 0.0
        %705 = vmatpush1.msra.mxu0 0.0
        %706 = vmatprep.subr.mxu0 0.0
        %707 = vmatpush1.msra.mxu0 0.0
        %708 = vmatprep.subr.mxu0 0.0
        %709 = vmatpush1.msra.mxu0 0.0
        %710 = vmatprep.subr.mxu0 0.0
        %711 = vmatpush1.msra.mxu0 0.0
        %712 = vmatprep.subr.mxu0 0.0
        %713 = vmatpush1.msra.mxu0 0.0
        %714 = vmatprep.subr.mxu0 0.0
        %715 = vmatpush1.msra.mxu0 0.0
        %716 = vmatprep.subr.mxu0 0.0
        %717 = vmatpush1.msra.mxu0 0.0
        %718 = vmatprep.subr.mxu0 0.0
        %719 = vmatpush1.msra.mxu0 0.0
        %720 = vmatprep.subr.mxu0 0.0
        %721 = vmatpush1.msra.mxu0 0.0
        %722 = vmatprep.subr.mxu0 0.0
        %723 = vmatpush1.msra.mxu0 0.0
        %724 = vmatprep.subr.mxu0 0.0
        %725 = vmatpush1.msra.mxu0 0.0
        %726 = vmatprep.subr.mxu0 0.0
        %727 = vmatpush1.msra.mxu0 0.0
        %728 = vmatprep.subr.mxu0 0.0
        %729 = vmatpush1.msra.mxu0 0.0
        %730 = vmatprep.subr.mxu0 0.0
        %731 = vmatpush1.msra.mxu0 0.0
        %732 = vmatprep.subr.mxu0 0.0
        %733 = vmatpush1.msra.mxu0 0.0
        %734 = vmatprep.subr.mxu0 0.0
        %735 = vmatpush1.msra.mxu0 0.0
        %736 = vmatprep.subr.mxu0 0.0
        %737 = vmatpush1.msra.mxu0 0.0
        %738 = vmatprep.subr.mxu0 0.0
        %739 = vmatpush1.msra.mxu0 0.0
        %740 = vmatprep.subr.mxu0 0.0
        %741 = vmatpush1.msra.mxu0 0.0
        %742 = vmatprep.subr.mxu0 0.0
        %743 = vmatpush1.msra.mxu0 0.0
        %744 = vmatprep.subr.mxu0 0.0
        %745 = vmatpush1.msra.mxu0 0.0
        %746 = vmatprep.subr.mxu0 0.0
        %747 = vmatpush1.msra.mxu0 0.0
        %748 = vmatprep.subr.mxu0 0.0
        %749 = vmatpush1.msra.mxu0 0.0
        %750 = vmatprep.subr.mxu0 0.0
        %751 = vmatpush1.msra.mxu0 0.0
        %752 = vmatprep.subr.mxu0 0.0
        %753 = vmatpush1.msra.mxu0 0.0
        %754 = vmatprep.subr.mxu0 0.0
        %755 = vmatpush1.msra.mxu0 0.0
        %756 = vmatprep.subr.mxu0 0.0
        %757 = vmatpush1.msra.mxu0 0.0
        %758 = vmatprep.subr.mxu0 0.0
        %759 = vmatpush1.msra.mxu0 0.0
        %760 = vmatprep.mubr.f32.mxu0 0.0
        %761 = vmatmul.mubr.f32.gmra.mrb[0].mxu0 %v613
        %v762 = vpop.f32.mrb[0].mxu0
        %v763 = vadd.f32 %v694, %v762
        %v764 = vpop.f32.mrb[0].mxu0
        %765 = vdwg.mxu0
        %v766 = vld [vmem:[%s4] sm:$0xff]
        %v767 = vld [vmem:[%s4 + $0x8] sm:$0xff]
        %v768 = vld [vmem:[%s4 + $0x10] sm:$0xff]
        %v769 = vld [vmem:[%s4 + $0x18] sm:$0xff]
        %v770 = vld [vmem:[%s7] sm:$0x1]
        %v772 = vlaneseq
        %v773 = vshrl.u32 %v772, 7
        %v774 = vsub.s32 0, %v773
        %v775 = vrot.slane %v770, %v774
        %777 = vmatprep.subr.mxu0 0.0
        %778 = vmatpush1.msra.mxu0 %v766
        %779 = vmatprep.subr.mxu0 0.0
        %780 = vmatpush1.msra.mxu0 %v767
        %781 = vmatprep.subr.mxu0 0.0
        %782 = vmatpush1.msra.mxu0 %v768
        %783 = vmatprep.subr.mxu0 0.0
        %784 = vmatpush1.msra.mxu0 %v769
        %785 = vmatprep.subr.mxu0 0.0
        %786 = vmatpush1.msra.mxu0 0.0
        %787 = vmatprep.subr.mxu0 0.0
        %788 = vmatpush1.msra.mxu0 0.0
        %789 = vmatprep.subr.mxu0 0.0
        %790 = vmatpush1.msra.mxu0 0.0
        %791 = vmatprep.subr.mxu0 0.0
        %792 = vmatpush1.msra.mxu0 0.0
        %793 = vmatprep.subr.mxu0 0.0
        %794 = vmatpush1.msra.mxu0 0.0
        %795 = vmatprep.subr.mxu0 0.0
        %796 = vmatpush1.msra.mxu0 0.0
        %797 = vmatprep.subr.mxu0 0.0
        %798 = vmatpush1.msra.mxu0 0.0
        %799 = vmatprep.subr.mxu0 0.0
        %800 = vmatpush1.msra.mxu0 0.0
        %801 = vmatprep.subr.mxu0 0.0
        %802 = vmatpush1.msra.mxu0 0.0
        %803 = vmatprep.subr.mxu0 0.0
        %804 = vmatpush1.msra.mxu0 0.0
        %805 = vmatprep.subr.mxu0 0.0
        %806 = vmatpush1.msra.mxu0 0.0
        %807 = vmatprep.subr.mxu0 0.0
        %808 = vmatpush1.msra.mxu0 0.0
        %809 = vmatprep.subr.mxu0 0.0
        %810 = vmatpush1.msra.mxu0 0.0
        %811 = vmatprep.subr.mxu0 0.0
        %812 = vmatpush1.msra.mxu0 0.0
        %813 = vmatprep.subr.mxu0 0.0
        %814 = vmatpush1.msra.mxu0 0.0
        %815 = vmatprep.subr.mxu0 0.0
        %816 = vmatpush1.msra.mxu0 0.0
        %817 = vmatprep.subr.mxu0 0.0
        %818 = vmatpush1.msra.mxu0 0.0
        %819 = vmatprep.subr.mxu0 0.0
        %820 = vmatpush1.msra.mxu0 0.0
        %821 = vmatprep.subr.mxu0 0.0
        %822 = vmatpush1.msra.mxu0 0.0
        %823 = vmatprep.subr.mxu0 0.0
        %824 = vmatpush1.msra.mxu0 0.0
        %825 = vmatprep.subr.mxu0 0.0
        %826 = vmatpush1.msra.mxu0 0.0
        %827 = vmatprep.subr.mxu0 0.0
        %828 = vmatpush1.msra.mxu0 0.0
        %829 = vmatprep.subr.mxu0 0.0
        %830 = vmatpush1.msra.mxu0 0.0
        %831 = vmatprep.subr.mxu0 0.0
        %832 = vmatpush1.msra.mxu0 0.0
        %833 = vmatprep.subr.mxu0 0.0
        %834 = vmatpush1.msra.mxu0 0.0
        %835 = vmatprep.subr.mxu0 0.0
        %836 = vmatpush1.msra.mxu0 0.0
        %837 = vmatprep.subr.mxu0 0.0
        %838 = vmatpush1.msra.mxu0 0.0
        %839 = vmatprep.subr.mxu0 0.0
        %840 = vmatpush1.msra.mxu0 0.0
        %841 = vmatprep.mubr.f32.mxu0 0.0
        %842 = vmatmul.mubr.f32.gmra.mrb[0].mxu0 %v613
        %v843 = vpop.f32.mrb[0].mxu0
        %v844 = vadd.f32 %v775, %v843
        %v845 = vpop.f32.mrb[0].mxu0
        %846 = vdwg.mxu0
        %vm847 = vcmask 64512
        %v849 = vsel %vm847, %v682, 0
        %v852 = vsel %vm847, %v763, 0
        %854 = vmatprep.subr.mxu0 0.0
        %855 = vmatpush1.xpose.msra.mxu0 %v852
        %856 = vmatprep.subr.mxu0 0.0
        %857 = vmatpush1.xpose.msra.mxu0 0.0
        %858 = vmatprep.subr.mxu0 0.0
        %859 = vmatpush1.xpose.msra.mxu0 0.0
        %860 = vmatprep.subr.mxu0 0.0
        %861 = vmatpush1.xpose.msra.mxu0 0.0
        %862 = vmatprep.subr.mxu0 0.0
        %863 = vmatpush1.xpose.msra.mxu0 0.0
        %864 = vmatprep.subr.mxu0 0.0
        %865 = vmatpush1.xpose.msra.mxu0 0.0
        %866 = vmatprep.subr.mxu0 0.0
        %867 = vmatpush1.xpose.msra.mxu0 0.0
        %868 = vmatprep.subr.mxu0 0.0
        %869 = vmatpush1.xpose.msra.mxu0 0.0
        %870 = vmatprep.subr.mxu0 0.0
        %871 = vmatpush1.xpose.msra.mxu0 0.0
        %872 = vmatprep.subr.mxu0 0.0
        %873 = vmatpush1.xpose.msra.mxu0 0.0
        %874 = vmatprep.subr.mxu0 0.0
        %875 = vmatpush1.xpose.msra.mxu0 0.0
        %876 = vmatprep.subr.mxu0 0.0
        %877 = vmatpush1.xpose.msra.mxu0 0.0
        %878 = vmatprep.subr.mxu0 0.0
        %879 = vmatpush1.xpose.msra.mxu0 0.0
        %880 = vmatprep.subr.mxu0 0.0
        %881 = vmatpush1.xpose.msra.mxu0 0.0
        %882 = vmatprep.subr.mxu0 0.0
        %883 = vmatpush1.xpose.msra.mxu0 0.0
        %884 = vmatprep.subr.mxu0 0.0
        %885 = vmatpush1.xpose.msra.mxu0 0.0
        %886 = vmatprep.subr.mxu0 0.0
        %887 = vmatpush1.xpose.msra.mxu0 0.0
        %888 = vmatprep.subr.mxu0 0.0
        %889 = vmatpush1.xpose.msra.mxu0 0.0
        %890 = vmatprep.subr.mxu0 0.0
        %891 = vmatpush1.xpose.msra.mxu0 0.0
        %892 = vmatprep.subr.mxu0 0.0
        %893 = vmatpush1.xpose.msra.mxu0 0.0
        %894 = vmatprep.subr.mxu0 0.0
        %895 = vmatpush1.xpose.msra.mxu0 0.0
        %896 = vmatprep.subr.mxu0 0.0
        %897 = vmatpush1.xpose.msra.mxu0 0.0
        %898 = vmatprep.subr.mxu0 0.0
        %899 = vmatpush1.xpose.msra.mxu0 0.0
        %900 = vmatprep.subr.mxu0 0.0
        %901 = vmatpush1.xpose.msra.mxu0 0.0
        %902 = vmatprep.subr.mxu0 0.0
        %903 = vmatpush1.xpose.msra.mxu0 0.0
        %904 = vmatprep.subr.mxu0 0.0
        %905 = vmatpush1.xpose.msra.mxu0 0.0
        %906 = vmatprep.subr.mxu0 0.0
        %907 = vmatpush1.xpose.msra.mxu0 0.0
        %908 = vmatprep.subr.mxu0 0.0
        %909 = vmatpush1.xpose.msra.mxu0 0.0
        %910 = vmatprep.subr.mxu0 0.0
        %911 = vmatpush1.xpose.msra.mxu0 0.0
        %912 = vmatprep.subr.mxu0 0.0
        %913 = vmatpush1.xpose.msra.mxu0 0.0
        %914 = vmatprep.subr.mxu0 0.0
        %915 = vmatpush1.xpose.msra.mxu0 0.0
        %916 = vmatprep.subr.mxu0 0.0
        %917 = vmatpush1.xpose.msra.mxu0 0.0
        %918 = vmatprep.mubr.f32.mxu0 0.0
        %919 = vmatmul.mubr.f32.gmra.mrb[0].mxu0 %v849
        %v920 = vpop.f32.mrb[0].mxu0
        %v921 = vadd.f32 0.0, %v920
        %v922 = vpop.f32.mrb[0].mxu0
        %923 = vdwg.mxu0
        %v924 = vmul.f32 %v921, 0.35355338
        %v925 = vadd.f32 %v924, %v599
        %v926 = vsel %vm847, %v925, -inf
        %927 = vmax.xlane.f32.xlu0 %v926
        %v928 = vpop.xlane.xlu0 %927
        %v929 = vsub.f32 %v925, %v928
        %v930 = vmul.f32 %v929, 1.442695
        %v931 = vpow.pop %v930
        %v932 = vsel %vm847, %v931, 0.0
        %933 = vadd.xlane.f32.xlu0 %v932
        %v934 = vpop.xlane.xlu0 %933
        %v935 = vrcp.pop %v934
        %v936 = vmul.f32 %v931, %v935
        %v938 = vsel %vm847, %v936, 0
        %940 = vmatprep.subr.mxu0 0.0
        %941 = vmatpush1.msra.mxu0 %v844
        %942 = vmatprep.subr.mxu0 0.0
        %943 = vmatpush1.msra.mxu0 0.0
        %944 = vmatprep.subr.mxu0 0.0
        %945 = vmatpush1.msra.mxu0 0.0
        %946 = vmatprep.subr.mxu0 0.0
        %947 = vmatpush1.msra.mxu0 0.0
        %948 = vmatprep.subr.mxu0 0.0
        %949 = vmatpush1.msra.mxu0 0.0
        %950 = vmatprep.subr.mxu0 0.0
        %951 = vmatpush1.msra.mxu0 0.0
        %952 = vmatprep.subr.mxu0 0.0
        %953 = vmatpush1.msra.mxu0 0.0
        %954 = vmatprep.subr.mxu0 0.0
        %955 = vmatpush1.msra.mxu0 0.0
        %956 = vmatprep.subr.mxu0 0.0
        %957 = vmatpush1.msra.mxu0 0.0
        %958 = vmatprep.subr.mxu0 0.0
        %959 = vmatpush1.msra.mxu0 0.0
        %960 = vmatprep.subr.mxu0 0.0
        %961 = vmatpush1.msra.mxu0 0.0
        %962 = vmatprep.subr.mxu0 0.0
        %963 = vmatpush1.msra.mxu0 0.0
        %964 = vmatprep.subr.mxu0 0.0
        %965 = vmatpush1.msra.mxu0 0.0
        %966 = vmatprep.subr.mxu0 0.0
        %967 = vmatpush1.msra.mxu0 0.0
        %968 = vmatprep.subr.mxu0 0.0
        %969 = vmatpush1.msra.mxu0 0.0
        %970 = vmatprep.subr.mxu0 0.0
        %971 = vmatpush1.msra.mxu0 0.0
        %972 = vmatprep.subr.mxu0 0.0
        %973 = vmatpush1.msra.mxu0 0.0
        %974 = vmatprep.subr.mxu0 0.0
        %975 = vmatpush1.msra.mxu0 0.0
        %976 = vmatprep.subr.mxu0 0.0
        %977 = vmatpush1.msra.mxu0 0.0
        %978 = vmatprep.subr.mxu0 0.0
        %979 = vmatpush1.msra.mxu0 0.0
        %980 = vmatprep.subr.mxu0 0.0
        %981 = vmatpush1.msra.mxu0 0.0
        %982 = vmatprep.subr.mxu0 0.0
        %983 = vmatpush1.msra.mxu0 0.0
        %984 = vmatprep.subr.mxu0 0.0
        %985 = vmatpush1.msra.mxu0 0.0
        %986 = vmatprep.subr.mxu0 0.0
        %987 = vmatpush1.msra.mxu0 0.0
        %988 = vmatprep.subr.mxu0 0.0
        %989 = vmatpush1.msra.mxu0 0.0
        %990 = vmatprep.subr.mxu0 0.0
        %991 = vmatpush1.msra.mxu0 0.0
        %992 = vmatprep.subr.mxu0 0.0
        %993 = vmatpush1.msra.mxu0 0.0
        %994 = vmatprep.subr.mxu0 0.0
        %995 = vmatpush1.msra.mxu0 0.0
        %996 = vmatprep.subr.mxu0 0.0
        %997 = vmatpush1.msra.mxu0 0.0
        %998 = vmatprep.subr.mxu0 0.0
        %999 = vmatpush1.msra.mxu0 0.0
        %1000 = vmatprep.subr.mxu0 0.0
        %1001 = vmatpush1.msra.mxu0 0.0
        %1002 = vmatprep.subr.mxu0 0.0
        %1003 = vmatpush1.msra.mxu0 0.0
        %1004 = vmatprep.mubr.f32.mxu0 0.0
        %1005 = vmatmul.mubr.f32.gmra.mrb[0].mxu0 %v938
        %v1006 = vpop.f32.mrb[0].mxu0
        %v1007 = vadd.f32 0.0, %v1006
        %v1008 = vpop.f32.mrb[0].mxu0
        %1009 = vdwg.mxu0
        %v1010 = vld [vmem:[%s8] sm:$0xff]
        %s1011 = scalar_lea.vmem %s2, 32
        %v1012 = vld [vmem:[%s1011] sm:$0xff]
        %v1013 = vld [vmem:[%s1011 + $0x8] sm:$0xff]
        %v1014 = vld [vmem:[%s1011 + $0x10] sm:$0xff]
        %v1015 = vld [vmem:[%s1011 + $0x18] sm:$0xff]
        %s1016 = scalar_lea.vmem %s5, 1
        %v1017 = vld [vmem:[%s1016] sm:$0x1]
        %v1019 = vlaneseq
        %v1020 = vshrl.u32 %v1019, 7
        %v1021 = vsub.s32 0, %v1020
        %v1022 = vrot.slane %v1017, %v1021
        %1024 = vmatprep.subr.mxu0 0.0
        %1025 = vmatpush1.msra.mxu0 %v1012
        %1026 = vmatprep.subr.mxu0 0.0
        %1027 = vmatpush1.msra.mxu0 %v1013
        %1028 = vmatprep.subr.mxu0 0.0
        %1029 = vmatpush1.msra.mxu0 %v1014
        %1030 = vmatprep.subr.mxu0 0.0
        %1031 = vmatpush1.msra.mxu0 %v1015
        %1032 = vmatprep.subr.mxu0 0.0
        %1033 = vmatpush1.msra.mxu0 0.0
        %1034 = vmatprep.subr.mxu0 0.0
        %1035 = vmatpush1.msra.mxu0 0.0
        %1036 = vmatprep.subr.mxu0 0.0
        %1037 = vmatpush1.msra.mxu0 0.0
        %1038 = vmatprep.subr.mxu0 0.0
        %1039 = vmatpush1.msra.mxu0 0.0
        %1040 = vmatprep.subr.mxu0 0.0
        %1041 = vmatpush1.msra.mxu0 0.0
        %1042 = vmatprep.subr.mxu0 0.0
        %1043 = vmatpush1.msra.mxu0 0.0
        %1044 = vmatprep.subr.mxu0 0.0
        %1045 = vmatpush1.msra.mxu0 0.0
        %1046 = vmatprep.subr.mxu0 0.0
        %1047 = vmatpush1.msra.mxu0 0.0
        %1048 = vmatprep.subr.mxu0 0.0
        %1049 = vmatpush1.msra.mxu0 0.0
        %1050 = vmatprep.subr.mxu0 0.0
        %1051 = vmatpush1.msra.mxu0 0.0
        %1052 = vmatprep.subr.mxu0 0.0
        %1053 = vmatpush1.msra.mxu0 0.0
        %1054 = vmatprep.subr.mxu0 0.0
        %1055 = vmatpush1.msra.mxu0 0.0
        %1056 = vmatprep.subr.mxu0 0.0
        %1057 = vmatpush1.msra.mxu0 0.0
        %1058 = vmatprep.subr.mxu0 0.0
        %1059 = vmatpush1.msra.mxu0 0.0
        %1060 = vmatprep.subr.mxu0 0.0
        %1061 = vmatpush1.msra.mxu0 0.0
        %1062 = vmatprep.subr.mxu0 0.0
        %1063 = vmatpush1.msra.mxu0 0.0
        %1064 = vmatprep.subr.mxu0 0.0
        %1065 = vmatpush1.msra.mxu0 0.0
        %1066 = vmatprep.subr.mxu0 0.0
        %1067 = vmatpush1.msra.mxu0 0.0
        %1068 = vmatprep.subr.mxu0 0.0
        %1069 = vmatpush1.msra.mxu0 0.0
        %1070 = vmatprep.subr.mxu0 0.0
        %1071 = vmatpush1.msra.mxu0 0.0
        %1072 = vmatprep.subr.mxu0 0.0
        %1073 = vmatpush1.msra.mxu0 0.0
        %1074 = vmatprep.subr.mxu0 0.0
        %1075 = vmatpush1.msra.mxu0 0.0
        %1076 = vmatprep.subr.mxu0 0.0
        %1077 = vmatpush1.msra.mxu0 0.0
        %1078 = vmatprep.subr.mxu0 0.0
        %1079 = vmatpush1.msra.mxu0 0.0
        %1080 = vmatprep.subr.mxu0 0.0
        %1081 = vmatpush1.msra.mxu0 0.0
        %1082 = vmatprep.subr.mxu0 0.0
        %1083 = vmatpush1.msra.mxu0 0.0
        %1084 = vmatprep.subr.mxu0 0.0
        %1085 = vmatpush1.msra.mxu0 0.0
        %1086 = vmatprep.subr.mxu0 0.0
        %1087 = vmatpush1.msra.mxu0 0.0
        %1088 = vmatprep.mubr.f32.mxu0 0.0
        %1089 = vmatmul.mubr.f32.gmra.mrb[0].mxu0 %v613
        %v1090 = vpop.f32.mrb[0].mxu0
        %v1091 = vadd.f32 %v1022, %v1090
        %v1092 = vpop.f32.mrb[0].mxu0
        %1093 = vdwg.mxu0
        %s1094 = scalar_lea.vmem %s3, 32
        %v1095 = vld [vmem:[%s1094] sm:$0xff]
        %v1096 = vld [vmem:[%s1094 + $0x8] sm:$0xff]
        %v1097 = vld [vmem:[%s1094 + $0x10] sm:$0xff]
        %v1098 = vld [vmem:[%s1094 + $0x18] sm:$0xff]
        %s1099 = scalar_lea.vmem %s6, 1
        %v1100 = vld [vmem:[%s1099] sm:$0x1]
        %v1102 = vlaneseq
        %v1103 = vshrl.u32 %v1102, 7
        %v1104 = vsub.s32 0, %v1103
        %v1105 = vrot.slane %v1100, %v1104
        %1107 = vmatprep.subr.mxu0 0.0
        %1108 = vmatpush1.msra.mxu0 %v1095
        %1109 = vmatprep.subr.mxu0 0.0
        %1110 = vmatpush1.msra.mxu0 %v1096
        %1111 = vmatprep.subr.mxu0 0.0
        %1112 = vmatpush1.msra.mxu0 %v1097
        %1113 = vmatprep.subr.mxu0 0.0
        %1114 = vmatpush1.msra.mxu0 %v1098
        %1115 = vmatprep.subr.mxu0 0.0
        %1116 = vmatpush1.msra.mxu0 0.0
        %1117 = vmatprep.subr.mxu0 0.0
        %1118 = vmatpush1.msra.mxu0 0.0
        %1119 = vmatprep.subr.mxu0 0.0
        %1120 = vmatpush1.msra.mxu0 0.0
        %1121 = vmatprep.subr.mxu0 0.0
        %1122 = vmatpush1.msra.mxu0 0.0
        %1123 = vmatprep.subr.mxu0 0.0
        %1124 = vmatpush1.msra.mxu0 0.0
        %1125 = vmatprep.subr.mxu0 0.0
        %1126 = vmatpush1.msra.mxu0 0.0
        %1127 = vmatprep.subr.mxu0 0.0
        %1128 = vmatpush1.msra.mxu0 0.0
        %1129 = vmatprep.subr.mxu0 0.0
        %1130 = vmatpush1.msra.mxu0 0.0
        %1131 = vmatprep.subr.mxu0 0.0
        %1132 = vmatpush1.msra.mxu0 0.0
        %1133 = vmatprep.subr.mxu0 0.0
        %1134 = vmatpush1.msra.mxu0 0.0
        %1135 = vmatprep.subr.mxu0 0.0
        %1136 = vmatpush1.msra.mxu0 0.0
        %1137 = vmatprep.subr.mxu0 0.0
        %1138 = vmatpush1.msra.mxu0 0.0
        %1139 = vmatprep.subr.mxu0 0.0
        %1140 = vmatpush1.msra.mxu0 0.0
        %1141 = vmatprep.subr.mxu0 0.0
        %1142 = vmatpush1.msra.mxu0 0.0
        %1143 = vmatprep.subr.mxu0 0.0
        %1144 = vmatpush1.msra.mxu0 0.0
        %1145 = vmatprep.subr.mxu0 0.0
        %1146 = vmatpush1.msra.mxu0 0.0
        %1147 = vmatprep.subr.mxu0 0.0
        %1148 = vmatpush1.msra.mxu0 0.0
        %1149 = vmatprep.subr.mxu0 0.0
        %1150 = vmatpush1.msra.mxu0 0.0
        %1151 = vmatprep.subr.mxu0 0.0
        %1152 = vmatpush1.msra.mxu0 0.0
        %1153 = vmatprep.subr.mxu0 0.0
        %1154 = vmatpush1.msra.mxu0 0.0
        %1155 = vmatprep.subr.mxu0 0.0
        %1156 = vmatpush1.msra.mxu0 0.0
        %1157 = vmatprep.subr.mxu0 0.0
        %1158 = vmatpush1.msra.mxu0 0.0
        %1159 = vmatprep.subr.mxu0 0.0
        %1160 = vmatpush1.msra.mxu0 0.0
        %1161 = vmatprep.subr.mxu0 0.0
        %1162 = vmatpush1.msra.mxu0 0.0
        %1163 = vmatprep.subr.mxu0 0.0
        %1164 = vmatpush1.msra.mxu0 0.0
        %1165 = vmatprep.subr.mxu0 0.0
        %1166 = vmatpush1.msra.mxu0 0.0
        %1167 = vmatprep.subr.mxu0 0.0
        %1168 = vmatpush1.msra.mxu0 0.0
        %1169 = vmatprep.subr.mxu0 0.0
        %1170 = vmatpush1.msra.mxu0 0.0
        %1171 = vmatprep.mubr.f32.mxu0 0.0
        %1172 = vmatmul.mubr.f32.gmra.mrb[0].mxu0 %v613
        %v1173 = vpop.f32.mrb[0].mxu0
        %v1174 = vadd.f32 %v1105, %v1173
        %v1175 = vpop.f32.mrb[0].mxu0
        %1176 = vdwg.mxu0
        %s1177 = scalar_lea.vmem %s4, 32
        %v1178 = vld [vmem:[%s1177] sm:$0xff]
        %v1179 = vld [vmem:[%s1177 + $0x8] sm:$0xff]
        %v1180 = vld [vmem:[%s1177 + $0x10] sm:$0xff]
        %v1181 = vld [vmem:[%s1177 + $0x18] sm:$0xff]
        %s1182 = scalar_lea.vmem %s7, 1
        %v1183 = vld [vmem:[%s1182] sm:$0x1]
        %v1185 = vlaneseq
        %v1186 = vshrl.u32 %v1185, 7
        %v1187 = vsub.s32 0, %v1186
        %v1188 = vrot.slane %v1183, %v1187
        %1190 = vmatprep.subr.mxu0 0.0
        %1191 = vmatpush1.msra.mxu0 %v1178
        %1192 = vmatprep.subr.mxu0 0.0
        %1193 = vmatpush1.msra.mxu0 %v1179
        %1194 = vmatprep.subr.mxu0 0.0
        %1195 = vmatpush1.msra.mxu0 %v1180
        %1196 = vmatprep.subr.mxu0 0.0
        %1197 = vmatpush1.msra.mxu0 %v1181
        %1198 = vmatprep.subr.mxu0 0.0
        %1199 = vmatpush1.msra.mxu0 0.0
        %1200 = vmatprep.subr.mxu0 0.0
        %1201 = vmatpush1.msra.mxu0 0.0
        %1202 = vmatprep.subr.mxu0 0.0
        %1203 = vmatpush1.msra.mxu0 0.0
        %1204 = vmatprep.subr.mxu0 0.0
        %1205 = vmatpush1.msra.mxu0 0.0
        %1206 = vmatprep.subr.mxu0 0.0
        %1207 = vmatpush1.msra.mxu0 0.0
        %1208 = vmatprep.subr.mxu0 0.0
        %1209 = vmatpush1.msra.mxu0 0.0
        %1210 = vmatprep.subr.mxu0 0.0
        %1211 = vmatpush1.msra.mxu0 0.0
        %1212 = vmatprep.subr.mxu0 0.0
        %1213 = vmatpush1.msra.mxu0 0.0
        %1214 = vmatprep.subr.mxu0 0.0
        %1215 = vmatpush1.msra.mxu0 0.0
        %1216 = vmatprep.subr.mxu0 0.0
        %1217 = vmatpush1.msra.mxu0 0.0
        %1218 = vmatprep.subr.mxu0 0.0
        %1219 = vmatpush1.msra.mxu0 0.0
        %1220 = vmatprep.subr.mxu0 0.0
        %1221 = vmatpush1.msra.mxu0 0.0
        %1222 = vmatprep.subr.mxu0 0.0
        %1223 = vmatpush1.msra.mxu0 0.0
        %1224 = vmatprep.subr.mxu0 0.0
        %1225 = vmatpush1.msra.mxu0 0.0
        %1226 = vmatprep.subr.mxu0 0.0
        %1227 = vmatpush1.msra.mxu0 0.0
        %1228 = vmatprep.subr.mxu0 0.0
        %1229 = vmatpush1.msra.mxu0 0.0
        %1230 = vmatprep.subr.mxu0 0.0
        %1231 = vmatpush1.msra.mxu0 0.0
        %1232 = vmatprep.subr.mxu0 0.0
        %1233 = vmatpush1.msra.mxu0 0.0
        %1234 = vmatprep.subr.mxu0 0.0
        %1235 = vmatpush1.msra.mxu0 0.0
        %1236 = vmatprep.subr.mxu0 0.0
        %1237 = vmatpush1.msra.mxu0 0.0
        %1238 = vmatprep.subr.mxu0 0.0
        %1239 = vmatpush1.msra.mxu0 0.0
        %1240 = vmatprep.subr.mxu0 0.0
        %1241 = vmatpush1.msra.mxu0 0.0
        %1242 = vmatprep.subr.mxu0 0.0
        %1243 = vmatpush1.msra.mxu0 0.0
        %1244 = vmatprep.subr.mxu0 0.0
        %1245 = vmatpush1.msra.mxu0 0.0
        %1246 = vmatprep.subr.mxu0 0.0
        %1247 = vmatpush1.msra.mxu0 0.0
        %1248 = vmatprep.subr.mxu0 0.0
        %1249 = vmatpush1.msra.mxu0 0.0
        %1250 = vmatprep.subr.mxu0 0.0
        %1251 = vmatpush1.msra.mxu0 0.0
        %1252 = vmatprep.subr.mxu0 0.0
        %1253 = vmatpush1.msra.mxu0 0.0
        %1254 = vmatprep.mubr.f32.mxu0 0.0
        %1255 = vmatmul.mubr.f32.gmra.mrb[0].mxu0 %v613
        %v1256 = vpop.f32.mrb[0].mxu0
        %v1257 = vadd.f32 %v1188, %v1256
        %v1258 = vpop.f32.mrb[0].mxu0
        %1259 = vdwg.mxu0
        %v1261 = vsel %vm847, %v1091, 0
        %v1264 = vsel %vm847, %v1174, 0
        %1266 = vmatprep.subr.mxu0 0.0
        %1267 = vmatpush1.xpose.msra.mxu0 %v1264
        %1268 = vmatprep.subr.mxu0 0.0
        %1269 = vmatpush1.xpose.msra.mxu0 0.0
        %1270 = vmatprep.subr.mxu0 0.0
        %1271 = vmatpush1.xpose.msra.mxu0 0.0
        %1272 = vmatprep.subr.mxu0 0.0
        %1273 = vmatpush1.xpose.msra.mxu0 0.0
        %1274 = vmatprep.subr.mxu0 0.0
        %1275 = vmatpush1.xpose.msra.mxu0 0.0
        %1276 = vmatprep.subr.mxu0 0.0
        %1277 = vmatpush1.xpose.msra.mxu0 0.0
        %1278 = vmatprep.subr.mxu0 0.0
        %1279 = vmatpush1.xpose.msra.mxu0 0.0
        %1280 = vmatprep.subr.mxu0 0.0
        %1281 = vmatpush1.xpose.msra.mxu0 0.0
        %1282 = vmatprep.subr.mxu0 0.0
        %1283 = vmatpush1.xpose.msra.mxu0 0.0
        %1284 = vmatprep.subr.mxu0 0.0
        %1285 = vmatpush1.xpose.msra.mxu0 0.0
        %1286 = vmatprep.subr.mxu0 0.0
        %1287 = vmatpush1.xpose.msra.mxu0 0.0
        %1288 = vmatprep.subr.mxu0 0.0
        %1289 = vmatpush1.xpose.msra.mxu0 0.0
        %1290 = vmatprep.subr.mxu0 0.0
        %1291 = vmatpush1.xpose.msra.mxu0 0.0
        %1292 = vmatprep.subr.mxu0 0.0
        %1293 = vmatpush1.xpose.msra.mxu0 0.0
        %1294 = vmatprep.subr.mxu0 0.0
        %1295 = vmatpush1.xpose.msra.mxu0 0.0
        %1296 = vmatprep.subr.mxu0 0.0
        %1297 = vmatpush1.xpose.msra.mxu0 0.0
        %1298 = vmatprep.subr.mxu0 0.0
        %1299 = vmatpush1.xpose.msra.mxu0 0.0
        %1300 = vmatprep.subr.mxu0 0.0
        %1301 = vmatpush1.xpose.msra.mxu0 0.0
        %1302 = vmatprep.subr.mxu0 0.0
        %1303 = vmatpush1.xpose.msra.mxu0 0.0
        %1304 = vmatprep.subr.mxu0 0.0
        %1305 = vmatpush1.xpose.msra.mxu0 0.0
        %1306 = vmatprep.subr.mxu0 0.0
        %1307 = vmatpush1.xpose.msra.mxu0 0.0
        %1308 = vmatprep.subr.mxu0 0.0
        %1309 = vmatpush1.xpose.msra.mxu0 0.0
        %1310 = vmatprep.subr.mxu0 0.0
        %1311 = vmatpush1.xpose.msra.mxu0 0.0
        %1312 = vmatprep.subr.mxu0 0.0
        %1313 = vmatpush1.xpose.msra.mxu0 0.0
        %1314 = vmatprep.subr.mxu0 0.0
        %1315 = vmatpush1.xpose.msra.mxu0 0.0
        %1316 = vmatprep.subr.mxu0 0.0
        %1317 = vmatpush1.xpose.msra.mxu0 0.0
        %1318 = vmatprep.subr.mxu0 0.0
        %1319 = vmatpush1.xpose.msra.mxu0 0.0
        %1320 = vmatprep.subr.mxu0 0.0
        %1321 = vmatpush1.xpose.msra.mxu0 0.0
        %1322 = vmatprep.subr.mxu0 0.0
        %1323 = vmatpush1.xpose.msra.mxu0 0.0
        %1324 = vmatprep.subr.mxu0 0.0
        %1325 = vmatpush1.xpose.msra.mxu0 0.0
        %1326 = vmatprep.subr.mxu0 0.0
        %1327 = vmatpush1.xpose.msra.mxu0 0.0
        %1328 = vmatprep.subr.mxu0 0.0
        %1329 = vmatpush1.xpose.msra.mxu0 0.0
        %1330 = vmatprep.mubr.f32.mxu0 0.0
        %1331 = vmatmul.mubr.f32.gmra.mrb[0].mxu0 %v1261
        %v1332 = vpop.f32.mrb[0].mxu0
        %v1333 = vadd.f32 0.0, %v1332
        %v1334 = vpop.f32.mrb[0].mxu0
        %1335 = vdwg.mxu0
        %v1336 = vmul.f32 %v1333, 0.35355338
        %v1337 = vadd.f32 %v1336, %v599
        %v1338 = vsel %vm847, %v1337, -inf
        %1339 = vmax.xlane.f32.xlu0 %v1338
        %v1340 = vpop.xlane.xlu0 %1339
        %v1341 = vsub.f32 %v1337, %v1340
        %v1342 = vmul.f32 %v1341, 1.442695
        %v1343 = vpow.pop %v1342
        %v1344 = vsel %vm847, %v1343, 0.0
        %1345 = vadd.xlane.f32.xlu0 %v1344
        %v1346 = vpop.xlane.xlu0 %1345
        %v1347 = vrcp.pop %v1346
        %v1348 = vmul.f32 %v1343, %v1347
        %v1350 = vsel %vm847, %v1348, 0
        %1352 = vmatprep.subr.mxu0 0.0
        %1353 = vmatpush1.msra.mxu0 %v1257
        %1354 = vmatprep.subr.mxu0 0.0
        %1355 = vmatpush1.msra.mxu0 0.0
        %1356 = vmatprep.subr.mxu0 0.0
        %1357 = vmatpush1.msra.mxu0 0.0
        %1358 = vmatprep.subr.mxu0 0.0
        %1359 = vmatpush1.msra.mxu0 0.0
        %1360 = vmatprep.subr.mxu0 0.0
        %1361 = vmatpush1.msra.mxu0 0.0
        %1362 = vmatprep.subr.mxu0 0.0
        %1363 = vmatpush1.msra.mxu0 0.0
        %1364 = vmatprep.subr.mxu0 0.0
        %1365 = vmatpush1.msra.mxu0 0.0
        %1366 = vmatprep.subr.mxu0 0.0
        %1367 = vmatpush1.msra.mxu0 0.0
        %1368 = vmatprep.subr.mxu0 0.0
        %1369 = vmatpush1.msra.mxu0 0.0
        %1370 = vmatprep.subr.mxu0 0.0
        %1371 = vmatpush1.msra.mxu0 0.0
        %1372 = vmatprep.subr.mxu0 0.0
        %1373 = vmatpush1.msra.mxu0 0.0
        %1374 = vmatprep.subr.mxu0 0.0
        %1375 = vmatpush1.msra.mxu0 0.0
        %1376 = vmatprep.subr.mxu0 0.0
        %1377 = vmatpush1.msra.mxu0 0.0
        %1378 = vmatprep.subr.mxu0 0.0
        %1379 = vmatpush1.msra.mxu0 0.0
        %1380 = vmatprep.subr.mxu0 0.0
        %1381 = vmatpush1.msra.mxu0 0.0
        %1382 = vmatprep.subr.mxu0 0.0
        %1383 = vmatpush1.msra.mxu0 0.0
        %1384 = vmatprep.subr.mxu0 0.0
        %1385 = vmatpush1.msra.mxu0 0.0
        %1386 = vmatprep.subr.mxu0 0.0
        %1387 = vmatpush1.msra.mxu0 0.0
        %1388 = vmatprep.subr.mxu0 0.0
        %1389 = vmatpush1.msra.mxu0 0.0
        %1390 = vmatprep.subr.mxu0 0.0
        %1391 = vmatpush1.msra.mxu0 0.0
        %1392 = vmatprep.subr.mxu0 0.0
        %1393 = vmatpush1.msra.mxu0 0.0
        %1394 = vmatprep.subr.mxu0 0.0
        %1395 = vmatpush1.msra.mxu0 0.0
        %1396 = vmatprep.subr.mxu0 0.0
        %1397 = vmatpush1.msra.mxu0 0.0
        %1398 = vmatprep.subr.mxu0 0.0
        %1399 = vmatpush1.msra.mxu0 0.0
        %1400 = vmatprep.subr.mxu0 0.0
        %1401 = vmatpush1.msra.mxu0 0.0
        %1402 = vmatprep.subr.mxu0 0.0
        %1403 = vmatpush1.msra.mxu0 0.0
        %1404 = vmatprep.subr.mxu0 0.0
        %1405 = vmatpush1.msra.mxu0 0.0
        %1406 = vmatprep.subr.mxu0 0.0
        %1407 = vmatpush1.msra.mxu0 0.0
        %1408 = vmatprep.subr.mxu0 0.0
        %1409 = vmatpush1.msra.mxu0 0.0
        %1410 = vmatprep.subr.mxu0 0.0
        %1411 = vmatpush1.msra.mxu0 0.0
        %1412 = vmatprep.subr.mxu0 0.0
        %1413 = vmatpush1.msra.mxu0 0.0
        %1414 = vmatprep.subr.mxu0 0.0
        %1415 = vmatpush1.msra.mxu0 0.0
        %1416 = vmatprep.mubr.f32.mxu0 0.0
        %1417 = vmatmul.mubr.f32.gmra.mrb[0].mxu0 %v1350
        %v1418 = vpop.f32.mrb[0].mxu0
        %v1419 = vadd.f32 0.0, %v1418
        %v1420 = vpop.f32.mrb[0].mxu0
        %1421 = vdwg.mxu0
        %s1422 = scalar_lea.vmem %s8, 8
        %v1423 = vld [vmem:[%s1422] sm:$0xff]
        %v1425 = vsel %vm847, %v1419, 0
        %1427 = vmatprep.subr.mxu0 0.0
        %1428 = vmatpush1.msra.mxu0 %v1423
        %1429 = vmatprep.subr.mxu0 0.0
        %1430 = vmatpush1.msra.mxu0 0.0
        %1431 = vmatprep.subr.mxu0 0.0
        %1432 = vmatpush1.msra.mxu0 0.0
        %1433 = vmatprep.subr.mxu0 0.0
        %1434 = vmatpush1.msra.mxu0 0.0
        %1435 = vmatprep.subr.mxu0 0.0
        %1436 = vmatpush1.msra.mxu0 0.0
        %1437 = vmatprep.subr.mxu0 0.0
        %1438 = vmatpush1.msra.mxu0 0.0
        %1439 = vmatprep.subr.mxu0 0.0
        %1440 = vmatpush1.msra.mxu0 0.0
        %1441 = vmatprep.subr.mxu0 0.0
        %1442 = vmatpush1.msra.mxu0 0.0
        %1443 = vmatprep.subr.mxu0 0.0
        %1444 = vmatpush1.msra.mxu0 0.0
        %1445 = vmatprep.subr.mxu0 0.0
        %1446 = vmatpush1.msra.mxu0 0.0
        %1447 = vmatprep.subr.mxu0 0.0
        %1448 = vmatpush1.msra.mxu0 0.0
        %1449 = vmatprep.subr.mxu0 0.0
        %1450 = vmatpush1.msra.mxu0 0.0
        %1451 = vmatprep.subr.mxu0 0.0
        %1452 = vmatpush1.msra.mxu0 0.0
        %1453 = vmatprep.subr.mxu0 0.0
        %1454 = vmatpush1.msra.mxu0 0.0
        %1455 = vmatprep.subr.mxu0 0.0
        %1456 = vmatpush1.msra.mxu0 0.0
        %1457 = vmatprep.subr.mxu0 0.0
        %1458 = vmatpush1.msra.mxu0 0.0
        %1459 = vmatprep.subr.mxu0 0.0
        %1460 = vmatpush1.msra.mxu0 0.0
        %1461 = vmatprep.subr.mxu0 0.0
        %1462 = vmatpush1.msra.mxu0 0.0
        %1463 = vmatprep.subr.mxu0 0.0
        %1464 = vmatpush1.msra.mxu0 0.0
        %1465 = vmatprep.subr.mxu0 0.0
        %1466 = vmatpush1.msra.mxu0 0.0
        %1467 = vmatprep.subr.mxu0 0.0
        %1468 = vmatpush1.msra.mxu0 0.0
        %1469 = vmatprep.subr.mxu0 0.0
        %1470 = vmatpush1.msra.mxu0 0.0
        %1471 = vmatprep.subr.mxu0 0.0
        %1472 = vmatpush1.msra.mxu0 0.0
        %1473 = vmatprep.subr.mxu0 0.0
        %1474 = vmatpush1.msra.mxu0 0.0
        %1475 = vmatprep.subr.mxu0 0.0
        %1476 = vmatpush1.msra.mxu0 0.0
        %1477 = vmatprep.subr.mxu0 0.0
        %1478 = vmatpush1.msra.mxu0 0.0
        %1479 = vmatprep.subr.mxu0 0.0
        %1480 = vmatpush1.msra.mxu0 0.0
        %1481 = vmatprep.subr.mxu0 0.0
        %1482 = vmatpush1.msra.mxu0 0.0
        %1483 = vmatprep.subr.mxu0 0.0
        %1484 = vmatpush1.msra.mxu0 0.0
        %1485 = vmatprep.subr.mxu0 0.0
        %1486 = vmatpush1.msra.mxu0 0.0
        %1487 = vmatprep.subr.mxu0 0.0
        %1488 = vmatpush1.msra.mxu0 0.0
        %1489 = vmatprep.subr.mxu0 0.0
        %1490 = vmatpush1.msra.mxu0 0.0
        %1491 = vmatprep.mubr.f32.mxu0 0.0
        %1492 = vmatmul.mubr.f32.gmra.mrb[0].mxu0 %v1425
        %v1493 = vpop.f32.mrb[0].mxu0
        %v1494 = vadd.f32 0.0, %v1493
        %v1495 = vpop.f32.mrb[0].mxu0
        %1496 = vdwg.mxu0
        %v1498 = vsel %vm847, %v1007, 0
        %1500 = vmatprep.subr.mxu0 0.0
        %1501 = vmatpush1.msra.mxu0 %v1010
        %1502 = vmatprep.subr.mxu0 0.0
        %1503 = vmatpush1.msra.mxu0 0.0
        %1504 = vmatprep.subr.mxu0 0.0
        %1505 = vmatpush1.msra.mxu0 0.0
        %1506 = vmatprep.subr.mxu0 0.0
        %1507 = vmatpush1.msra.mxu0 0.0
        %1508 = vmatprep.subr.mxu0 0.0
        %1509 = vmatpush1.msra.mxu0 0.0
        %1510 = vmatprep.subr.mxu0 0.0
        %1511 = vmatpush1.msra.mxu0 0.0
        %1512 = vmatprep.subr.mxu0 0.0
        %1513 = vmatpush1.msra.mxu0 0.0
        %1514 = vmatprep.subr.mxu0 0.0
        %1515 = vmatpush1.msra.mxu0 0.0
        %1516 = vmatprep.subr.mxu0 0.0
        %1517 = vmatpush1.msra.mxu0 0.0
        %1518 = vmatprep.subr.mxu0 0.0
        %1519 = vmatpush1.msra.mxu0 0.0
        %1520 = vmatprep.subr.mxu0 0.0
        %1521 = vmatpush1.msra.mxu0 0.0
        %1522 = vmatprep.subr.mxu0 0.0
        %1523 = vmatpush1.msra.mxu0 0.0
        %1524 = vmatprep.subr.mxu0 0.0
        %1525 = vmatpush1.msra.mxu0 0.0
        %1526 = vmatprep.subr.mxu0 0.0
        %1527 = vmatpush1.msra.mxu0 0.0
        %1528 = vmatprep.subr.mxu0 0.0
        %1529 = vmatpush1.msra.mxu0 0.0
        %1530 = vmatprep.subr.mxu0 0.0
        %1531 = vmatpush1.msra.mxu0 0.0
        %1532 = vmatprep.subr.mxu0 0.0
        %1533 = vmatpush1.msra.mxu0 0.0
        %1534 = vmatprep.subr.mxu0 0.0
        %1535 = vmatpush1.msra.mxu0 0.0
        %1536 = vmatprep.subr.mxu0 0.0
        %1537 = vmatpush1.msra.mxu0 0.0
        %1538 = vmatprep.subr.mxu0 0.0
        %1539 = vmatpush1.msra.mxu0 0.0
        %1540 = vmatprep.subr.mxu0 0.0
        %1541 = vmatpush1.msra.mxu0 0.0
        %1542 = vmatprep.subr.mxu0 0.0
        %1543 = vmatpush1.msra.mxu0 0.0
        %1544 = vmatprep.subr.mxu0 0.0
        %1545 = vmatpush1.msra.mxu0 0.0
        %1546 = vmatprep.subr.mxu0 0.0
        %1547 = vmatpush1.msra.mxu0 0.0
        %1548 = vmatprep.subr.mxu0 0.0
        %1549 = vmatpush1.msra.mxu0 0.0
        %1550 = vmatprep.subr.mxu0 0.0
        %1551 = vmatpush1.msra.mxu0 0.0
        %1552 = vmatprep.subr.mxu0 0.0
        %1553 = vmatpush1.msra.mxu0 0.0
        %1554 = vmatprep.subr.mxu0 0.0
        %1555 = vmatpush1.msra.mxu0 0.0
        %1556 = vmatprep.subr.mxu0 0.0
        %1557 = vmatpush1.msra.mxu0 0.0
        %1558 = vmatprep.subr.mxu0 0.0
        %1559 = vmatpush1.msra.mxu0 0.0
        %1560 = vmatprep.subr.mxu0 0.0
        %1561 = vmatpush1.msra.mxu0 0.0
        %1562 = vmatprep.subr.mxu0 0.0
        %1563 = vmatpush1.msra.mxu0 0.0
        %1564 = vmatprep.mubr.f32.mxu0 0.0
        %1565 = vmatmul.mubr.f32.gmra.mrb[0].mxu0 %v1498
        %v1566 = vpop.f32.mrb[0].mxu0
        %v1567 = vadd.f32 %v1494, %v1566
        %v1568 = vpop.f32.mrb[0].mxu0
        %1569 = vdwg.mxu0
        %s1570 = scalar_lea.vmem %s2, 64
        %v1571 = vld [vmem:[%s1570] sm:$0xff]
        %v1572 = vld [vmem:[%s1570 + $0x8] sm:$0xff]
        %v1573 = vld [vmem:[%s1570 + $0x10] sm:$0xff]
        %v1574 = vld [vmem:[%s1570 + $0x18] sm:$0xff]
        %s1575 = scalar_lea.vmem %s5, 2
        %v1576 = vld [vmem:[%s1575] sm:$0x1]
        %v1578 = vlaneseq
        %v1579 = vshrl.u32 %v1578, 7
        %v1580 = vsub.s32 0, %v1579
        %v1581 = vrot.slane %v1576, %v1580
        %1583 = vmatprep.subr.mxu0 0.0
        %1584 = vmatpush1.msra.mxu0 %v1571
        %1585 = vmatprep.subr.mxu0 0.0
        %1586 = vmatpush1.msra.mxu0 %v1572
        %1587 = vmatprep.subr.mxu0 0.0
        %1588 = vmatpush1.msra.mxu0 %v1573
        %1589 = vmatprep.subr.mxu0 0.0
        %1590 = vmatpush1.msra.mxu0 %v1574
        %1591 = vmatprep.subr.mxu0 0.0
        %1592 = vmatpush1.msra.mxu0 0.0
        %1593 = vmatprep.subr.mxu0 0.0
        %1594 = vmatpush1.msra.mxu0 0.0
        %1595 = vmatprep.subr.mxu0 0.0
        %1596 = vmatpush1.msra.mxu0 0.0
        %1597 = vmatprep.subr.mxu0 0.0
        %1598 = vmatpush1.msra.mxu0 0.0
        %1599 = vmatprep.subr.mxu0 0.0
        %1600 = vmatpush1.msra.mxu0 0.0
        %1601 = vmatprep.subr.mxu0 0.0
        %1602 = vmatpush1.msra.mxu0 0.0
        %1603 = vmatprep.subr.mxu0 0.0
        %1604 = vmatpush1.msra.mxu0 0.0
        %1605 = vmatprep.subr.mxu0 0.0
        %1606 = vmatpush1.msra.mxu0 0.0
        %1607 = vmatprep.subr.mxu0 0.0
        %1608 = vmatpush1.msra.mxu0 0.0
        %1609 = vmatprep.subr.mxu0 0.0
        %1610 = vmatpush1.msra.mxu0 0.0
        %1611 = vmatprep.subr.mxu0 0.0
        %1612 = vmatpush1.msra.mxu0 0.0
        %1613 = vmatprep.subr.mxu0 0.0
        %1614 = vmatpush1.msra.mxu0 0.0
        %1615 = vmatprep.subr.mxu0 0.0
        %1616 = vmatpush1.msra.mxu0 0.0
        %1617 = vmatprep.subr.mxu0 0.0
        %1618 = vmatpush1.msra.mxu0 0.0
        %1619 = vmatprep.subr.mxu0 0.0
        %1620 = vmatpush1.msra.mxu0 0.0
        %1621 = vmatprep.subr.mxu0 0.0
        %1622 = vmatpush1.msra.mxu0 0.0
        %1623 = vmatprep.subr.mxu0 0.0
        %1624 = vmatpush1.msra.mxu0 0.0
        %1625 = vmatprep.subr.mxu0 0.0
        %1626 = vmatpush1.msra.mxu0 0.0
        %1627 = vmatprep.subr.mxu0 0.0
        %1628 = vmatpush1.msra.mxu0 0.0
        %1629 = vmatprep.subr.mxu0 0.0
        %1630 = vmatpush1.msra.mxu0 0.0
        %1631 = vmatprep.subr.mxu0 0.0
        %1632 = vmatpush1.msra.mxu0 0.0
        %1633 = vmatprep.subr.mxu0 0.0
        %1634 = vmatpush1.msra.mxu0 0.0
        %1635 = vmatprep.subr.mxu0 0.0
        %1636 = vmatpush1.msra.mxu0 0.0
        %1637 = vmatprep.subr.mxu0 0.0
        %1638 = vmatpush1.msra.mxu0 0.0
        %1639 = vmatprep.subr.mxu0 0.0
        %1640 = vmatpush1.msra.mxu0 0.0
        %1641 = vmatprep.subr.mxu0 0.0
        %1642 = vmatpush1.msra.mxu0 0.0
        %1643 = vmatprep.subr.mxu0 0.0
        %1644 = vmatpush1.msra.mxu0 0.0
        %1645 = vmatprep.subr.mxu0 0.0
        %1646 = vmatpush1.msra.mxu0 0.0
        %1647 = vmatprep.mubr.f32.mxu0 0.0
        %1648 = vmatmul.mubr.f32.gmra.mrb[0].mxu0 %v613
        %v1649 = vpop.f32.mrb[0].mxu0
        %v1650 = vadd.f32 %v1581, %v1649
        %v1651 = vpop.f32.mrb[0].mxu0
        %1652 = vdwg.mxu0
        %s1653 = scalar_lea.vmem %s3, 64
        %v1654 = vld [vmem:[%s1653] sm:$0xff]
        %v1655 = vld [vmem:[%s1653 + $0x8] sm:$0xff]
        %v1656 = vld [vmem:[%s1653 + $0x10] sm:$0xff]
        %v1657 = vld [vmem:[%s1653 + $0x18] sm:$0xff]
        %s1658 = scalar_lea.vmem %s6, 2
        %v1659 = vld [vmem:[%s1658] sm:$0x1]
        %v1661 = vlaneseq
        %v1662 = vshrl.u32 %v1661, 7
        %v1663 = vsub.s32 0, %v1662
        %v1664 = vrot.slane %v1659, %v1663
        %1666 = vmatprep.subr.mxu0 0.0
        %1667 = vmatpush1.msra.mxu0 %v1654
        %1668 = vmatprep.subr.mxu0 0.0
        %1669 = vmatpush1.msra.mxu0 %v1655
        %1670 = vmatprep.subr.mxu0 0.0
        %1671 = vmatpush1.msra.mxu0 %v1656
        %1672 = vmatprep.subr.mxu0 0.0
        %1673 = vmatpush1.msra.mxu0 %v1657
        %1674 = vmatprep.subr.mxu0 0.0
        %1675 = vmatpush1.msra.mxu0 0.0
        %1676 = vmatprep.subr.mxu0 0.0
        %1677 = vmatpush1.msra.mxu0 0.0
        %1678 = vmatprep.subr.mxu0 0.0
        %1679 = vmatpush1.msra.mxu0 0.0
        %1680 = vmatprep.subr.mxu0 0.0
        %1681 = vmatpush1.msra.mxu0 0.0
        %1682 = vmatprep.subr.mxu0 0.0
        %1683 = vmatpush1.msra.mxu0 0.0
        %1684 = vmatprep.subr.mxu0 0.0
        %1685 = vmatpush1.msra.mxu0 0.0
        %1686 = vmatprep.subr.mxu0 0.0
        %1687 = vmatpush1.msra.mxu0 0.0
        %1688 = vmatprep.subr.mxu0 0.0
        %1689 = vmatpush1.msra.mxu0 0.0
        %1690 = vmatprep.subr.mxu0 0.0
        %1691 = vmatpush1.msra.mxu0 0.0
        %1692 = vmatprep.subr.mxu0 0.0
        %1693 = vmatpush1.msra.mxu0 0.0
        %1694 = vmatprep.subr.mxu0 0.0
        %1695 = vmatpush1.msra.mxu0 0.0
        %1696 = vmatprep.subr.mxu0 0.0
        %1697 = vmatpush1.msra.mxu0 0.0
        %1698 = vmatprep.subr.mxu0 0.0
        %1699 = vmatpush1.msra.mxu0 0.0
        %1700 = vmatprep.subr.mxu0 0.0
        %1701 = vmatpush1.msra.mxu0 0.0
        %1702 = vmatprep.subr.mxu0 0.0
        %1703 = vmatpush1.msra.mxu0 0.0
        %1704 = vmatprep.subr.mxu0 0.0
        %1705 = vmatpush1.msra.mxu0 0.0
        %1706 = vmatprep.subr.mxu0 0.0
        %1707 = vmatpush1.msra.mxu0 0.0
        %1708 = vmatprep.subr.mxu0 0.0
        %1709 = vmatpush1.msra.mxu0 0.0
        %1710 = vmatprep.subr.mxu0 0.0
        %1711 = vmatpush1.msra.mxu0 0.0
        %1712 = vmatprep.subr.mxu0 0.0
        %1713 = vmatpush1.msra.mxu0 0.0
        %1714 = vmatprep.subr.mxu0 0.0
        %1715 = vmatpush1.msra.mxu0 0.0
        %1716 = vmatprep.subr.mxu0 0.0
        %1717 = vmatpush1.msra.mxu0 0.0
        %1718 = vmatprep.subr.mxu0 0.0
        %1719 = vmatpush1.msra.mxu0 0.0
        %1720 = vmatprep.subr.mxu0 0.0
        %1721 = vmatpush1.msra.mxu0 0.0
        %1722 = vmatprep.subr.mxu0 0.0
        %1723 = vmatpush1.msra.mxu0 0.0
        %1724 = vmatprep.subr.mxu0 0.0
        %1725 = vmatpush1.msra.mxu0 0.0
        %1726 = vmatprep.subr.mxu0 0.0
        %1727 = vmatpush1.msra.mxu0 0.0
        %1728 = vmatprep.subr.mxu0 0.0
        %1729 = vmatpush1.msra.mxu0 0.0
        %1730 = vmatprep.mubr.f32.mxu0 0.0
        %1731 = vmatmul.mubr.f32.gmra.mrb[0].mxu0 %v613
        %v1732 = vpop.f32.mrb[0].mxu0
        %v1733 = vadd.f32 %v1664, %v1732
        %v1734 = vpop.f32.mrb[0].mxu0
        %1735 = vdwg.mxu0
        %s1736 = scalar_lea.vmem %s4, 64
        %v1737 = vld [vmem:[%s1736] sm:$0xff]
        %v1738 = vld [vmem:[%s1736 + $0x8] sm:$0xff]
        %v1739 = vld [vmem:[%s1736 + $0x10] sm:$0xff]
        %v1740 = vld [vmem:[%s1736 + $0x18] sm:$0xff]
        %s1741 = scalar_lea.vmem %s7, 2
        %v1742 = vld [vmem:[%s1741] sm:$0x1]
        %v1744 = vlaneseq
        %v1745 = vshrl.u32 %v1744, 7
        %v1746 = vsub.s32 0, %v1745
        %v1747 = vrot.slane %v1742, %v1746
        %1749 = vmatprep.subr.mxu0 0.0
        %1750 = vmatpush1.msra.mxu0 %v1737
        %1751 = vmatprep.subr.mxu0 0.0
        %1752 = vmatpush1.msra.mxu0 %v1738
        %1753 = vmatprep.subr.mxu0 0.0
        %1754 = vmatpush1.msra.mxu0 %v1739
        %1755 = vmatprep.subr.mxu0 0.0
        %1756 = vmatpush1.msra.mxu0 %v1740
        %1757 = vmatprep.subr.mxu0 0.0
        %1758 = vmatpush1.msra.mxu0 0.0
        %1759 = vmatprep.subr.mxu0 0.0
        %1760 = vmatpush1.msra.mxu0 0.0
        %1761 = vmatprep.subr.mxu0 0.0
        %1762 = vmatpush1.msra.mxu0 0.0
        %1763 = vmatprep.subr.mxu0 0.0
        %1764 = vmatpush1.msra.mxu0 0.0
        %1765 = vmatprep.subr.mxu0 0.0
        %1766 = vmatpush1.msra.mxu0 0.0
        %1767 = vmatprep.subr.mxu0 0.0
        %1768 = vmatpush1.msra.mxu0 0.0
        %1769 = vmatprep.subr.mxu0 0.0
        %1770 = vmatpush1.msra.mxu0 0.0
        %1771 = vmatprep.subr.mxu0 0.0
        %1772 = vmatpush1.msra.mxu0 0.0
        %1773 = vmatprep.subr.mxu0 0.0
        %1774 = vmatpush1.msra.mxu0 0.0
        %1775 = vmatprep.subr.mxu0 0.0
        %1776 = vmatpush1.msra.mxu0 0.0
        %1777 = vmatprep.subr.mxu0 0.0
        %1778 = vmatpush1.msra.mxu0 0.0
        %1779 = vmatprep.subr.mxu0 0.0
        %1780 = vmatpush1.msra.mxu0 0.0
        %1781 = vmatprep.subr.mxu0 0.0
        %1782 = vmatpush1.msra.mxu0 0.0
        %1783 = vmatprep.subr.mxu0 0.0
        %1784 = vmatpush1.msra.mxu0 0.0
        %1785 = vmatprep.subr.mxu0 0.0
        %1786 = vmatpush1.msra.mxu0 0.0
        %1787 = vmatprep.subr.mxu0 0.0
        %1788 = vmatpush1.msra.mxu0 0.0
        %1789 = vmatprep.subr.mxu0 0.0
        %1790 = vmatpush1.msra.mxu0 0.0
        %1791 = vmatprep.subr.mxu0 0.0
        %1792 = vmatpush1.msra.mxu0 0.0
        %1793 = vmatprep.subr.mxu0 0.0
        %1794 = vmatpush1.msra.mxu0 0.0
        %1795 = vmatprep.subr.mxu0 0.0
        %1796 = vmatpush1.msra.mxu0 0.0
        %1797 = vmatprep.subr.mxu0 0.0
        %1798 = vmatpush1.msra.mxu0 0.0
        %1799 = vmatprep.subr.mxu0 0.0
        %1800 = vmatpush1.msra.mxu0 0.0
        %1801 = vmatprep.subr.mxu0 0.0
        %1802 = vmatpush1.msra.mxu0 0.0
        %1803 = vmatprep.subr.mxu0 0.0
        %1804 = vmatpush1.msra.mxu0 0.0
        %1805 = vmatprep.subr.mxu0 0.0
        %1806 = vmatpush1.msra.mxu0 0.0
        %1807 = vmatprep.subr.mxu0 0.0
        %1808 = vmatpush1.msra.mxu0 0.0
        %1809 = vmatprep.subr.mxu0 0.0
        %1810 = vmatpush1.msra.mxu0 0.0
        %1811 = vmatprep.subr.mxu0 0.0
        %1812 = vmatpush1.msra.mxu0 0.0
        %1813 = vmatprep.mubr.f32.mxu0 0.0
        %1814 = vmatmul.mubr.f32.gmra.mrb[0].mxu0 %v613
        %v1815 = vpop.f32.mrb[0].mxu0
        %v1816 = vadd.f32 %v1747, %v1815
        %v1817 = vpop.f32.mrb[0].mxu0
        %1818 = vdwg.mxu0
        %v1820 = vsel %vm847, %v1650, 0
        %v1823 = vsel %vm847, %v1733, 0
        %1825 = vmatprep.subr.mxu0 0.0
        %1826 = vmatpush1.xpose.msra.mxu0 %v1823
        %1827 = vmatprep.subr.mxu0 0.0
        %1828 = vmatpush1.xpose.msra.mxu0 0.0
        %1829 = vmatprep.subr.mxu0 0.0
        %1830 = vmatpush1.xpose.msra.mxu0 0.0
        %1831 = vmatprep.subr.mxu0 0.0
        %1832 = vmatpush1.xpose.msra.mxu0 0.0
        %1833 = vmatprep.subr.mxu0 0.0
        %1834 = vmatpush1.xpose.msra.mxu0 0.0
        %1835 = vmatprep.subr.mxu0 0.0
        %1836 = vmatpush1.xpose.msra.mxu0 0.0
        %1837 = vmatprep.subr.mxu0 0.0
        %1838 = vmatpush1.xpose.msra.mxu0 0.0
        %1839 = vmatprep.subr.mxu0 0.0
        %1840 = vmatpush1.xpose.msra.mxu0 0.0
        %1841 = vmatprep.subr.mxu0 0.0
        %1842 = vmatpush1.xpose.msra.mxu0 0.0
        %1843 = vmatprep.subr.mxu0 0.0
        %1844 = vmatpush1.xpose.msra.mxu0 0.0
        %1845 = vmatprep.subr.mxu0 0.0
        %1846 = vmatpush1.xpose.msra.mxu0 0.0
        %1847 = vmatprep.subr.mxu0 0.0
        %1848 = vmatpush1.xpose.msra.mxu0 0.0
        %1849 = vmatprep.subr.mxu0 0.0
        %1850 = vmatpush1.xpose.msra.mxu0 0.0
        %1851 = vmatprep.subr.mxu0 0.0
        %1852 = vmatpush1.xpose.msra.mxu0 0.0
        %1853 = vmatprep.subr.mxu0 0.0
        %1854 = vmatpush1.xpose.msra.mxu0 0.0
        %1855 = vmatprep.subr.mxu0 0.0
        %1856 = vmatpush1.xpose.msra.mxu0 0.0
        %1857 = vmatprep.subr.mxu0 0.0
        %1858 = vmatpush1.xpose.msra.mxu0 0.0
        %1859 = vmatprep.subr.mxu0 0.0
        %1860 = vmatpush1.xpose.msra.mxu0 0.0
        %1861 = vmatprep.subr.mxu0 0.0
        %1862 = vmatpush1.xpose.msra.mxu0 0.0
        %1863 = vmatprep.subr.mxu0 0.0
        %1864 = vmatpush1.xpose.msra.mxu0 0.0
        %1865 = vmatprep.subr.mxu0 0.0
        %1866 = vmatpush1.xpose.msra.mxu0 0.0
        %1867 = vmatprep.subr.mxu0 0.0
        %1868 = vmatpush1.xpose.msra.mxu0 0.0
        %1869 = vmatprep.subr.mxu0 0.0
        %1870 = vmatpush1.xpose.msra.mxu0 0.0
        %1871 = vmatprep.subr.mxu0 0.0
        %1872 = vmatpush1.xpose.msra.mxu0 0.0
        %1873 = vmatprep.subr.mxu0 0.0
        %1874 = vmatpush1.xpose.msra.mxu0 0.0
        %1875 = vmatprep.subr.mxu0 0.0
        %1876 = vmatpush1.xpose.msra.mxu0 0.0
        %1877 = vmatprep.subr.mxu0 0.0
        %1878 = vmatpush1.xpose.msra.mxu0 0.0
        %1879 = vmatprep.subr.mxu0 0.0
        %1880 = vmatpush1.xpose.msra.mxu0 0.0
        %1881 = vmatprep.subr.mxu0 0.0
        %1882 = vmatpush1.xpose.msra.mxu0 0.0
        %1883 = vmatprep.subr.mxu0 0.0
        %1884 = vmatpush1.xpose.msra.mxu0 0.0
        %1885 = vmatprep.subr.mxu0 0.0
        %1886 = vmatpush1.xpose.msra.mxu0 0.0
        %1887 = vmatprep.subr.mxu0 0.0
        %1888 = vmatpush1.xpose.msra.mxu0 0.0
        %1889 = vmatprep.mubr.f32.mxu0 0.0
        %1890 = vmatmul.mubr.f32.gmra.mrb[0].mxu0 %v1820
        %v1891 = vpop.f32.mrb[0].mxu0
        %v1892 = vadd.f32 0.0, %v1891
        %v1893 = vpop.f32.mrb[0].mxu0
        %1894 = vdwg.mxu0
        %v1895 = vmul.f32 %v1892, 0.35355338
        %v1896 = vadd.f32 %v1895, %v599
        %v1897 = vsel %vm847, %v1896, -inf
        %1898 = vmax.xlane.f32.xlu0 %v1897
        %v1899 = vpop.xlane.xlu0 %1898
        %v1900 = vsub.f32 %v1896, %v1899
        %v1901 = vmul.f32 %v1900, 1.442695
        %v1902 = vpow.pop %v1901
        %v1903 = vsel %vm847, %v1902, 0.0
        %1904 = vadd.xlane.f32.xlu0 %v1903
        %v1905 = vpop.xlane.xlu0 %1904
        %v1906 = vrcp.pop %v1905
        %v1907 = vmul.f32 %v1902, %v1906
        %v1909 = vsel %vm847, %v1907, 0
        %1911 = vmatprep.subr.mxu0 0.0
        %1912 = vmatpush1.msra.mxu0 %v1816
        %1913 = vmatprep.subr.mxu0 0.0
        %1914 = vmatpush1.msra.mxu0 0.0
        %1915 = vmatprep.subr.mxu0 0.0
        %1916 = vmatpush1.msra.mxu0 0.0
        %1917 = vmatprep.subr.mxu0 0.0
        %1918 = vmatpush1.msra.mxu0 0.0
        %1919 = vmatprep.subr.mxu0 0.0
        %1920 = vmatpush1.msra.mxu0 0.0
        %1921 = vmatprep.subr.mxu0 0.0
        %1922 = vmatpush1.msra.mxu0 0.0
        %1923 = vmatprep.subr.mxu0 0.0
        %1924 = vmatpush1.msra.mxu0 0.0
        %1925 = vmatprep.subr.mxu0 0.0
        %1926 = vmatpush1.msra.mxu0 0.0
        %1927 = vmatprep.subr.mxu0 0.0
        %1928 = vmatpush1.msra.mxu0 0.0
        %1929 = vmatprep.subr.mxu0 0.0
        %1930 = vmatpush1.msra.mxu0 0.0
        %1931 = vmatprep.subr.mxu0 0.0
        %1932 = vmatpush1.msra.mxu0 0.0
        %1933 = vmatprep.subr.mxu0 0.0
        %1934 = vmatpush1.msra.mxu0 0.0
        %1935 = vmatprep.subr.mxu0 0.0
        %1936 = vmatpush1.msra.mxu0 0.0
        %1937 = vmatprep.subr.mxu0 0.0
        %1938 = vmatpush1.msra.mxu0 0.0
        %1939 = vmatprep.subr.mxu0 0.0
        %1940 = vmatpush1.msra.mxu0 0.0
        %1941 = vmatprep.subr.mxu0 0.0
        %1942 = vmatpush1.msra.mxu0 0.0
        %1943 = vmatprep.subr.mxu0 0.0
        %1944 = vmatpush1.msra.mxu0 0.0
        %1945 = vmatprep.subr.mxu0 0.0
        %1946 = vmatpush1.msra.mxu0 0.0
        %1947 = vmatprep.subr.mxu0 0.0
        %1948 = vmatpush1.msra.mxu0 0.0
        %1949 = vmatprep.subr.mxu0 0.0
        %1950 = vmatpush1.msra.mxu0 0.0
        %1951 = vmatprep.subr.mxu0 0.0
        %1952 = vmatpush1.msra.mxu0 0.0
        %1953 = vmatprep.subr.mxu0 0.0
        %1954 = vmatpush1.msra.mxu0 0.0
        %1955 = vmatprep.subr.mxu0 0.0
        %1956 = vmatpush1.msra.mxu0 0.0
        %1957 = vmatprep.subr.mxu0 0.0
        %1958 = vmatpush1.msra.mxu0 0.0
        %1959 = vmatprep.subr.mxu0 0.0
        %1960 = vmatpush1.msra.mxu0 0.0
        %1961 = vmatprep.subr.mxu0 0.0
        %1962 = vmatpush1.msra.mxu0 0.0
        %1963 = vmatprep.subr.mxu0 0.0
        %1964 = vmatpush1.msra.mxu0 0.0
        %1965 = vmatprep.subr.mxu0 0.0
        %1966 = vmatpush1.msra.mxu0 0.0
        %1967 = vmatprep.subr.mxu0 0.0
        %1968 = vmatpush1.msra.mxu0 0.0
        %1969 = vmatprep.subr.mxu0 0.0
        %1970 = vmatpush1.msra.mxu0 0.0
        %1971 = vmatprep.subr.mxu0 0.0
        %1972 = vmatpush1.msra.mxu0 0.0
        %1973 = vmatprep.subr.mxu0 0.0
        %1974 = vmatpush1.msra.mxu0 0.0
        %1975 = vmatprep.mubr.f32.mxu0 0.0
        %1976 = vmatmul.mubr.f32.gmra.mrb[0].mxu0 %v1909
        %v1977 = vpop.f32.mrb[0].mxu0
        %v1978 = vadd.f32 0.0, %v1977
        %v1979 = vpop.f32.mrb[0].mxu0
        %1980 = vdwg.mxu0
        %s1981 = scalar_lea.vmem %s8, 16
        %v1982 = vld [vmem:[%s1981] sm:$0xff]
        %v1984 = vsel %vm847, %v1978, 0
        %1986 = vmatprep.subr.mxu0 0.0
        %1987 = vmatpush1.msra.mxu0 %v1982
        %1988 = vmatprep.subr.mxu0 0.0
        %1989 = vmatpush1.msra.mxu0 0.0
        %1990 = vmatprep.subr.mxu0 0.0
        %1991 = vmatpush1.msra.mxu0 0.0
        %1992 = vmatprep.subr.mxu0 0.0
        %1993 = vmatpush1.msra.mxu0 0.0
        %1994 = vmatprep.subr.mxu0 0.0
        %1995 = vmatpush1.msra.mxu0 0.0
        %1996 = vmatprep.subr.mxu0 0.0
        %1997 = vmatpush1.msra.mxu0 0.0
        %1998 = vmatprep.subr.mxu0 0.0
        %1999 = vmatpush1.msra.mxu0 0.0
        %2000 = vmatprep.subr.mxu0 0.0
        %2001 = vmatpush1.msra.mxu0 0.0
        %2002 = vmatprep.subr.mxu0 0.0
        %2003 = vmatpush1.msra.mxu0 0.0
        %2004 = vmatprep.subr.mxu0 0.0
        %2005 = vmatpush1.msra.mxu0 0.0
        %2006 = vmatprep.subr.mxu0 0.0
        %2007 = vmatpush1.msra.mxu0 0.0
        %2008 = vmatprep.subr.mxu0 0.0
        %2009 = vmatpush1.msra.mxu0 0.0
        %2010 = vmatprep.subr.mxu0 0.0
        %2011 = vmatpush1.msra.mxu0 0.0
        %2012 = vmatprep.subr.mxu0 0.0
        %2013 = vmatpush1.msra.mxu0 0.0
        %2014 = vmatprep.subr.mxu0 0.0
        %2015 = vmatpush1.msra.mxu0 0.0
        %2016 = vmatprep.subr.mxu0 0.0
        %2017 = vmatpush1.msra.mxu0 0.0
        %2018 = vmatprep.subr.mxu0 0.0
        %2019 = vmatpush1.msra.mxu0 0.0
        %2020 = vmatprep.subr.mxu0 0.0
        %2021 = vmatpush1.msra.mxu0 0.0
        %2022 = vmatprep.subr.mxu0 0.0
        %2023 = vmatpush1.msra.mxu0 0.0
        %2024 = vmatprep.subr.mxu0 0.0
        %2025 = vmatpush1.msra.mxu0 0.0
        %2026 = vmatprep.subr.mxu0 0.0
        %2027 = vmatpush1.msra.mxu0 0.0
        %2028 = vmatprep.subr.mxu0 0.0
        %2029 = vmatpush1.msra.mxu0 0.0
        %2030 = vmatprep.subr.mxu0 0.0
        %2031 = vmatpush1.msra.mxu0 0.0
        %2032 = vmatprep.subr.mxu0 0.0
        %2033 = vmatpush1.msra.mxu0 0.0
        %2034 = vmatprep.subr.mxu0 0.0
        %2035 = vmatpush1.msra.mxu0 0.0
        %2036 = vmatprep.subr.mxu0 0.0
        %2037 = vmatpush1.msra.mxu0 0.0
        %2038 = vmatprep.subr.mxu0 0.0
        %2039 = vmatpush1.msra.mxu0 0.0
        %2040 = vmatprep.subr.mxu0 0.0
        %2041 = vmatpush1.msra.mxu0 0.0
        %2042 = vmatprep.subr.mxu0 0.0
        %2043 = vmatpush1.msra.mxu0 0.0
        %2044 = vmatprep.subr.mxu0 0.0
        %2045 = vmatpush1.msra.mxu0 0.0
        %2046 = vmatprep.subr.mxu0 0.0
        %2047 = vmatpush1.msra.mxu0 0.0
        %2048 = vmatprep.subr.mxu0 0.0
        %2049 = vmatpush1.msra.mxu0 0.0
        %2050 = vmatprep.mubr.f32.mxu0 0.0
        %2051 = vmatmul.mubr.f32.gmra.mrb[0].mxu0 %v1984
        %v2052 = vpop.f32.mrb[0].mxu0
        %v2053 = vadd.f32 0.0, %v2052
        %v2054 = vpop.f32.mrb[0].mxu0
        %2055 = vdwg.mxu0
        %v2056 = vadd.f32 %v1567, %v2053
        %s2057 = scalar_lea.vmem %s2, 96
        %v2058 = vld [vmem:[%s2057] sm:$0xff]
        %v2059 = vld [vmem:[%s2057 + $0x8] sm:$0xff]
        %v2060 = vld [vmem:[%s2057 + $0x10] sm:$0xff]
        %v2061 = vld [vmem:[%s2057 + $0x18] sm:$0xff]
        %s2062 = scalar_lea.vmem %s5, 3
        %v2063 = vld [vmem:[%s2062] sm:$0x1]
        %v2065 = vlaneseq
        %v2066 = vshrl.u32 %v2065, 7
        %v2067 = vsub.s32 0, %v2066
        %v2068 = vrot.slane %v2063, %v2067
        %2070 = vmatprep.subr.mxu0 0.0
        %2071 = vmatpush1.msra.mxu0 %v2058
        %2072 = vmatprep.subr.mxu0 0.0
        %2073 = vmatpush1.msra.mxu0 %v2059
        %2074 = vmatprep.subr.mxu0 0.0
        %2075 = vmatpush1.msra.mxu0 %v2060
        %2076 = vmatprep.subr.mxu0 0.0
        %2077 = vmatpush1.msra.mxu0 %v2061
        %2078 = vmatprep.subr.mxu0 0.0
        %2079 = vmatpush1.msra.mxu0 0.0
        %2080 = vmatprep.subr.mxu0 0.0
        %2081 = vmatpush1.msra.mxu0 0.0
        %2082 = vmatprep.subr.mxu0 0.0
        %2083 = vmatpush1.msra.mxu0 0.0
        %2084 = vmatprep.subr.mxu0 0.0
        %2085 = vmatpush1.msra.mxu0 0.0
        %2086 = vmatprep.subr.mxu0 0.0
        %2087 = vmatpush1.msra.mxu0 0.0
        %2088 = vmatprep.subr.mxu0 0.0
        %2089 = vmatpush1.msra.mxu0 0.0
        %2090 = vmatprep.subr.mxu0 0.0
        %2091 = vmatpush1.msra.mxu0 0.0
        %2092 = vmatprep.subr.mxu0 0.0
        %2093 = vmatpush1.msra.mxu0 0.0
        %2094 = vmatprep.subr.mxu0 0.0
        %2095 = vmatpush1.msra.mxu0 0.0
        %2096 = vmatprep.subr.mxu0 0.0
        %2097 = vmatpush1.msra.mxu0 0.0
        %2098 = vmatprep.subr.mxu0 0.0
        %2099 = vmatpush1.msra.mxu0 0.0
        %2100 = vmatprep.subr.mxu0 0.0
        %2101 = vmatpush1.msra.mxu0 0.0
        %2102 = vmatprep.subr.mxu0 0.0
        %2103 = vmatpush1.msra.mxu0 0.0
        %2104 = vmatprep.subr.mxu0 0.0
        %2105 = vmatpush1.msra.mxu0 0.0
        %2106 = vmatprep.subr.mxu0 0.0
        %2107 = vmatpush1.msra.mxu0 0.0
        %2108 = vmatprep.subr.mxu0 0.0
        %2109 = vmatpush1.msra.mxu0 0.0
        %2110 = vmatprep.subr.mxu0 0.0
        %2111 = vmatpush1.msra.mxu0 0.0
        %2112 = vmatprep.subr.mxu0 0.0
        %2113 = vmatpush1.msra.mxu0 0.0
        %2114 = vmatprep.subr.mxu0 0.0
        %2115 = vmatpush1.msra.mxu0 0.0
        %2116 = vmatprep.subr.mxu0 0.0
        %2117 = vmatpush1.msra.mxu0 0.0
        %2118 = vmatprep.subr.mxu0 0.0
        %2119 = vmatpush1.msra.mxu0 0.0
        %2120 = vmatprep.subr.mxu0 0.0
        %2121 = vmatpush1.msra.mxu0 0.0
        %2122 = vmatprep.subr.mxu0 0.0
        %2123 = vmatpush1.msra.mxu0 0.0
        %2124 = vmatprep.subr.mxu0 0.0
        %2125 = vmatpush1.msra.mxu0 0.0
        %2126 = vmatprep.subr.mxu0 0.0
        %2127 = vmatpush1.msra.mxu0 0.0
        %2128 = vmatprep.subr.mxu0 0.0
        %2129 = vmatpush1.msra.mxu0 0.0
        %2130 = vmatprep.subr.mxu0 0.0
        %2131 = vmatpush1.msra.mxu0 0.0
        %2132 = vmatprep.subr.mxu0 0.0
        %2133 = vmatpush1.msra.mxu0 0.0
        %2134 = vmatprep.mubr.f32.mxu0 0.0
        %2135 = vmatmul.mubr.f32.gmra.mrb[0].mxu0 %v613
        %v2136 = vpop.f32.mrb[0].mxu0
        %v2137 = vadd.f32 %v2068, %v2136
        %v2138 = vpop.f32.mrb[0].mxu0
        %2139 = vdwg.mxu0
        %s2140 = scalar_lea.vmem %s3, 96
        %v2141 = vld [vmem:[%s2140] sm:$0xff]
        %v2142 = vld [vmem:[%s2140 + $0x8] sm:$0xff]
        %v2143 = vld [vmem:[%s2140 + $0x10] sm:$0xff]
        %v2144 = vld [vmem:[%s2140 + $0x18] sm:$0xff]
        %s2145 = scalar_lea.vmem %s6, 3
        %v2146 = vld [vmem:[%s2145] sm:$0x1]
        %v2148 = vlaneseq
        %v2149 = vshrl.u32 %v2148, 7
        %v2150 = vsub.s32 0, %v2149
        %v2151 = vrot.slane %v2146, %v2150
        %2153 = vmatprep.subr.mxu0 0.0
        %2154 = vmatpush1.msra.mxu0 %v2141
        %2155 = vmatprep.subr.mxu0 0.0
        %2156 = vmatpush1.msra.mxu0 %v2142
        %2157 = vmatprep.subr.mxu0 0.0
        %2158 = vmatpush1.msra.mxu0 %v2143
        %2159 = vmatprep.subr.mxu0 0.0
        %2160 = vmatpush1.msra.mxu0 %v2144
        %2161 = vmatprep.subr.mxu0 0.0
        %2162 = vmatpush1.msra.mxu0 0.0
        %2163 = vmatprep.subr.mxu0 0.0
        %2164 = vmatpush1.msra.mxu0 0.0
        %2165 = vmatprep.subr.mxu0 0.0
        %2166 = vmatpush1.msra.mxu0 0.0
        %2167 = vmatprep.subr.mxu0 0.0
        %2168 = vmatpush1.msra.mxu0 0.0
        %2169 = vmatprep.subr.mxu0 0.0
        %2170 = vmatpush1.msra.mxu0 0.0
        %2171 = vmatprep.subr.mxu0 0.0
        %2172 = vmatpush1.msra.mxu0 0.0
        %2173 = vmatprep.subr.mxu0 0.0
        %2174 = vmatpush1.msra.mxu0 0.0
        %2175 = vmatprep.subr.mxu0 0.0
        %2176 = vmatpush1.msra.mxu0 0.0
        %2177 = vmatprep.subr.mxu0 0.0
        %2178 = vmatpush1.msra.mxu0 0.0
        %2179 = vmatprep.subr.mxu0 0.0
        %2180 = vmatpush1.msra.mxu0 0.0
        %2181 = vmatprep.subr.mxu0 0.0
        %2182 = vmatpush1.msra.mxu0 0.0
        %2183 = vmatprep.subr.mxu0 0.0
        %2184 = vmatpush1.msra.mxu0 0.0
        %2185 = vmatprep.subr.mxu0 0.0
        %2186 = vmatpush1.msra.mxu0 0.0
        %2187 = vmatprep.subr.mxu0 0.0
        %2188 = vmatpush1.msra.mxu0 0.0
        %2189 = vmatprep.subr.mxu0 0.0
        %2190 = vmatpush1.msra.mxu0 0.0
        %2191 = vmatprep.subr.mxu0 0.0
        %2192 = vmatpush1.msra.mxu0 0.0
        %2193 = vmatprep.subr.mxu0 0.0
        %2194 = vmatpush1.msra.mxu0 0.0
        %2195 = vmatprep.subr.mxu0 0.0
        %2196 = vmatpush1.msra.mxu0 0.0
        %2197 = vmatprep.subr.mxu0 0.0
        %2198 = vmatpush1.msra.mxu0 0.0
        %2199 = vmatprep.subr.mxu0 0.0
        %2200 = vmatpush1.msra.mxu0 0.0
        %2201 = vmatprep.subr.mxu0 0.0
        %2202 = vmatpush1.msra.mxu0 0.0
        %2203 = vmatprep.subr.mxu0 0.0
        %2204 = vmatpush1.msra.mxu0 0.0
        %2205 = vmatprep.subr.mxu0 0.0
        %2206 = vmatpush1.msra.mxu0 0.0
        %2207 = vmatprep.subr.mxu0 0.0
        %2208 = vmatpush1.msra.mxu0 0.0
        %2209 = vmatprep.subr.mxu0 0.0
        %2210 = vmatpush1.msra.mxu0 0.0
        %2211 = vmatprep.subr.mxu0 0.0
        %2212 = vmatpush1.msra.mxu0 0.0
        %2213 = vmatprep.subr.mxu0 0.0
        %2214 = vmatpush1.msra.mxu0 0.0
        %2215 = vmatprep.subr.mxu0 0.0
        %2216 = vmatpush1.msra.mxu0 0.0
        %2217 = vmatprep.mubr.f32.mxu0 0.0
        %2218 = vmatmul.mubr.f32.gmra.mrb[0].mxu0 %v613
        %v2219 = vpop.f32.mrb[0].mxu0
        %v2220 = vadd.f32 %v2151, %v2219
        %v2221 = vpop.f32.mrb[0].mxu0
        %2222 = vdwg.mxu0
        %s2223 = scalar_lea.vmem %s4, 96
        %v2224 = vld [vmem:[%s2223] sm:$0xff]
        %v2225 = vld [vmem:[%s2223 + $0x8] sm:$0xff]
        %v2226 = vld [vmem:[%s2223 + $0x10] sm:$0xff]
        %v2227 = vld [vmem:[%s2223 + $0x18] sm:$0xff]
        %s2228 = scalar_lea.vmem %s7, 3
        %v2229 = vld [vmem:[%s2228] sm:$0x1]
        %v2231 = vlaneseq
        %v2232 = vshrl.u32 %v2231, 7
        %v2233 = vsub.s32 0, %v2232
        %v2234 = vrot.slane %v2229, %v2233
        %2236 = vmatprep.subr.mxu0 0.0
        %2237 = vmatpush1.msra.mxu0 %v2224
        %2238 = vmatprep.subr.mxu0 0.0
        %2239 = vmatpush1.msra.mxu0 %v2225
        %2240 = vmatprep.subr.mxu0 0.0
        %2241 = vmatpush1.msra.mxu0 %v2226
        %2242 = vmatprep.subr.mxu0 0.0
        %2243 = vmatpush1.msra.mxu0 %v2227
        %2244 = vmatprep.subr.mxu0 0.0
        %2245 = vmatpush1.msra.mxu0 0.0
        %2246 = vmatprep.subr.mxu0 0.0
        %2247 = vmatpush1.msra.mxu0 0.0
        %2248 = vmatprep.subr.mxu0 0.0
        %2249 = vmatpush1.msra.mxu0 0.0
        %2250 = vmatprep.subr.mxu0 0.0
        %2251 = vmatpush1.msra.mxu0 0.0
        %2252 = vmatprep.subr.mxu0 0.0
        %2253 = vmatpush1.msra.mxu0 0.0
        %2254 = vmatprep.subr.mxu0 0.0
        %2255 = vmatpush1.msra.mxu0 0.0
        %2256 = vmatprep.subr.mxu0 0.0
        %2257 = vmatpush1.msra.mxu0 0.0
        %2258 = vmatprep.subr.mxu0 0.0
        %2259 = vmatpush1.msra.mxu0 0.0
        %2260 = vmatprep.subr.mxu0 0.0
        %2261 = vmatpush1.msra.mxu0 0.0
        %2262 = vmatprep.subr.mxu0 0.0
        %2263 = vmatpush1.msra.mxu0 0.0
        %2264 = vmatprep.subr.mxu0 0.0
        %2265 = vmatpush1.msra.mxu0 0.0
        %2266 = vmatprep.subr.mxu0 0.0
        %2267 = vmatpush1.msra.mxu0 0.0
        %2268 = vmatprep.subr.mxu0 0.0
        %2269 = vmatpush1.msra.mxu0 0.0
        %2270 = vmatprep.subr.mxu0 0.0
        %2271 = vmatpush1.msra.mxu0 0.0
        %2272 = vmatprep.subr.mxu0 0.0
        %2273 = vmatpush1.msra.mxu0 0.0
        %2274 = vmatprep.subr.mxu0 0.0
        %2275 = vmatpush1.msra.mxu0 0.0
        %2276 = vmatprep.subr.mxu0 0.0
        %2277 = vmatpush1.msra.mxu0 0.0
        %2278 = vmatprep.subr.mxu0 0.0
        %2279 = vmatpush1.msra.mxu0 0.0
        %2280 = vmatprep.subr.mxu0 0.0
        %2281 = vmatpush1.msra.mxu0 0.0
        %2282 = vmatprep.subr.mxu0 0.0
        %2283 = vmatpush1.msra.mxu0 0.0
        %2284 = vmatprep.subr.mxu0 0.0
        %2285 = vmatpush1.msra.mxu0 0.0
        %2286 = vmatprep.subr.mxu0 0.0
        %2287 = vmatpush1.msra.mxu0 0.0
        %2288 = vmatprep.subr.mxu0 0.0
        %2289 = vmatpush1.msra.mxu0 0.0
        %2290 = vmatprep.subr.mxu0 0.0
        %2291 = vmatpush1.msra.mxu0 0.0
        %2292 = vmatprep.subr.mxu0 0.0
        %2293 = vmatpush1.msra.mxu0 0.0
        %2294 = vmatprep.subr.mxu0 0.0
        %2295 = vmatpush1.msra.mxu0 0.0
        %2296 = vmatprep.subr.mxu0 0.0
        %2297 = vmatpush1.msra.mxu0 0.0
        %2298 = vmatprep.subr.mxu0 0.0
        %2299 = vmatpush1.msra.mxu0 0.0
        %2300 = vmatprep.mubr.f32.mxu0 0.0
        %2301 = vmatmul.mubr.f32.gmra.mrb[0].mxu0 %v613
        %v2302 = vpop.f32.mrb[0].mxu0
        %v2303 = vadd.f32 %v2234, %v2302
        %v2304 = vpop.f32.mrb[0].mxu0
        %2305 = vdwg.mxu0
        %v2307 = vsel %vm847, %v2137, 0
        %v2310 = vsel %vm847, %v2220, 0
        %2312 = vmatprep.subr.mxu0 0.0
        %2313 = vmatpush1.xpose.msra.mxu0 %v2310
        %2314 = vmatprep.subr.mxu0 0.0
        %2315 = vmatpush1.xpose.msra.mxu0 0.0
        %2316 = vmatprep.subr.mxu0 0.0
        %2317 = vmatpush1.xpose.msra.mxu0 0.0
        %2318 = vmatprep.subr.mxu0 0.0
        %2319 = vmatpush1.xpose.msra.mxu0 0.0
        %2320 = vmatprep.subr.mxu0 0.0
        %2321 = vmatpush1.xpose.msra.mxu0 0.0
        %2322 = vmatprep.subr.mxu0 0.0
        %2323 = vmatpush1.xpose.msra.mxu0 0.0
        %2324 = vmatprep.subr.mxu0 0.0
        %2325 = vmatpush1.xpose.msra.mxu0 0.0
        %2326 = vmatprep.subr.mxu0 0.0
        %2327 = vmatpush1.xpose.msra.mxu0 0.0
        %2328 = vmatprep.subr.mxu0 0.0
        %2329 = vmatpush1.xpose.msra.mxu0 0.0
        %2330 = vmatprep.subr.mxu0 0.0
        %2331 = vmatpush1.xpose.msra.mxu0 0.0
        %2332 = vmatprep.subr.mxu0 0.0
        %2333 = vmatpush1.xpose.msra.mxu0 0.0
        %2334 = vmatprep.subr.mxu0 0.0
        %2335 = vmatpush1.xpose.msra.mxu0 0.0
        %2336 = vmatprep.subr.mxu0 0.0
        %2337 = vmatpush1.xpose.msra.mxu0 0.0
        %2338 = vmatprep.subr.mxu0 0.0
        %2339 = vmatpush1.xpose.msra.mxu0 0.0
        %2340 = vmatprep.subr.mxu0 0.0
        %2341 = vmatpush1.xpose.msra.mxu0 0.0
        %2342 = vmatprep.subr.mxu0 0.0
        %2343 = vmatpush1.xpose.msra.mxu0 0.0
        %2344 = vmatprep.subr.mxu0 0.0
        %2345 = vmatpush1.xpose.msra.mxu0 0.0
        %2346 = vmatprep.subr.mxu0 0.0
        %2347 = vmatpush1.xpose.msra.mxu0 0.0
        %2348 = vmatprep.subr.mxu0 0.0
        %2349 = vmatpush1.xpose.msra.mxu0 0.0
        %2350 = vmatprep.subr.mxu0 0.0
        %2351 = vmatpush1.xpose.msra.mxu0 0.0
        %2352 = vmatprep.subr.mxu0 0.0
        %2353 = vmatpush1.xpose.msra.mxu0 0.0
        %2354 = vmatprep.subr.mxu0 0.0
        %2355 = vmatpush1.xpose.msra.mxu0 0.0
        %2356 = vmatprep.subr.mxu0 0.0
        %2357 = vmatpush1.xpose.msra.mxu0 0.0
        %2358 = vmatprep.subr.mxu0 0.0
        %2359 = vmatpush1.xpose.msra.mxu0 0.0
        %2360 = vmatprep.subr.mxu0 0.0
        %2361 = vmatpush1.xpose.msra.mxu0 0.0
        %2362 = vmatprep.subr.mxu0 0.0
        %2363 = vmatpush1.xpose.msra.mxu0 0.0
        %2364 = vmatprep.subr.mxu0 0.0
        %2365 = vmatpush1.xpose.msra.mxu0 0.0
        %2366 = vmatprep.subr.mxu0 0.0
        %2367 = vmatpush1.xpose.msra.mxu0 0.0
        %2368 = vmatprep.subr.mxu0 0.0
        %2369 = vmatpush1.xpose.msra.mxu0 0.0
        %2370 = vmatprep.subr.mxu0 0.0
        %2371 = vmatpush1.xpose.msra.mxu0 0.0
        %2372 = vmatprep.subr.mxu0 0.0
        %2373 = vmatpush1.xpose.msra.mxu0 0.0
        %2374 = vmatprep.subr.mxu0 0.0
        %2375 = vmatpush1.xpose.msra.mxu0 0.0
        %2376 = vmatprep.mubr.f32.mxu0 0.0
        %2377 = vmatmul.mubr.f32.gmra.mrb[0].mxu0 %v2307
        %v2378 = vpop.f32.mrb[0].mxu0
        %v2379 = vadd.f32 0.0, %v2378
        %v2380 = vpop.f32.mrb[0].mxu0
        %2381 = vdwg.mxu0
        %v2382 = vmul.f32 %v2379, 0.35355338
        %v2383 = vadd.f32 %v2382, %v599
        %v2384 = vsel %vm847, %v2383, -inf
        %2385 = vmax.xlane.f32.xlu0 %v2384
        %v2386 = vpop.xlane.xlu0 %2385
        %v2387 = vsub.f32 %v2383, %v2386
        %v2388 = vmul.f32 %v2387, 1.442695
        %v2389 = vpow.pop %v2388
        %v2390 = vsel %vm847, %v2389, 0.0
        %2391 = vadd.xlane.f32.xlu0 %v2390
        %v2392 = vpop.xlane.xlu0 %2391
        %v2393 = vrcp.pop %v2392
        %v2394 = vmul.f32 %v2389, %v2393
        %v2396 = vsel %vm847, %v2394, 0
        %2398 = vmatprep.subr.mxu0 0.0
        %2399 = vmatpush1.msra.mxu0 %v2303
        %2400 = vmatprep.subr.mxu0 0.0
        %2401 = vmatpush1.msra.mxu0 0.0
        %2402 = vmatprep.subr.mxu0 0.0
        %2403 = vmatpush1.msra.mxu0 0.0
        %2404 = vmatprep.subr.mxu0 0.0
        %2405 = vmatpush1.msra.mxu0 0.0
        %2406 = vmatprep.subr.mxu0 0.0
        %2407 = vmatpush1.msra.mxu0 0.0
        %2408 = vmatprep.subr.mxu0 0.0
        %2409 = vmatpush1.msra.mxu0 0.0
        %2410 = vmatprep.subr.mxu0 0.0
        %2411 = vmatpush1.msra.mxu0 0.0
        %2412 = vmatprep.subr.mxu0 0.0
        %2413 = vmatpush1.msra.mxu0 0.0
        %2414 = vmatprep.subr.mxu0 0.0
        %2415 = vmatpush1.msra.mxu0 0.0
        %2416 = vmatprep.subr.mxu0 0.0
        %2417 = vmatpush1.msra.mxu0 0.0
        %2418 = vmatprep.subr.mxu0 0.0
        %2419 = vmatpush1.msra.mxu0 0.0
        %2420 = vmatprep.subr.mxu0 0.0
        %2421 = vmatpush1.msra.mxu0 0.0
        %2422 = vmatprep.subr.mxu0 0.0
        %2423 = vmatpush1.msra.mxu0 0.0
        %2424 = vmatprep.subr.mxu0 0.0
        %2425 = vmatpush1.msra.mxu0 0.0
        %2426 = vmatprep.subr.mxu0 0.0
        %2427 = vmatpush1.msra.mxu0 0.0
        %2428 = vmatprep.subr.mxu0 0.0
        %2429 = vmatpush1.msra.mxu0 0.0
        %2430 = vmatprep.subr.mxu0 0.0
        %2431 = vmatpush1.msra.mxu0 0.0
        %2432 = vmatprep.subr.mxu0 0.0
        %2433 = vmatpush1.msra.mxu0 0.0
        %2434 = vmatprep.subr.mxu0 0.0
        %2435 = vmatpush1.msra.mxu0 0.0
        %2436 = vmatprep.subr.mxu0 0.0
        %2437 = vmatpush1.msra.mxu0 0.0
        %2438 = vmatprep.subr.mxu0 0.0
        %2439 = vmatpush1.msra.mxu0 0.0
        %2440 = vmatprep.subr.mxu0 0.0
        %2441 = vmatpush1.msra.mxu0 0.0
        %2442 = vmatprep.subr.mxu0 0.0
        %2443 = vmatpush1.msra.mxu0 0.0
        %2444 = vmatprep.subr.mxu0 0.0
        %2445 = vmatpush1.msra.mxu0 0.0
        %2446 = vmatprep.subr.mxu0 0.0
        %2447 = vmatpush1.msra.mxu0 0.0
        %2448 = vmatprep.subr.mxu0 0.0
        %2449 = vmatpush1.msra.mxu0 0.0
        %2450 = vmatprep.subr.mxu0 0.0
        %2451 = vmatpush1.msra.mxu0 0.0
        %2452 = vmatprep.subr.mxu0 0.0
        %2453 = vmatpush1.msra.mxu0 0.0
        %2454 = vmatprep.subr.mxu0 0.0
        %2455 = vmatpush1.msra.mxu0 0.0
        %2456 = vmatprep.subr.mxu0 0.0
        %2457 = vmatpush1.msra.mxu0 0.0
        %2458 = vmatprep.subr.mxu0 0.0
        %2459 = vmatpush1.msra.mxu0 0.0
        %2460 = vmatprep.subr.mxu0 0.0
        %2461 = vmatpush1.msra.mxu0 0.0
        %2462 = vmatprep.mubr.f32.mxu0 0.0
        %2463 = vmatmul.mubr.f32.gmra.mrb[0].mxu0 %v2396
        %v2464 = vpop.f32.mrb[0].mxu0
        %v2465 = vadd.f32 0.0, %v2464
        %v2466 = vpop.f32.mrb[0].mxu0
        %2467 = vdwg.mxu0
        %s2468 = scalar_lea.vmem %s8, 24
        %v2469 = vld [vmem:[%s2468] sm:$0xff]
        %v2471 = vsel %vm847, %v2465, 0
        %2473 = vmatprep.subr.mxu0 0.0
        %2474 = vmatpush1.msra.mxu0 %v2469
        %2475 = vmatprep.subr.mxu0 0.0
        %2476 = vmatpush1.msra.mxu0 0.0
        %2477 = vmatprep.subr.mxu0 0.0
        %2478 = vmatpush1.msra.mxu0 0.0
        %2479 = vmatprep.subr.mxu0 0.0
        %2480 = vmatpush1.msra.mxu0 0.0
        %2481 = vmatprep.subr.mxu0 0.0
        %2482 = vmatpush1.msra.mxu0 0.0
        %2483 = vmatprep.subr.mxu0 0.0
        %2484 = vmatpush1.msra.mxu0 0.0
        %2485 = vmatprep.subr.mxu0 0.0
        %2486 = vmatpush1.msra.mxu0 0.0
        %2487 = vmatprep.subr.mxu0 0.0
        %2488 = vmatpush1.msra.mxu0 0.0
        %2489 = vmatprep.subr.mxu0 0.0
        %2490 = vmatpush1.msra.mxu0 0.0
        %2491 = vmatprep.subr.mxu0 0.0
        %2492 = vmatpush1.msra.mxu0 0.0
        %2493 = vmatprep.subr.mxu0 0.0
        %2494 = vmatpush1.msra.mxu0 0.0
        %2495 = vmatprep.subr.mxu0 0.0
        %2496 = vmatpush1.msra.mxu0 0.0
        %2497 = vmatprep.subr.mxu0 0.0
        %2498 = vmatpush1.msra.mxu0 0.0
        %2499 = vmatprep.subr.mxu0 0.0
        %2500 = vmatpush1.msra.mxu0 0.0
        %2501 = vmatprep.subr.mxu0 0.0
        %2502 = vmatpush1.msra.mxu0 0.0
        %2503 = vmatprep.subr.mxu0 0.0
        %2504 = vmatpush1.msra.mxu0 0.0
        %2505 = vmatprep.subr.mxu0 0.0
        %2506 = vmatpush1.msra.mxu0 0.0
        %2507 = vmatprep.subr.mxu0 0.0
        %2508 = vmatpush1.msra.mxu0 0.0
        %2509 = vmatprep.subr.mxu0 0.0
        %2510 = vmatpush1.msra.mxu0 0.0
        %2511 = vmatprep.subr.mxu0 0.0
        %2512 = vmatpush1.msra.mxu0 0.0
        %2513 = vmatprep.subr.mxu0 0.0
        %2514 = vmatpush1.msra.mxu0 0.0
        %2515 = vmatprep.subr.mxu0 0.0
        %2516 = vmatpush1.msra.mxu0 0.0
        %2517 = vmatprep.subr.mxu0 0.0
        %2518 = vmatpush1.msra.mxu0 0.0
        %2519 = vmatprep.subr.mxu0 0.0
        %2520 = vmatpush1.msra.mxu0 0.0
        %2521 = vmatprep.subr.mxu0 0.0
        %2522 = vmatpush1.msra.mxu0 0.0
        %2523 = vmatprep.subr.mxu0 0.0
        %2524 = vmatpush1.msra.mxu0 0.0
        %2525 = vmatprep.subr.mxu0 0.0
        %2526 = vmatpush1.msra.mxu0 0.0
        %2527 = vmatprep.subr.mxu0 0.0
        %2528 = vmatpush1.msra.mxu0 0.0
        %2529 = vmatprep.subr.mxu0 0.0
        %2530 = vmatpush1.msra.mxu0 0.0
        %2531 = vmatprep.subr.mxu0 0.0
        %2532 = vmatpush1.msra.mxu0 0.0
        %2533 = vmatprep.subr.mxu0 0.0
        %2534 = vmatpush1.msra.mxu0 0.0
        %2535 = vmatprep.subr.mxu0 0.0
        %2536 = vmatpush1.msra.mxu0 0.0
        %2537 = vmatprep.mubr.f32.mxu0 0.0
        %2538 = vmatmul.mubr.f32.gmra.mrb[0].mxu0 %v2471
        %v2539 = vpop.f32.mrb[0].mxu0
        %v2540 = vadd.f32 0.0, %v2539
        %v2541 = vpop.f32.mrb[0].mxu0
        %2542 = vdwg.mxu0
        %v2543 = vadd.f32 %v2056, %v2540
        %v2544 = vld [vmem:[%s9] sm:$0x1]
        %v2546 = vlaneseq
        %v2547 = vshrl.u32 %v2546, 7
        %v2548 = vsub.s32 0, %v2547
        %v2549 = vrot.slane %v2544, %v2548
        %v2551 = vadd.f32 %v2543, %v2549
        %v2552 = vadd.f32 %v598, %v2551
        %v2553 = vld [vmem:[%s10] sm:$0x1]
        %v2554 = vld [vmem:[%s11] sm:$0x1]
        %v2555 = vsel %vm611, %v2552, 0.0
        %2556 = vadd.xlane.f32.xlu0 %v2555
        %v2557 = vpop.xlane.xlu0 %2556
        %v2558 = vrcp.pop 32.0
        %v2559 = vmul.f32 %v2557, %v2558
        %v2560 = vsub.f32 %v2552, %v2559
        %v2561 = vmul.f32 %v2560, %v2560
        %v2562 = vsel %vm611, %v2561, 0.0
        %2563 = vadd.xlane.f32.xlu0 %v2562
        %v2564 = vpop.xlane.xlu0 %2563
        %v2565 = vmul.f32 %v2564, %v2558
        %v2566 = vadd.f32 %v2565, 1e-05
        %v2567 = vrsqrt.pop %v2566
        %v2568 = vmul.f32 %v2560, %v2567
        %v2570 = vlaneseq
        %v2571 = vshrl.u32 %v2570, 7
        %v2572 = vsub.s32 0, %v2571
        %v2573 = vrot.slane %v2553, %v2572
        %v2575 = vmul.f32 %v2568, %v2573
        %v2577 = vlaneseq
        %v2578 = vshrl.u32 %v2577, 7
        %v2579 = vsub.s32 0, %v2578
        %v2580 = vrot.slane %v2554, %v2579
        %v2582 = vadd.f32 %v2575, %v2580
        %v2583 = vld [vmem:[%s12] sm:$0xff]
        %v2584 = vld [vmem:[%s12 + $0x8] sm:$0xff]
        %v2585 = vld [vmem:[%s12 + $0x10] sm:$0xff]
        %v2586 = vld [vmem:[%s12 + $0x18] sm:$0xff]
        %v2588 = vsel %vm611, %v2582, 0
        %2590 = vmatprep.subr.mxu0 0.0
        %2591 = vmatpush1.msra.mxu0 %v2583
        %2592 = vmatprep.subr.mxu0 0.0
        %2593 = vmatpush1.msra.mxu0 %v2584
        %2594 = vmatprep.subr.mxu0 0.0
        %2595 = vmatpush1.msra.mxu0 %v2585
        %2596 = vmatprep.subr.mxu0 0.0
        %2597 = vmatpush1.msra.mxu0 %v2586
        %2598 = vmatprep.subr.mxu0 0.0
        %2599 = vmatpush1.msra.mxu0 0.0
        %2600 = vmatprep.subr.mxu0 0.0
        %2601 = vmatpush1.msra.mxu0 0.0
        %2602 = vmatprep.subr.mxu0 0.0
        %2603 = vmatpush1.msra.mxu0 0.0
        %2604 = vmatprep.subr.mxu0 0.0
        %2605 = vmatpush1.msra.mxu0 0.0
        %2606 = vmatprep.subr.mxu0 0.0
        %2607 = vmatpush1.msra.mxu0 0.0
        %2608 = vmatprep.subr.mxu0 0.0
        %2609 = vmatpush1.msra.mxu0 0.0
        %2610 = vmatprep.subr.mxu0 0.0
        %2611 = vmatpush1.msra.mxu0 0.0
        %2612 = vmatprep.subr.mxu0 0.0
        %2613 = vmatpush1.msra.mxu0 0.0
        %2614 = vmatprep.subr.mxu0 0.0
        %2615 = vmatpush1.msra.mxu0 0.0
        %2616 = vmatprep.subr.mxu0 0.0
        %2617 = vmatpush1.msra.mxu0 0.0
        %2618 = vmatprep.subr.mxu0 0.0
        %2619 = vmatpush1.msra.mxu0 0.0
        %2620 = vmatprep.subr.mxu0 0.0
        %2621 = vmatpush1.msra.mxu0 0.0
        %2622 = vmatprep.subr.mxu0 0.0
        %2623 = vmatpush1.msra.mxu0 0.0
        %2624 = vmatprep.subr.mxu0 0.0
        %2625 = vmatpush1.msra.mxu0 0.0
        %2626 = vmatprep.subr.mxu0 0.0
        %2627 = vmatpush1.msra.mxu0 0.0
        %2628 = vmatprep.subr.mxu0 0.0
        %2629 = vmatpush1.msra.mxu0 0.0
        %2630 = vmatprep.subr.mxu0 0.0
        %2631 = vmatpush1.msra.mxu0 0.0
        %2632 = vmatprep.subr.mxu0 0.0
        %2633 = vmatpush1.msra.mxu0 0.0
        %2634 = vmatprep.subr.mxu0 0.0
        %2635 = vmatpush1.msra.mxu0 0.0
        %2636 = vmatprep.subr.mxu0 0.0
        %2637 = vmatpush1.msra.mxu0 0.0
        %2638 = vmatprep.subr.mxu0 0.0
        %2639 = vmatpush1.msra.mxu0 0.0
        %2640 = vmatprep.subr.mxu0 0.0
        %2641 = vmatpush1.msra.mxu0 0.0
        %2642 = vmatprep.subr.mxu0 0.0
        %2643 = vmatpush1.msra.mxu0 0.0
        %2644 = vmatprep.subr.mxu0 0.0
        %2645 = vmatpush1.msra.mxu0 0.0
        %2646 = vmatprep.subr.mxu0 0.0
        %2647 = vmatpush1.msra.mxu0 0.0
        %2648 = vmatprep.subr.mxu0 0.0
        %2649 = vmatpush1.msra.mxu0 0.0
        %2650 = vmatprep.subr.mxu0 0.0
        %2651 = vmatpush1.msra.mxu0 0.0
        %2652 = vmatprep.subr.mxu0 0.0
        %2653 = vmatpush1.msra.mxu0 0.0
        %2654 = vmatprep.mubr.f32.mxu0 0.0
        %2655 = vmatmul.mubr.f32.gmra.mrb[0].mxu0 %v2588
        %v2656 = vpop.f32.mrb[0].mxu0
        %v2657 = vadd.f32 0.0, %v2656
        %v2658 = vpop.f32.mrb[0].mxu0
        %2659 = vdwg.mxu0
        %vm2660 = vcmask 31744
        %v2661 = vsel %vm2660, %v2657, -inf
        %2662 = vmax.xlane.f32.xlu0 %v2661
        %v2663 = vpop.xlane.xlu0 %2662
        %v2664 = vsub.f32 %v2657, %v2663
        %v2665 = vmul.f32 %v2664, 1.442695
        %v2666 = vpow.pop %v2665
        %v2667 = vsel %vm2660, %v2666, 0.0
        %2668 = vadd.xlane.f32.xlu0 %v2667
        %v2669 = vpop.xlane.xlu0 %2668
        %v2670 = vrcp.pop %v2669
        %v2671 = vmul.f32 %v2666, %v2670
        %v2672 = vlaneseq
        %v2673 = vand.u32 %v2672, 127
        %vm2674 = vcmp.eq.f32.partialorder %v2657, %v2663
        %v2675 = vsel %vm2674, %v2673, 4
        %v2676 = vsel %vm2660, %v2675, 2147483647
        %v2677 = vand.u32 %v2676, 65535
        %v2678 = vshra.s32 %v2676, 16
        %v2679 = vcvt.s32.f32 %v2677
        %v2680 = vcvt.s32.f32 %v2678
        %2681 = vmin.xlane.f32.xlu0 %v2680
        %v2682 = vpop.xlane.xlu0 %2681
        %vm2683 = vcmp.eq.f32.partialorder %v2680, %v2682
        %v2684 = vsel %vm2683, %v2679, inf
        %2685 = vmin.xlane.f32.xlu0 %v2684
        %v2686 = vpop.xlane.xlu0 %2685
        %v2687 = vcvt.f32.s32 %v2686
        %v2688 = vcvt.f32.s32 %v2682
        %v2689 = vshll.u32 %v2688, 16
        %v2690 = vadd.s32 %v2689, %v2687
        %vm2691 = vcmp.eq.s32.totalorder %v2673, %v2690
        %v2692 = vsel %vm2691, 1, 0
        %v2693 = vcvt.s32.f32 %v2692
        %v2694 = vmul.f32 %v2693, %v2671
        %v2695 = vsel %vm2660, %v2694, 0.0
        %2696 = vadd.xlane.f32.xlu0 %v2695
        %v2697 = vpop.xlane.xlu0 %2696
        %v2698 = vmul.f32 %v2693, %v2697
        %v2699 = vld [vmem:[%s13] sm:$0xff]
        %v2700 = vld [vmem:[%s13 + $0x8] sm:$0xff]
        %v2701 = vld [vmem:[%s13 + $0x10] sm:$0xff]
        %v2702 = vld [vmem:[%s13 + $0x18] sm:$0xff]
        %v2703 = vld [vmem:[%s13 + $0x20] sm:$0xff]
        %v2704 = vld [vmem:[%s13 + $0x28] sm:$0xff]
        %v2705 = vld [vmem:[%s13 + $0x30] sm:$0xff]
        %v2706 = vld [vmem:[%s13 + $0x38] sm:$0xff]
        %v2707 = vld [vmem:[%s14] sm:$0x3]
        %v2709 = vlaneseq
        %v2710 = vshrl.u32 %v2709, 7
        %v2711 = vsub.s32 0, %v2710
        %v2712 = vrot.slane %v2707, %v2711
        %v2713 = vlaneseq
        %v2714 = vshrl.u32 %v2713, 7
        %v2715 = vsub.s32 1, %v2714
        %v2716 = vrot.slane %v2707, %v2715
        %2719 = vmatprep.subr.mxu0 %v2700
        %2720 = vmatpush1.msra.mxu0 %v2699
        %2721 = vmatprep.subr.mxu0 %v2702
        %2722 = vmatpush1.msra.mxu0 %v2701
        %2723 = vmatprep.subr.mxu0 %v2704
        %2724 = vmatpush1.msra.mxu0 %v2703
        %2725 = vmatprep.subr.mxu0 %v2706
        %2726 = vmatpush1.msra.mxu0 %v2705
        %2727 = vmatprep.subr.mxu0 0.0
        %2728 = vmatpush1.msra.mxu0 0.0
        %2729 = vmatprep.subr.mxu0 0.0
        %2730 = vmatpush1.msra.mxu0 0.0
        %2731 = vmatprep.subr.mxu0 0.0
        %2732 = vmatpush1.msra.mxu0 0.0
        %2733 = vmatprep.subr.mxu0 0.0
        %2734 = vmatpush1.msra.mxu0 0.0
        %2735 = vmatprep.subr.mxu0 0.0
        %2736 = vmatpush1.msra.mxu0 0.0
        %2737 = vmatprep.subr.mxu0 0.0
        %2738 = vmatpush1.msra.mxu0 0.0
        %2739 = vmatprep.subr.mxu0 0.0
        %2740 = vmatpush1.msra.mxu0 0.0
        %2741 = vmatprep.subr.mxu0 0.0
        %2742 = vmatpush1.msra.mxu0 0.0
        %2743 = vmatprep.subr.mxu0 0.0
        %2744 = vmatpush1.msra.mxu0 0.0
        %2745 = vmatprep.subr.mxu0 0.0
        %2746 = vmatpush1.msra.mxu0 0.0
        %2747 = vmatprep.subr.mxu0 0.0
        %2748 = vmatpush1.msra.mxu0 0.0
        %2749 = vmatprep.subr.mxu0 0.0
        %2750 = vmatpush1.msra.mxu0 0.0
        %2751 = vmatprep.subr.mxu0 0.0
        %2752 = vmatpush1.msra.mxu0 0.0
        %2753 = vmatprep.subr.mxu0 0.0
        %2754 = vmatpush1.msra.mxu0 0.0
        %2755 = vmatprep.subr.mxu0 0.0
        %2756 = vmatpush1.msra.mxu0 0.0
        %2757 = vmatprep.subr.mxu0 0.0
        %2758 = vmatpush1.msra.mxu0 0.0
        %2759 = vmatprep.subr.mxu0 0.0
        %2760 = vmatpush1.msra.mxu0 0.0
        %2761 = vmatprep.subr.mxu0 0.0
        %2762 = vmatpush1.msra.mxu0 0.0
        %2763 = vmatprep.subr.mxu0 0.0
        %2764 = vmatpush1.msra.mxu0 0.0
        %2765 = vmatprep.subr.mxu0 0.0
        %2766 = vmatpush1.msra.mxu0 0.0
        %2767 = vmatprep.subr.mxu0 0.0
        %2768 = vmatpush1.msra.mxu0 0.0
        %2769 = vmatprep.subr.mxu0 0.0
        %2770 = vmatpush1.msra.mxu0 0.0
        %2771 = vmatprep.subr.mxu0 0.0
        %2772 = vmatpush1.msra.mxu0 0.0
        %2773 = vmatprep.subr.mxu0 0.0
        %2774 = vmatpush1.msra.mxu0 0.0
        %2775 = vmatprep.subr.mxu0 0.0
        %2776 = vmatpush1.msra.mxu0 0.0
        %2777 = vmatprep.subr.mxu0 0.0
        %2778 = vmatpush1.msra.mxu0 0.0
        %2779 = vmatprep.subr.mxu0 0.0
        %2780 = vmatpush1.msra.mxu0 0.0
        %2781 = vmatprep.subr.mxu0 0.0
        %2782 = vmatpush1.msra.mxu0 0.0
        %2783 = vmatprep.mubr.f32.mxu0 0.0
        %2784 = vmatmul.mubr.f32.gmra.mrb[0].mxu0 %v2588
        %v2785 = vpop.f32.mrb[0].mxu0
        %v2786 = vadd.f32 %v2712, %v2785
        %v2787 = vpop.f32.mrb[0].mxu0
        %v2788 = vadd.f32 %v2716, %v2787
        %2789 = vdwg.mxu0
        %v2790 = vmax.f32 %v2786, 0.0
        %v2791 = vmax.f32 %v2788, 0.0
        %v2792 = vld [vmem:[%s15] sm:$0xff]
        %v2793 = vld [vmem:[%s15 + $0x8] sm:$0xff]
        %v2794 = vld [vmem:[%s15 + $0x10] sm:$0xff]
        %v2795 = vld [vmem:[%s15 + $0x18] sm:$0xff]
        %v2796 = vld [vmem:[%s15 + $0x20] sm:$0xff]
        %v2797 = vld [vmem:[%s15 + $0x28] sm:$0xff]
        %v2798 = vld [vmem:[%s15 + $0x30] sm:$0xff]
        %v2799 = vld [vmem:[%s15 + $0x38] sm:$0xff]
        %v2800 = vld [vmem:[%s15 + $0x40] sm:$0xff]
        %v2801 = vld [vmem:[%s15 + $0x48] sm:$0xff]
        %v2802 = vld [vmem:[%s15 + $0x50] sm:$0xff]
        %v2803 = vld [vmem:[%s15 + $0x58] sm:$0xff]
        %v2804 = vld [vmem:[%s15 + $0x60] sm:$0xff]
        %v2805 = vld [vmem:[%s15 + $0x68] sm:$0xff]
        %v2806 = vld [vmem:[%s15 + $0x70] sm:$0xff]
        %v2807 = vld [vmem:[%s15 + $0x78] sm:$0xff]
        %v2808 = vld [vmem:[%s15 + $0x80] sm:$0xff]
        %v2809 = vld [vmem:[%s15 + $0x88] sm:$0xff]
        %v2810 = vld [vmem:[%s15 + $0x90] sm:$0xff]
        %v2811 = vld [vmem:[%s15 + $0x98] sm:$0xff]
        %v2812 = vld [vmem:[%s15 + $0xa0] sm:$0xff]
        %v2813 = vld [vmem:[%s15 + $0xa8] sm:$0xff]
        %v2814 = vld [vmem:[%s15 + $0xb0] sm:$0xff]
        %v2815 = vld [vmem:[%s15 + $0xb8] sm:$0xff]
        %v2816 = vld [vmem:[%s15 + $0xc0] sm:$0xff]
        %v2817 = vld [vmem:[%s15 + $0xc8] sm:$0xff]
        %v2818 = vld [vmem:[%s15 + $0xd0] sm:$0xff]
        %v2819 = vld [vmem:[%s15 + $0xd8] sm:$0xff]
        %v2820 = vld [vmem:[%s15 + $0xe0] sm:$0xff]
        %v2821 = vld [vmem:[%s15 + $0xe8] sm:$0xff]
        %v2822 = vld [vmem:[%s15 + $0xf0] sm:$0xff]
        %v2823 = vld [vmem:[%s15 + $0xf8] sm:$0xff]
        %v2824 = vld [vmem:[%s16] sm:$0x1]
        %v2826 = vlaneseq
        %v2827 = vshrl.u32 %v2826, 7
        %v2828 = vsub.s32 0, %v2827
        %v2829 = vrot.slane %v2824, %v2828
        %2831 = vmatprep.subr.mxu0 0.0
        %2832 = vmatpush1.msra.mxu0 %v2792
        %2833 = vmatprep.subr.mxu0 0.0
        %2834 = vmatpush1.msra.mxu0 %v2793
        %2835 = vmatprep.subr.mxu0 0.0
        %2836 = vmatpush1.msra.mxu0 %v2794
        %2837 = vmatprep.subr.mxu0 0.0
        %2838 = vmatpush1.msra.mxu0 %v2795
        %2839 = vmatprep.subr.mxu0 0.0
        %2840 = vmatpush1.msra.mxu0 %v2796
        %2841 = vmatprep.subr.mxu0 0.0
        %2842 = vmatpush1.msra.mxu0 %v2797
        %2843 = vmatprep.subr.mxu0 0.0
        %2844 = vmatpush1.msra.mxu0 %v2798
        %2845 = vmatprep.subr.mxu0 0.0
        %2846 = vmatpush1.msra.mxu0 %v2799
        %2847 = vmatprep.subr.mxu0 0.0
        %2848 = vmatpush1.msra.mxu0 %v2800
        %2849 = vmatprep.subr.mxu0 0.0
        %2850 = vmatpush1.msra.mxu0 %v2801
        %2851 = vmatprep.subr.mxu0 0.0
        %2852 = vmatpush1.msra.mxu0 %v2802
        %2853 = vmatprep.subr.mxu0 0.0
        %2854 = vmatpush1.msra.mxu0 %v2803
        %2855 = vmatprep.subr.mxu0 0.0
        %2856 = vmatpush1.msra.mxu0 %v2804
        %2857 = vmatprep.subr.mxu0 0.0
        %2858 = vmatpush1.msra.mxu0 %v2805
        %2859 = vmatprep.subr.mxu0 0.0
        %2860 = vmatpush1.msra.mxu0 %v2806
        %2861 = vmatprep.subr.mxu0 0.0
        %2862 = vmatpush1.msra.mxu0 %v2807
        %2863 = vmatprep.subr.mxu0 0.0
        %2864 = vmatpush1.msra.mxu0 %v2808
        %2865 = vmatprep.subr.mxu0 0.0
        %2866 = vmatpush1.msra.mxu0 %v2809
        %2867 = vmatprep.subr.mxu0 0.0
        %2868 = vmatpush1.msra.mxu0 %v2810
        %2869 = vmatprep.subr.mxu0 0.0
        %2870 = vmatpush1.msra.mxu0 %v2811
        %2871 = vmatprep.subr.mxu0 0.0
        %2872 = vmatpush1.msra.mxu0 %v2812
        %2873 = vmatprep.subr.mxu0 0.0
        %2874 = vmatpush1.msra.mxu0 %v2813
        %2875 = vmatprep.subr.mxu0 0.0
        %2876 = vmatpush1.msra.mxu0 %v2814
        %2877 = vmatprep.subr.mxu0 0.0
        %2878 = vmatpush1.msra.mxu0 %v2815
        %2879 = vmatprep.subr.mxu0 0.0
        %2880 = vmatpush1.msra.mxu0 %v2816
        %2881 = vmatprep.subr.mxu0 0.0
        %2882 = vmatpush1.msra.mxu0 %v2817
        %2883 = vmatprep.subr.mxu0 0.0
        %2884 = vmatpush1.msra.mxu0 %v2818
        %2885 = vmatprep.subr.mxu0 0.0
        %2886 = vmatpush1.msra.mxu0 %v2819
        %2887 = vmatprep.subr.mxu0 0.0
        %2888 = vmatpush1.msra.mxu0 %v2820
        %2889 = vmatprep.subr.mxu0 0.0
        %2890 = vmatpush1.msra.mxu0 %v2821
        %2891 = vmatprep.subr.mxu0 0.0
        %2892 = vmatpush1.msra.mxu0 %v2822
        %2893 = vmatprep.subr.mxu0 0.0
        %2894 = vmatpush1.msra.mxu0 %v2823
        %2895 = vmatprep.mubr.f32.mxu0 %v2791
        %2896 = vmatmul.mubr.f32.gmra.mrb[0].mxu0 %v2790
        %v2897 = vpop.f32.mrb[0].mxu0
        %v2898 = vadd.f32 %v2829, %v2897
        %v2899 = vpop.f32.mrb[0].mxu0
        %2900 = vdwg.mxu0
        %2902 = vset.pattern.permute.xlu0 0
        %2903 = vperm.xlu0 %2902, %v2698
        %v2904 = vpop.permute.xlu0 %2903
        %v2906 = vmul.f32 %v2904, %v2898
        %v2907 = vadd.f32 %v2906, 0.0
        %2908 = vset.pattern.permute.xlu0 1
        %2909 = vperm.xlu0 %2908, %v2698
        %v2910 = vpop.permute.xlu0 %2909
        %v2912 = vmul.f32 %v2910, %v2898
        %2914 = vrot.lane.b32.xlu0 %v2912, 96
        %v2915 = vpop.permute.xlu0 %2914
        %v2917 = vadd.f32 %v2907, %v2915
        %2918 = vset.pattern.permute.xlu0 2
        %2919 = vperm.xlu0 %2918, %v2698
        %v2920 = vpop.permute.xlu0 %2919
        %v2922 = vmul.f32 %v2920, %v2898
        %2924 = vrot.lane.b32.xlu0 %v2922, 64
        %v2925 = vpop.permute.xlu0 %2924
        %v2927 = vadd.f32 %v2917, %v2925
        %2928 = vset.pattern.permute.xlu0 3
        %2929 = vperm.xlu0 %2928, %v2698
        %v2930 = vpop.permute.xlu0 %2929
        %v2932 = vmul.f32 %v2930, %v2898
        %2934 = vrot.lane.b32.xlu0 %v2932, 32
        %v2935 = vpop.permute.xlu0 %2934
        %v2937 = vadd.f32 %v2927, %v2935
        %v2938 = vadd.f32 %v2582, %v2937
        %v2939 = vld [vmem:[%s17] sm:$0x1]
        %v2940 = vld [vmem:[%s18] sm:$0x1]
        %v2941 = vsel %vm611, %v2938, 0.0
        %2942 = vadd.xlane.f32.xlu0 %v2941
        %v2943 = vpop.xlane.xlu0 %2942
        %v2944 = vmul.f32 %v2943, %v2558
        %v2945 = vsub.f32 %v2938, %v2944
        %v2946 = vmul.f32 %v2945, %v2945
        %v2947 = vsel %vm611, %v2946, 0.0
        %2948 = vadd.xlane.f32.xlu0 %v2947
        %v2949 = vpop.xlane.xlu0 %2948
        %v2950 = vmul.f32 %v2949, %v2558
        %v2951 = vadd.f32 %v2950, 1e-05
        %v2952 = vrsqrt.pop %v2951
        %v2953 = vmul.f32 %v2945, %v2952
        %v2955 = vlaneseq
        %v2956 = vshrl.u32 %v2955, 7
        %v2957 = vsub.s32 0, %v2956
        %v2958 = vrot.slane %v2939, %v2957
        %v2960 = vmul.f32 %v2953, %v2958
        %v2962 = vlaneseq
        %v2963 = vshrl.u32 %v2962, 7
        %v2964 = vsub.s32 0, %v2963
        %v2965 = vrot.slane %v2940, %v2964
        %v2967 = vadd.f32 %v2960, %v2965
        %2968 = vst.msk [vmem:[%s593] sm:$0xff] %vm611, %v2967
        %s2969 = sand.u32 %s445, 1
        %s2970 = scalar_lea.sflag [#allocation3], %s2969
        %s2971 = sand.u32 %s445, 1
        %s2972 = smul.addr %s2971, 8
        %s2973 = scalar_lea.vmem [#allocation2], %s2972
        // Predicated region
        $region97: #{tpu_custom_call.1} parent=95 // pred_check
          %p2974 = pneg %p455
        $region98: #{tpu_custom_call.1} parent=95 // pred_check_branch
          %2976 = sbr.rel (%p2974) target = $region100
        $region99: #{tpu_custom_call.1} parent=95 // pred_region
          %s2978 = ssub.s32 128, 128
          %2979 = vsyncadd %s2970, %s2978
          %s2980 = smul.addr %s33, 128
          %s2981 = scalar_lea.hbm %s19, %s2980
          %s2983 = sshll.u32 %s2973, 4
          %s2984 = int_to_ptr.vmem [resolvable:$true] %s2983
          %2986 = dma.vmem_to_hbm [thread:$0]  %s2984, 128, %s2981, %s2970
        $region100: #{tpu_custom_call.1} parent=95 // pred_fallthru
          _
      $region96: #{tpu_custom_call.1} parent=5 // pred_fallthru
        _
      %p2987 = scmp.le.s32.totalorder 2, %s28
      // Predicated region
      $region101: #{tpu_custom_call.1} parent=5 // pred_check
        %p2988 = pneg %p2987
      $region102: #{tpu_custom_call.1} parent=5 // pred_check_branch
        %2990 = sbr.rel (%p2988) target = $region104
      $region103: #{tpu_custom_call.1} parent=5 // pred_region
        %s2991 = ssub.s32 %s28, 2
        // Predicated region
        $region105: #{tpu_custom_call.1} parent=103 // pred_check
          %p2992 = pneg %p461
        $region106: #{tpu_custom_call.1} parent=103 // pred_check_branch
          %2994 = sbr.rel (%p2992) target = $region108
        $region107: #{tpu_custom_call.1} parent=103 // pred_region
          %s2995 = sand.u32 %s446, 1
          %s2996 = scalar_lea.sflag [#allocation3], %s2995
          %s2997 = sand.u32 %s446, 1
          %s2998 = smul.addr %s2997, 8
          %s2999 = scalar_lea.vmem [#allocation2], %s2998
          %3000 = dma.done %s2996, 128
        $region108: #{tpu_custom_call.1} parent=103 // pred_fallthru
          _
      $region104: #{tpu_custom_call.1} parent=5 // pred_fallthru
        _
    $region6: #{tpu_custom_call.1} parent=1 // loop_footer
      %s32 = sadd.s32 1, %s28
    $region7: #{tpu_custom_call.1} parent=1 // loop_footer_branch
      %27 = sbr.rel target = $region3
    $region8: #{tpu_custom_call.1} parent=1 // loop_exit
      _
    %3001 = vsyncpa [#allocation3], 1
    %s3002 = scalar_lea.sflag [#allocation3], 1
    %3003 = vsyncpa %s3002, 1

</llo_original>
